<compile_context>
chip_gen: v7x
topology: tpu7x:2x2x1
jax: 0.10.0
libtpu: 0.0.40
codegen_flags: <defaults>
</compile_context>

<pallas_src>
import functools

import jax
import jax.numpy as jnp
from jax.experimental import pallas as pl
from jax.experimental.pallas import tpu as pltpu

_OUT_PAD = 128  # task-head outputs (1+5+4=10) padded to a full lane tile


# ----------------------------------------------------------------------------
# In-kernel helpers (f32 math; bf16 only as MXU input dtype)
# ----------------------------------------------------------------------------

def _bf16(x):
    return x.astype(jnp.bfloat16)


def _layernorm(x, g, b, eps):
    mu = jnp.mean(x, axis=-1, keepdims=True)
    xc = x - mu
    var = jnp.mean(xc * xc, axis=-1, keepdims=True)
    return xc * jax.lax.rsqrt(var + eps) * g + b


def _gelu(x):
    # TODO(synk): timm ViT uses exact erf GELU; tanh approximation used here
    # (keeps lowering to plain EUP tanh on every TPU generation).
    c = 0.7978845608028654  # sqrt(2/pi)
    return 0.5 * x * (1.0 + jnp.tanh(c * (x + 0.044715 * x * x * x)))


# ----------------------------------------------------------------------------
# Fully fused ViT forward kernel (single grid step, everything VMEM-resident)
# ----------------------------------------------------------------------------

def _vit_forward_kernel(
        patches_ref, addvec_ref, mask_ref, sel_ref, patch_w_ref,
        ln1_g_ref, ln1_b_ref, qkv_w_ref, qkv_b_ref,
        proj_w_ref, proj_b_ref, ln2_g_ref, ln2_b_ref,
        fc1_w_ref, fc1_b_ref, fc2_w_ref, fc2_b_ref,
        norm_g_ref, norm_b_ref,
        heads_w1_ref, heads_b1_ref, heads_w2_ref, heads_b2_ref,
        out_ref, *, depth, n_heads, eps):
    f32 = jnp.float32
    D = patch_w_ref.shape[1]
    dh = D // n_heads
    scale = 1.0 / float(dh) ** 0.5

    # Additive attention mask: 0 within a batch element, -1e9 across, so all
    # batch elements share one [M, M] score matrix per head (M = B*N).
    mask = mask_ref[...]

    # --- patch embedding ----------------------------------------------------
    # `patches_ref` holds a zero row at every cls position and `addvec_ref`
    # folds cls-token + pos-embed + conv-bias, so the whole token sequence is
    # one matmul + one add.  Residual stream `x` stays f32 end to end.
    x = jnp.dot(patches_ref[...], patch_w_ref[...],
                preferred_element_type=f32) + addvec_ref[...]          # [M, D]

    # --- transformer blocks (pre-norm; LN / residual fused into matmuls) ----
    for d in range(depth):
        # LN1 -> packed qkv projection
        xln = _layernorm(x, ln1_g_ref[d], ln1_b_ref[d], eps)
        qkv = jnp.dot(_bf16(xln), qkv_w_ref[d],
                      preferred_element_type=f32) + qkv_b_ref[d]       # [M, 3D]

        proj_w = proj_w_ref[d]                                         # [D, D]
        y = x + proj_b_ref[d]        # residual + proj bias (f32)
        for h in range(n_heads):
            q = _bf16(qkv[:, h * dh:(h + 1) * dh])
            k = _bf16(qkv[:, D + h * dh:D + (h + 1) * dh])
            v = _bf16(qkv[:, 2 * D + h * dh:2 * D + (h + 1) * dh])
            s = jax.lax.dot_general(q, k, (((1,), (1,)), ((), ())),
                                    preferred_element_type=f32)
            s = s * scale + mask                                       # [M, M]
            m = jnp.max(s, axis=-1, keepdims=True)
            p = jnp.exp(s - m)
            denom = jnp.sum(p, axis=-1, keepdims=True)
            o = jnp.dot(_bf16(p), v, preferred_element_type=f32)
            o = o / denom   # deferred softmax normalization: M*dh divides
            # head output folded straight into the output projection
            # (no in-kernel concatenate / scratch relayout).
            y = y + jnp.dot(_bf16(o), proj_w[h * dh:(h + 1) * dh, :],
                            preferred_element_type=f32)
        x = y

        # LN2 -> MLP (GELU), residual fused into fc2
        xln2 = _layernorm(x, ln2_g_ref[d], ln2_b_ref[d], eps)
        h1 = jnp.dot(_bf16(xln2), fc1_w_ref[d],
                     preferred_element_type=f32) + fc1_b_ref[d]
        h1 = _gelu(h1)
        x = x + jnp.dot(_bf16(h1), fc2_w_ref[d],
                        preferred_element_type=f32) + fc2_b_ref[d]

    # --- cls-token pooling as a tiny f32 selection matmul (stays on MXU) ----
    cls = jnp.dot(sel_ref[...], x, preferred_element_type=f32)         # [B, D]

    # --- final LayerNorm + fused task heads ----------------------------------
    # Stage 1: concatenated first layers + ReLU (Dropout == identity).
    # Stage 2: block-diagonal second layers, output padded to 128 lanes.
    clsn = _layernorm(cls, norm_g_ref[...], norm_b_ref[...], eps)
    hid = jnp.dot(_bf16(clsn), heads_w1_ref[...],
                  preferred_element_type=f32) + heads_b1_ref[...]      # [B,768]
    hid = jnp.maximum(hid, 0.0)
    out = jnp.dot(_bf16(hid), heads_w2_ref[...],
                  preferred_element_type=f32) + heads_b2_ref[...]      # [B,128]
    out_ref[...] = out


# ----------------------------------------------------------------------------
# Parameters (deterministic synthetic init, stored kernel-ready)
# ----------------------------------------------------------------------------

def init_params(key, cfg):
    keys = iter(jax.random.split(key, 64))

    def nrm(shape, scale=0.02):
        return scale * jax.random.normal(next(keys), shape, dtype=jnp.float32)

    C, P, D = cfg["in_chans"], cfg["patch_size"], cfg["embed_dim"]
    depth, n_heads = cfg["depth"], cfg["num_heads"]
    H = int(D * cfg["mlp_ratio"])
    Np = (cfg["img_size"] // P) ** 2
    N = Np + 1
    CPP = C * P * P

    patch_w = nrm((CPP, D))       # conv weight [D, C, P, P] flattened (c,p,q)
    patch_b = nrm((D,))
    cls_token = nrm((D,))
    pos_embed = nrm((N, D))

    # cls token, position embedding and conv bias folded into one per-position
    # additive vector (row 0 = cls position: no patch/bias contribution).
    addvec = jnp.concatenate(
        [(cls_token + pos_embed[0])[None, :],
         pos_embed[1:] + patch_b[None, :]], axis=0)                    # [N, D]

    def stack(maker):
        return jnp.stack([maker() for _ in range(depth)], axis=0)

    blocks = {
        "ln1_g": jnp.ones((depth, 1, D), jnp.float32),
        "ln1_b": jnp.zeros((depth, 1, D), jnp.float32),
        "qkv_w": stack(lambda: nrm((D, 3 * D))).astype(jnp.bfloat16),
        "qkv_b": stack(lambda: nrm((1, 3 * D))),
        "proj_w": stack(lambda: nrm((D, D))).astype(jnp.bfloat16),
        "proj_b": stack(lambda: nrm((1, D))),
        "ln2_g": jnp.ones((depth, 1, D), jnp.float32),
        "ln2_b": jnp.zeros((depth, 1, D), jnp.float32),
        "fc1_w": stack(lambda: nrm((D, H))).astype(jnp.bfloat16),
        "fc1_b": stack(lambda: nrm((1, H))),
        "fc2_w": stack(lambda: nrm((H, D))).astype(jnp.bfloat16),
        "fc2_b": stack(lambda: nrm((1, D))),
    }

    # Three task heads fused: concatenated first layers + block-diagonal second
    # layer, padded to 128 output lanes (v5e-friendly lane-dense store).
    head_dims = (1, 5, 4)
    w1s, b1s, w2s, b2s = [], [], [], []
    for od in head_dims:
        w1s.append(nrm((D, 256)))
        b1s.append(nrm((256,)))
        w2s.append(nrm((256, od)))
        b2s.append(nrm((od,)))
    heads_w1 = jnp.concatenate(w1s, axis=1)                            # [D, 768]
    heads_b1 = jnp.concatenate(b1s)[None, :]                           # [1, 768]
    heads_w2 = jnp.zeros((3 * 256, _OUT_PAD), jnp.float32)
    heads_b2 = jnp.zeros((1, _OUT_PAD), jnp.float32)
    col = 0
    for i, od in enumerate(head_dims):
        heads_w2 = heads_w2.at[i * 256:(i + 1) * 256, col:col + od].set(w2s[i])
        heads_b2 = heads_b2.at[0, col:col + od].set(b2s[i])
        col += od

    return {
        "patch_size": P, "embed_dim": D, "num_heads": n_heads,
        "depth": depth, "seq_len": N, "num_outputs": sum(head_dims),
        "patch_w": patch_w.astype(jnp.bfloat16),
        "addvec": addvec,
        "blocks": blocks,
        "norm_g": jnp.ones((1, D), jnp.float32),
        "norm_b": jnp.zeros((1, D), jnp.float32),
        "heads_w1": heads_w1.astype(jnp.bfloat16),
        "heads_b1": heads_b1,
        "heads_w2": heads_w2.astype(jnp.bfloat16),
        "heads_b2": heads_b2,
    }


# ----------------------------------------------------------------------------
# Forward pass wrapper (single pallas_call)
# ----------------------------------------------------------------------------

def model_forward(x, p):
    B, C, Himg, Wimg = x.shape
    P, D, n_heads = p["patch_size"], p["embed_dim"], p["num_heads"]
    depth, N = p["depth"], p["seq_len"]
    gh, gw = Himg // P, Wimg // P
    Np = gh * gw
    assert Np + 1 == N
    CPP = C * P * P
    M = B * N

    # Patch extraction (conv stride=P == unfold); a zero row is inserted at
    # every cls position so the whole sequence is a single in-kernel matmul.
    # TODO(synk): at production image sizes fold this transpose/cast into the
    # kernel via an index_map over (gh, gw) blocks to avoid an extra HBM pass.
    patches = x.reshape(B, C, gh, P, gw, P).transpose(0, 2, 4, 1, 3, 5)
    patches = patches.reshape(B, Np, CPP)
    patches_full = jnp.concatenate(
        [jnp.zeros((B, 1, CPP), patches.dtype), patches], axis=1)
    patches_full = patches_full.reshape(M, CPP).astype(jnp.bfloat16)

    addvec_full = jnp.tile(p["addvec"], (B, 1))                         # [M, D]
    batch_ids = jnp.repeat(jnp.arange(M) // N, 1)
    mask = jnp.where(batch_ids[:, None] == batch_ids[None, :],
                     0.0, -1e9).astype(jnp.float32)                    # [M, M]
    sel = jnp.zeros((B, M), jnp.float32).at[
        jnp.arange(B), jnp.arange(B) * N].set(1.0)                     # cls rows

    blk = p["blocks"]
    args = (patches_full, addvec_full, mask, sel, p["patch_w"],
            blk["ln1_g"], blk["ln1_b"], blk["qkv_w"], blk["qkv_b"],
            blk["proj_w"], blk["proj_b"], blk["ln2_g"], blk["ln2_b"],
            blk["fc1_w"], blk["fc1_b"], blk["fc2_w"], blk["fc2_b"],
            p["norm_g"], p["norm_b"],
            p["heads_w1"], p["heads_b1"], p["heads_w2"], p["heads_b2"])

    Hmlp = blk["fc1_w"].shape[-1]
    dh = D // n_heads
    flops = 2 * M * CPP * D
    flops += depth * (2 * M * D * 3 * D + 4 * n_heads * M * M * dh
                      + 2 * M * D * D + 4 * M * D * Hmlp)
    flops += 2 * B * M * D + 2 * B * D * 768 + 2 * B * 768 * _OUT_PAD
    transcendentals = depth * (n_heads * M * M + M * Hmlp)
    bytes_accessed = sum(int(a.size) * a.dtype.itemsize for a in args) \
        + B * _OUT_PAD * 4
    cost = pl.CostEstimate(flops=flops, transcendentals=transcendentals,
                           bytes_accessed=bytes_accessed)

    kern = functools.partial(_vit_forward_kernel, depth=depth,
                             n_heads=n_heads, eps=1e-6)
    vmem = pl.BlockSpec(memory_space=pltpu.MemorySpace.VMEM)
    out = pl.pallas_call(
        kern,
        out_shape=jax.ShapeDtypeStruct((B, _OUT_PAD), jnp.float32),
        in_specs=[vmem] * len(args),
        out_specs=vmem,
        # Whole fused model needs ~2 MiB of VMEM; 32 MiB is safe on all
        # generations (v5e/v6e 128 MiB, v7x 64 MiB physical).
        compiler_params=pltpu.CompilerParams(
            vmem_limit_bytes=32 * 1024 * 1024),
        cost_estimate=cost,
    )(*args)

    logits = out[:, :p["num_outputs"]]                                  # [B, 10]
    lesion_out = logits[:, 0:1]
    polyp_out = logits[:, 1:6]
    fibrosis_out = logits[:, 6:10]
    return lesion_out, polyp_out, fibrosis_out


# ----------------------------------------------------------------------------

if __name__ == "__main__":
    cfg = dict(
        num_classes=23,   # unused: task heads have fixed output dims 1/5/4
        img_size=16,
        patch_size=8,
        in_chans=3,
        embed_dim=128,    # lane-aligned small config (D multiple of 128)
        depth=2,
        num_heads=4,
        mlp_ratio=4.0,
    )
    key = jax.random.PRNGKey(0)
    kp, kx = jax.random.split(key)
    params = init_params(kp, cfg)
    x = jax.random.normal(
        kx, (2, cfg["in_chans"], cfg["img_size"], cfg["img_size"]),
        dtype=jnp.float32)

    fwd = jax.jit(lambda inp: model_forward(inp, params))
    lesion, polyp, fibrosis = fwd(x)
    jax.block_until_ready((lesion, polyp, fibrosis))

    assert lesion.shape == (2, 1)
    assert polyp.shape == (2, 5)
    assert fibrosis.shape == (2, 4)
    print("KERNEL_OK")
</pallas_src>

<mosaic_0001>
module attributes {stable_mosaic.version = 11 : i64} {
  func.func @_vit_forward_kernel(%arg0: memref<10x192xbf16, #tpu.memory_space<vmem>>, %arg1: memref<10x128xf32, #tpu.memory_space<vmem>>, %arg2: memref<10x10xf32, #tpu.memory_space<vmem>>, %arg3: memref<2x10xf32, #tpu.memory_space<vmem>>, %arg4: memref<192x128xbf16, #tpu.memory_space<vmem>>, %arg5: memref<2x1x128xf32, #tpu.memory_space<vmem>>, %arg6: memref<2x1x128xf32, #tpu.memory_space<vmem>>, %arg7: memref<2x128x384xbf16, #tpu.memory_space<vmem>>, %arg8: memref<2x1x384xf32, #tpu.memory_space<vmem>>, %arg9: memref<2x128x128xbf16, #tpu.memory_space<vmem>>, %arg10: memref<2x1x128xf32, #tpu.memory_space<vmem>>, %arg11: memref<2x1x128xf32, #tpu.memory_space<vmem>>, %arg12: memref<2x1x128xf32, #tpu.memory_space<vmem>>, %arg13: memref<2x128x512xbf16, #tpu.memory_space<vmem>>, %arg14: memref<2x1x512xf32, #tpu.memory_space<vmem>>, %arg15: memref<2x512x128xbf16, #tpu.memory_space<vmem>>, %arg16: memref<2x1x128xf32, #tpu.memory_space<vmem>>, %arg17: memref<1x128xf32, #tpu.memory_space<vmem>>, %arg18: memref<1x128xf32, #tpu.memory_space<vmem>>, %arg19: memref<128x768xbf16, #tpu.memory_space<vmem>>, %arg20: memref<1x768xf32, #tpu.memory_space<vmem>>, %arg21: memref<768x128xbf16, #tpu.memory_space<vmem>>, %arg22: memref<1x128xf32, #tpu.memory_space<vmem>>, %arg23: memref<2x128xf32, #tpu.memory_space<vmem>>) attributes {dimension_semantics = [], scalar_prefetch = 0 : i64, scratch_operands = 0 : i64, tpu.core_type = #tpu.core_type<tc>} {
    %c0 = arith.constant 0 : index
    %c0_0 = arith.constant 0 : index
    %0 = vector.load %arg2[%c0, %c0_0] : memref<10x10xf32, #tpu.memory_space<vmem>>, vector<10x10xf32>
    %c0_1 = arith.constant 0 : index
    %c0_2 = arith.constant 0 : index
    %1 = vector.load %arg0[%c0_1, %c0_2] : memref<10x192xbf16, #tpu.memory_space<vmem>>, vector<10x192xbf16>
    %c0_3 = arith.constant 0 : index
    %c0_4 = arith.constant 0 : index
    %2 = vector.load %arg4[%c0_3, %c0_4] : memref<192x128xbf16, #tpu.memory_space<vmem>>, vector<192x128xbf16>
    %cst = arith.constant dense<0.000000e+00> : vector<10x128xf32>
    %3 = tpu.matmul %1, %2, %cst {dimension_numbers = #tpu.dot_dimension_numbers<[1], [0], [0], [1], [0, 0, 1, 1], [], []>} : vector<10x192xbf16>, vector<192x128xbf16>, vector<10x128xf32> -> vector<10x128xf32>
    %c0_5 = arith.constant 0 : index
    %c0_6 = arith.constant 0 : index
    %4 = vector.load %arg1[%c0_5, %c0_6] : memref<10x128xf32, #tpu.memory_space<vmem>>, vector<10x128xf32>
    %5 = arith.addf %3, %4 : vector<10x128xf32>
    %c0_7 = arith.constant 0 : index
    %c0_8 = arith.constant 0 : index
    %c0_9 = arith.constant 0 : index
    %6 = vector.load %arg5[%c0_7, %c0_8, %c0_9] : memref<2x1x128xf32, #tpu.memory_space<vmem>>, vector<1x1x128xf32>
    %7 = vector.shape_cast %6 : vector<1x1x128xf32> to vector<1x128xf32>
    %c0_10 = arith.constant 0 : index
    %c0_11 = arith.constant 0 : index
    %c0_12 = arith.constant 0 : index
    %8 = vector.load %arg6[%c0_10, %c0_11, %c0_12] : memref<2x1x128xf32, #tpu.memory_space<vmem>>, vector<1x1x128xf32>
    %9 = vector.shape_cast %8 : vector<1x1x128xf32> to vector<1x128xf32>
    %cst_13 = arith.constant dense<0.000000e+00> : vector<10xf32>
    %10 = vector.multi_reduction <add>, %5, %cst_13 [1] : vector<10x128xf32> to vector<10xf32>
    %11 = vector.shape_cast %10 : vector<10xf32> to vector<10x1xf32>
    %cst_14 = arith.constant 1.280000e+02 : f32
    %12 = vector.broadcast %cst_14 : f32 to vector<10x1xf32>
    %13 = arith.divf %11, %12 : vector<10x1xf32>
    %14 = vector.broadcast %13 : vector<10x1xf32> to vector<10x128xf32>
    %15 = arith.subf %5, %14 : vector<10x128xf32>
    %16 = arith.mulf %15, %15 : vector<10x128xf32>
    %cst_15 = arith.constant dense<0.000000e+00> : vector<10xf32>
    %17 = vector.multi_reduction <add>, %16, %cst_15 [1] : vector<10x128xf32> to vector<10xf32>
    %18 = vector.shape_cast %17 : vector<10xf32> to vector<10x1xf32>
    %cst_16 = arith.constant 1.280000e+02 : f32
    %19 = vector.broadcast %cst_16 : f32 to vector<10x1xf32>
    %20 = arith.divf %18, %19 : vector<10x1xf32>
    %cst_17 = arith.constant 9.99999997E-7 : f32
    %21 = vector.broadcast %cst_17 : f32 to vector<10x1xf32>
    %22 = arith.addf %20, %21 : vector<10x1xf32>
    %23 = math.rsqrt %22 : vector<10x1xf32>
    %24 = vector.broadcast %23 : vector<10x1xf32> to vector<10x128xf32>
    %25 = arith.mulf %15, %24 : vector<10x128xf32>
    %26 = vector.broadcast %7 : vector<1x128xf32> to vector<10x128xf32>
    %27 = arith.mulf %25, %26 : vector<10x128xf32>
    %28 = vector.broadcast %9 : vector<1x128xf32> to vector<10x128xf32>
    %29 = arith.addf %27, %28 : vector<10x128xf32>
    %30 = arith.truncf %29 : vector<10x128xf32> to vector<10x128xbf16>
    %c0_18 = arith.constant 0 : index
    %c0_19 = arith.constant 0 : index
    %c0_20 = arith.constant 0 : index
    %31 = vector.load %arg7[%c0_18, %c0_19, %c0_20] : memref<2x128x384xbf16, #tpu.memory_space<vmem>>, vector<1x128x384xbf16>
    %32 = vector.shape_cast %31 : vector<1x128x384xbf16> to vector<128x384xbf16>
    %cst_21 = arith.constant dense<0.000000e+00> : vector<10x384xf32>
    %33 = tpu.matmul %30, %32, %cst_21 {dimension_numbers = #tpu.dot_dimension_numbers<[1], [0], [0], [1], [0, 0, 1, 1], [], []>} : vector<10x128xbf16>, vector<128x384xbf16>, vector<10x384xf32> -> vector<10x384xf32>
    %c0_22 = arith.constant 0 : index
    %c0_23 = arith.constant 0 : index
    %c0_24 = arith.constant 0 : index
    %34 = vector.load %arg8[%c0_22, %c0_23, %c0_24] : memref<2x1x384xf32, #tpu.memory_space<vmem>>, vector<1x1x384xf32>
    %35 = vector.shape_cast %34 : vector<1x1x384xf32> to vector<1x384xf32>
    %36 = vector.broadcast %35 : vector<1x384xf32> to vector<10x384xf32>
    %37 = arith.addf %33, %36 : vector<10x384xf32>
    %c0_25 = arith.constant 0 : index
    %c0_26 = arith.constant 0 : index
    %c0_27 = arith.constant 0 : index
    %38 = vector.load %arg9[%c0_25, %c0_26, %c0_27] : memref<2x128x128xbf16, #tpu.memory_space<vmem>>, vector<1x128x128xbf16>
    %39 = vector.shape_cast %38 : vector<1x128x128xbf16> to vector<128x128xbf16>
    %c0_28 = arith.constant 0 : index
    %c0_29 = arith.constant 0 : index
    %c0_30 = arith.constant 0 : index
    %40 = vector.load %arg10[%c0_28, %c0_29, %c0_30] : memref<2x1x128xf32, #tpu.memory_space<vmem>>, vector<1x1x128xf32>
    %41 = vector.shape_cast %40 : vector<1x1x128xf32> to vector<1x128xf32>
    %42 = vector.broadcast %41 : vector<1x128xf32> to vector<10x128xf32>
    %43 = arith.addf %5, %42 : vector<10x128xf32>
    %44 = vector.extract_strided_slice %37 {offsets = [0, 0], sizes = [10, 32], strides = [1, 1]} : vector<10x384xf32> to vector<10x32xf32>
    %45 = arith.truncf %44 : vector<10x32xf32> to vector<10x32xbf16>
    %46 = vector.extract_strided_slice %37 {offsets = [0, 128], sizes = [10, 32], strides = [1, 1]} : vector<10x384xf32> to vector<10x32xf32>
    %47 = arith.truncf %46 : vector<10x32xf32> to vector<10x32xbf16>
    %48 = vector.extract_strided_slice %37 {offsets = [0, 256], sizes = [10, 32], strides = [1, 1]} : vector<10x384xf32> to vector<10x32xf32>
    %49 = arith.truncf %48 : vector<10x32xf32> to vector<10x32xbf16>
    %cst_31 = arith.constant dense<0.000000e+00> : vector<10x10xf32>
    %50 = tpu.matmul %45, %47, %cst_31 {dimension_numbers = #tpu.dot_dimension_numbers<[1], [1], [0], [0], [0, 0, 1, 0], [], []>} : vector<10x32xbf16>, vector<10x32xbf16>, vector<10x10xf32> -> vector<10x10xf32>
    %cst_32 = arith.constant 0.176776692 : f32
    %51 = vector.broadcast %cst_32 : f32 to vector<10x10xf32>
    %52 = arith.mulf %50, %51 : vector<10x10xf32>
    %53 = arith.addf %52, %0 : vector<10x10xf32>
    %cst_33 = arith.constant dense<0xFF800000> : vector<10xf32>
    %54 = vector.multi_reduction <maximumf>, %53, %cst_33 [1] : vector<10x10xf32> to vector<10xf32>
    %55 = vector.shape_cast %54 : vector<10xf32> to vector<10x1xf32>
    %56 = vector.broadcast %55 : vector<10x1xf32> to vector<10x10xf32>
    %57 = arith.subf %53, %56 : vector<10x10xf32>
    %58 = math.exp %57 : vector<10x10xf32>
    %cst_34 = arith.constant dense<0.000000e+00> : vector<10xf32>
    %59 = vector.multi_reduction <add>, %58, %cst_34 [1] : vector<10x10xf32> to vector<10xf32>
    %60 = vector.shape_cast %59 : vector<10xf32> to vector<10x1xf32>
    %61 = arith.truncf %58 : vector<10x10xf32> to vector<10x10xbf16>
    %cst_35 = arith.constant dense<0.000000e+00> : vector<10x32xf32>
    %62 = tpu.matmul %61, %49, %cst_35 {dimension_numbers = #tpu.dot_dimension_numbers<[1], [0], [0], [1], [0, 0, 1, 1], [], []>} : vector<10x10xbf16>, vector<10x32xbf16>, vector<10x32xf32> -> vector<10x32xf32>
    %63 = vector.broadcast %60 : vector<10x1xf32> to vector<10x32xf32>
    %64 = arith.divf %62, %63 : vector<10x32xf32>
    %65 = arith.truncf %64 : vector<10x32xf32> to vector<10x32xbf16>
    %66 = vector.extract_strided_slice %39 {offsets = [0, 0], sizes = [32, 128], strides = [1, 1]} : vector<128x128xbf16> to vector<32x128xbf16>
    %cst_36 = arith.constant dense<0.000000e+00> : vector<10x128xf32>
    %67 = tpu.matmul %65, %66, %cst_36 {dimension_numbers = #tpu.dot_dimension_numbers<[1], [0], [0], [1], [0, 0, 1, 1], [], []>} : vector<10x32xbf16>, vector<32x128xbf16>, vector<10x128xf32> -> vector<10x128xf32>
    %68 = arith.addf %43, %67 : vector<10x128xf32>
    %69 = vector.extract_strided_slice %37 {offsets = [0, 32], sizes = [10, 32], strides = [1, 1]} : vector<10x384xf32> to vector<10x32xf32>
    %70 = arith.truncf %69 : vector<10x32xf32> to vector<10x32xbf16>
    %71 = vector.extract_strided_slice %37 {offsets = [0, 160], sizes = [10, 32], strides = [1, 1]} : vector<10x384xf32> to vector<10x32xf32>
    %72 = arith.truncf %71 : vector<10x32xf32> to vector<10x32xbf16>
    %73 = vector.extract_strided_slice %37 {offsets = [0, 288], sizes = [10, 32], strides = [1, 1]} : vector<10x384xf32> to vector<10x32xf32>
    %74 = arith.truncf %73 : vector<10x32xf32> to vector<10x32xbf16>
    %cst_37 = arith.constant dense<0.000000e+00> : vector<10x10xf32>
    %75 = tpu.matmul %70, %72, %cst_37 {dimension_numbers = #tpu.dot_dimension_numbers<[1], [1], [0], [0], [0, 0, 1, 0], [], []>} : vector<10x32xbf16>, vector<10x32xbf16>, vector<10x10xf32> -> vector<10x10xf32>
    %cst_38 = arith.constant 0.176776692 : f32
    %76 = vector.broadcast %cst_38 : f32 to vector<10x10xf32>
    %77 = arith.mulf %75, %76 : vector<10x10xf32>
    %78 = arith.addf %77, %0 : vector<10x10xf32>
    %cst_39 = arith.constant dense<0xFF800000> : vector<10xf32>
    %79 = vector.multi_reduction <maximumf>, %78, %cst_39 [1] : vector<10x10xf32> to vector<10xf32>
    %80 = vector.shape_cast %79 : vector<10xf32> to vector<10x1xf32>
    %81 = vector.broadcast %80 : vector<10x1xf32> to vector<10x10xf32>
    %82 = arith.subf %78, %81 : vector<10x10xf32>
    %83 = math.exp %82 : vector<10x10xf32>
    %cst_40 = arith.constant dense<0.000000e+00> : vector<10xf32>
    %84 = vector.multi_reduction <add>, %83, %cst_40 [1] : vector<10x10xf32> to vector<10xf32>
    %85 = vector.shape_cast %84 : vector<10xf32> to vector<10x1xf32>
    %86 = arith.truncf %83 : vector<10x10xf32> to vector<10x10xbf16>
    %cst_41 = arith.constant dense<0.000000e+00> : vector<10x32xf32>
    %87 = tpu.matmul %86, %74, %cst_41 {dimension_numbers = #tpu.dot_dimension_numbers<[1], [0], [0], [1], [0, 0, 1, 1], [], []>} : vector<10x10xbf16>, vector<10x32xbf16>, vector<10x32xf32> -> vector<10x32xf32>
    %88 = vector.broadcast %85 : vector<10x1xf32> to vector<10x32xf32>
    %89 = arith.divf %87, %88 : vector<10x32xf32>
    %90 = arith.truncf %89 : vector<10x32xf32> to vector<10x32xbf16>
    %91 = vector.extract_strided_slice %39 {offsets = [32, 0], sizes = [32, 128], strides = [1, 1]} : vector<128x128xbf16> to vector<32x128xbf16>
    %cst_42 = arith.constant dense<0.000000e+00> : vector<10x128xf32>
    %92 = tpu.matmul %90, %91, %cst_42 {dimension_numbers = #tpu.dot_dimension_numbers<[1], [0], [0], [1], [0, 0, 1, 1], [], []>} : vector<10x32xbf16>, vector<32x128xbf16>, vector<10x128xf32> -> vector<10x128xf32>
    %93 = arith.addf %68, %92 : vector<10x128xf32>
    %94 = vector.extract_strided_slice %37 {offsets = [0, 64], sizes = [10, 32], strides = [1, 1]} : vector<10x384xf32> to vector<10x32xf32>
    %95 = arith.truncf %94 : vector<10x32xf32> to vector<10x32xbf16>
    %96 = vector.extract_strided_slice %37 {offsets = [0, 192], sizes = [10, 32], strides = [1, 1]} : vector<10x384xf32> to vector<10x32xf32>
    %97 = arith.truncf %96 : vector<10x32xf32> to vector<10x32xbf16>
    %98 = vector.extract_strided_slice %37 {offsets = [0, 320], sizes = [10, 32], strides = [1, 1]} : vector<10x384xf32> to vector<10x32xf32>
    %99 = arith.truncf %98 : vector<10x32xf32> to vector<10x32xbf16>
    %cst_43 = arith.constant dense<0.000000e+00> : vector<10x10xf32>
    %100 = tpu.matmul %95, %97, %cst_43 {dimension_numbers = #tpu.dot_dimension_numbers<[1], [1], [0], [0], [0, 0, 1, 0], [], []>} : vector<10x32xbf16>, vector<10x32xbf16>, vector<10x10xf32> -> vector<10x10xf32>
    %cst_44 = arith.constant 0.176776692 : f32
    %101 = vector.broadcast %cst_44 : f32 to vector<10x10xf32>
    %102 = arith.mulf %100, %101 : vector<10x10xf32>
    %103 = arith.addf %102, %0 : vector<10x10xf32>
    %cst_45 = arith.constant dense<0xFF800000> : vector<10xf32>
    %104 = vector.multi_reduction <maximumf>, %103, %cst_45 [1] : vector<10x10xf32> to vector<10xf32>
    %105 = vector.shape_cast %104 : vector<10xf32> to vector<10x1xf32>
    %106 = vector.broadcast %105 : vector<10x1xf32> to vector<10x10xf32>
    %107 = arith.subf %103, %106 : vector<10x10xf32>
    %108 = math.exp %107 : vector<10x10xf32>
    %cst_46 = arith.constant dense<0.000000e+00> : vector<10xf32>
    %109 = vector.multi_reduction <add>, %108, %cst_46 [1] : vector<10x10xf32> to vector<10xf32>
    %110 = vector.shape_cast %109 : vector<10xf32> to vector<10x1xf32>
    %111 = arith.truncf %108 : vector<10x10xf32> to vector<10x10xbf16>
    %cst_47 = arith.constant dense<0.000000e+00> : vector<10x32xf32>
    %112 = tpu.matmul %111, %99, %cst_47 {dimension_numbers = #tpu.dot_dimension_numbers<[1], [0], [0], [1], [0, 0, 1, 1], [], []>} : vector<10x10xbf16>, vector<10x32xbf16>, vector<10x32xf32> -> vector<10x32xf32>
    %113 = vector.broadcast %110 : vector<10x1xf32> to vector<10x32xf32>
    %114 = arith.divf %112, %113 : vector<10x32xf32>
    %115 = arith.truncf %114 : vector<10x32xf32> to vector<10x32xbf16>
    %116 = vector.extract_strided_slice %39 {offsets = [64, 0], sizes = [32, 128], strides = [1, 1]} : vector<128x128xbf16> to vector<32x128xbf16>
    %cst_48 = arith.constant dense<0.000000e+00> : vector<10x128xf32>
    %117 = tpu.matmul %115, %116, %cst_48 {dimension_numbers = #tpu.dot_dimension_numbers<[1], [0], [0], [1], [0, 0, 1, 1], [], []>} : vector<10x32xbf16>, vector<32x128xbf16>, vector<10x128xf32> -> vector<10x128xf32>
    %118 = arith.addf %93, %117 : vector<10x128xf32>
    %119 = vector.extract_strided_slice %37 {offsets = [0, 96], sizes = [10, 32], strides = [1, 1]} : vector<10x384xf32> to vector<10x32xf32>
    %120 = arith.truncf %119 : vector<10x32xf32> to vector<10x32xbf16>
    %121 = vector.extract_strided_slice %37 {offsets = [0, 224], sizes = [10, 32], strides = [1, 1]} : vector<10x384xf32> to vector<10x32xf32>
    %122 = arith.truncf %121 : vector<10x32xf32> to vector<10x32xbf16>
    %123 = vector.extract_strided_slice %37 {offsets = [0, 352], sizes = [10, 32], strides = [1, 1]} : vector<10x384xf32> to vector<10x32xf32>
    %124 = arith.truncf %123 : vector<10x32xf32> to vector<10x32xbf16>
    %cst_49 = arith.constant dense<0.000000e+00> : vector<10x10xf32>
    %125 = tpu.matmul %120, %122, %cst_49 {dimension_numbers = #tpu.dot_dimension_numbers<[1], [1], [0], [0], [0, 0, 1, 0], [], []>} : vector<10x32xbf16>, vector<10x32xbf16>, vector<10x10xf32> -> vector<10x10xf32>
    %cst_50 = arith.constant 0.176776692 : f32
    %126 = vector.broadcast %cst_50 : f32 to vector<10x10xf32>
    %127 = arith.mulf %125, %126 : vector<10x10xf32>
    %128 = arith.addf %127, %0 : vector<10x10xf32>
    %cst_51 = arith.constant dense<0xFF800000> : vector<10xf32>
    %129 = vector.multi_reduction <maximumf>, %128, %cst_51 [1] : vector<10x10xf32> to vector<10xf32>
    %130 = vector.shape_cast %129 : vector<10xf32> to vector<10x1xf32>
    %131 = vector.broadcast %130 : vector<10x1xf32> to vector<10x10xf32>
    %132 = arith.subf %128, %131 : vector<10x10xf32>
    %133 = math.exp %132 : vector<10x10xf32>
    %cst_52 = arith.constant dense<0.000000e+00> : vector<10xf32>
    %134 = vector.multi_reduction <add>, %133, %cst_52 [1] : vector<10x10xf32> to vector<10xf32>
    %135 = vector.shape_cast %134 : vector<10xf32> to vector<10x1xf32>
    %136 = arith.truncf %133 : vector<10x10xf32> to vector<10x10xbf16>
    %cst_53 = arith.constant dense<0.000000e+00> : vector<10x32xf32>
    %137 = tpu.matmul %136, %124, %cst_53 {dimension_numbers = #tpu.dot_dimension_numbers<[1], [0], [0], [1], [0, 0, 1, 1], [], []>} : vector<10x10xbf16>, vector<10x32xbf16>, vector<10x32xf32> -> vector<10x32xf32>
    %138 = vector.broadcast %135 : vector<10x1xf32> to vector<10x32xf32>
    %139 = arith.divf %137, %138 : vector<10x32xf32>
    %140 = arith.truncf %139 : vector<10x32xf32> to vector<10x32xbf16>
    %141 = vector.extract_strided_slice %39 {offsets = [96, 0], sizes = [32, 128], strides = [1, 1]} : vector<128x128xbf16> to vector<32x128xbf16>
    %cst_54 = arith.constant dense<0.000000e+00> : vector<10x128xf32>
    %142 = tpu.matmul %140, %141, %cst_54 {dimension_numbers = #tpu.dot_dimension_numbers<[1], [0], [0], [1], [0, 0, 1, 1], [], []>} : vector<10x32xbf16>, vector<32x128xbf16>, vector<10x128xf32> -> vector<10x128xf32>
    %143 = arith.addf %118, %142 : vector<10x128xf32>
    %c0_55 = arith.constant 0 : index
    %c0_56 = arith.constant 0 : index
    %c0_57 = arith.constant 0 : index
    %144 = vector.load %arg11[%c0_55, %c0_56, %c0_57] : memref<2x1x128xf32, #tpu.memory_space<vmem>>, vector<1x1x128xf32>
    %145 = vector.shape_cast %144 : vector<1x1x128xf32> to vector<1x128xf32>
    %c0_58 = arith.constant 0 : index
    %c0_59 = arith.constant 0 : index
    %c0_60 = arith.constant 0 : index
    %146 = vector.load %arg12[%c0_58, %c0_59, %c0_60] : memref<2x1x128xf32, #tpu.memory_space<vmem>>, vector<1x1x128xf32>
    %147 = vector.shape_cast %146 : vector<1x1x128xf32> to vector<1x128xf32>
    %cst_61 = arith.constant dense<0.000000e+00> : vector<10xf32>
    %148 = vector.multi_reduction <add>, %143, %cst_61 [1] : vector<10x128xf32> to vector<10xf32>
    %149 = vector.shape_cast %148 : vector<10xf32> to vector<10x1xf32>
    %cst_62 = arith.constant 1.280000e+02 : f32
    %150 = vector.broadcast %cst_62 : f32 to vector<10x1xf32>
    %151 = arith.divf %149, %150 : vector<10x1xf32>
    %152 = vector.broadcast %151 : vector<10x1xf32> to vector<10x128xf32>
    %153 = arith.subf %143, %152 : vector<10x128xf32>
    %154 = arith.mulf %153, %153 : vector<10x128xf32>
    %cst_63 = arith.constant dense<0.000000e+00> : vector<10xf32>
    %155 = vector.multi_reduction <add>, %154, %cst_63 [1] : vector<10x128xf32> to vector<10xf32>
    %156 = vector.shape_cast %155 : vector<10xf32> to vector<10x1xf32>
    %cst_64 = arith.constant 1.280000e+02 : f32
    %157 = vector.broadcast %cst_64 : f32 to vector<10x1xf32>
    %158 = arith.divf %156, %157 : vector<10x1xf32>
    %cst_65 = arith.constant 9.99999997E-7 : f32
    %159 = vector.broadcast %cst_65 : f32 to vector<10x1xf32>
    %160 = arith.addf %158, %159 : vector<10x1xf32>
    %161 = math.rsqrt %160 : vector<10x1xf32>
    %162 = vector.broadcast %161 : vector<10x1xf32> to vector<10x128xf32>
    %163 = arith.mulf %153, %162 : vector<10x128xf32>
    %164 = vector.broadcast %145 : vector<1x128xf32> to vector<10x128xf32>
    %165 = arith.mulf %163, %164 : vector<10x128xf32>
    %166 = vector.broadcast %147 : vector<1x128xf32> to vector<10x128xf32>
    %167 = arith.addf %165, %166 : vector<10x128xf32>
    %168 = arith.truncf %167 : vector<10x128xf32> to vector<10x128xbf16>
    %c0_66 = arith.constant 0 : index
    %c0_67 = arith.constant 0 : index
    %c0_68 = arith.constant 0 : index
    %169 = vector.load %arg13[%c0_66, %c0_67, %c0_68] : memref<2x128x512xbf16, #tpu.memory_space<vmem>>, vector<1x128x512xbf16>
    %170 = vector.shape_cast %169 : vector<1x128x512xbf16> to vector<128x512xbf16>
    %cst_69 = arith.constant dense<0.000000e+00> : vector<10x512xf32>
    %171 = tpu.matmul %168, %170, %cst_69 {dimension_numbers = #tpu.dot_dimension_numbers<[1], [0], [0], [1], [0, 0, 1, 1], [], []>} : vector<10x128xbf16>, vector<128x512xbf16>, vector<10x512xf32> -> vector<10x512xf32>
    %c0_70 = arith.constant 0 : index
    %c0_71 = arith.constant 0 : index
    %c0_72 = arith.constant 0 : index
    %172 = vector.load %arg14[%c0_70, %c0_71, %c0_72] : memref<2x1x512xf32, #tpu.memory_space<vmem>>, vector<1x1x512xf32>
    %173 = vector.shape_cast %172 : vector<1x1x512xf32> to vector<1x512xf32>
    %174 = vector.broadcast %173 : vector<1x512xf32> to vector<10x512xf32>
    %175 = arith.addf %171, %174 : vector<10x512xf32>
    %cst_73 = arith.constant 5.000000e-01 : f32
    %176 = vector.broadcast %cst_73 : f32 to vector<10x512xf32>
    %177 = arith.mulf %176, %175 : vector<10x512xf32>
    %cst_74 = arith.constant 4.471500e-02 : f32
    %178 = vector.broadcast %cst_74 : f32 to vector<10x512xf32>
    %179 = arith.mulf %178, %175 : vector<10x512xf32>
    %180 = arith.mulf %179, %175 : vector<10x512xf32>
    %181 = arith.mulf %180, %175 : vector<10x512xf32>
    %182 = arith.addf %175, %181 : vector<10x512xf32>
    %cst_75 = arith.constant 0.797884583 : f32
    %183 = vector.broadcast %cst_75 : f32 to vector<10x512xf32>
    %184 = arith.mulf %183, %182 : vector<10x512xf32>
    %185 = math.tanh %184 : vector<10x512xf32>
    %cst_76 = arith.constant 1.000000e+00 : f32
    %186 = vector.broadcast %cst_76 : f32 to vector<10x512xf32>
    %187 = arith.addf %186, %185 : vector<10x512xf32>
    %188 = arith.mulf %177, %187 : vector<10x512xf32>
    %189 = arith.truncf %188 : vector<10x512xf32> to vector<10x512xbf16>
    %c0_77 = arith.constant 0 : index
    %c0_78 = arith.constant 0 : index
    %c0_79 = arith.constant 0 : index
    %190 = vector.load %arg15[%c0_77, %c0_78, %c0_79] : memref<2x512x128xbf16, #tpu.memory_space<vmem>>, vector<1x512x128xbf16>
    %191 = vector.shape_cast %190 : vector<1x512x128xbf16> to vector<512x128xbf16>
    %cst_80 = arith.constant dense<0.000000e+00> : vector<10x128xf32>
    %192 = tpu.matmul %189, %191, %cst_80 {dimension_numbers = #tpu.dot_dimension_numbers<[1], [0], [0], [1], [0, 0, 1, 1], [], []>} : vector<10x512xbf16>, vector<512x128xbf16>, vector<10x128xf32> -> vector<10x128xf32>
    %193 = arith.addf %143, %192 : vector<10x128xf32>
    %c0_81 = arith.constant 0 : index
    %c0_82 = arith.constant 0 : index
    %c0_83 = arith.constant 0 : index
    %194 = vector.load %arg16[%c0_81, %c0_82, %c0_83] : memref<2x1x128xf32, #tpu.memory_space<vmem>>, vector<1x1x128xf32>
    %195 = vector.shape_cast %194 : vector<1x1x128xf32> to vector<1x128xf32>
    %196 = vector.broadcast %195 : vector<1x128xf32> to vector<10x128xf32>
    %197 = arith.addf %193, %196 : vector<10x128xf32>
    %c1 = arith.constant 1 : index
    %c0_84 = arith.constant 0 : index
    %c0_85 = arith.constant 0 : index
    %198 = vector.load %arg5[%c1, %c0_84, %c0_85] : memref<2x1x128xf32, #tpu.memory_space<vmem>>, vector<1x1x128xf32>
    %199 = vector.shape_cast %198 : vector<1x1x128xf32> to vector<1x128xf32>
    %c1_86 = arith.constant 1 : index
    %c0_87 = arith.constant 0 : index
    %c0_88 = arith.constant 0 : index
    %200 = vector.load %arg6[%c1_86, %c0_87, %c0_88] : memref<2x1x128xf32, #tpu.memory_space<vmem>>, vector<1x1x128xf32>
    %201 = vector.shape_cast %200 : vector<1x1x128xf32> to vector<1x128xf32>
    %cst_89 = arith.constant dense<0.000000e+00> : vector<10xf32>
    %202 = vector.multi_reduction <add>, %197, %cst_89 [1] : vector<10x128xf32> to vector<10xf32>
    %203 = vector.shape_cast %202 : vector<10xf32> to vector<10x1xf32>
    %cst_90 = arith.constant 1.280000e+02 : f32
    %204 = vector.broadcast %cst_90 : f32 to vector<10x1xf32>
    %205 = arith.divf %203, %204 : vector<10x1xf32>
    %206 = vector.broadcast %205 : vector<10x1xf32> to vector<10x128xf32>
    %207 = arith.subf %197, %206 : vector<10x128xf32>
    %208 = arith.mulf %207, %207 : vector<10x128xf32>
    %cst_91 = arith.constant dense<0.000000e+00> : vector<10xf32>
    %209 = vector.multi_reduction <add>, %208, %cst_91 [1] : vector<10x128xf32> to vector<10xf32>
    %210 = vector.shape_cast %209 : vector<10xf32> to vector<10x1xf32>
    %cst_92 = arith.constant 1.280000e+02 : f32
    %211 = vector.broadcast %cst_92 : f32 to vector<10x1xf32>
    %212 = arith.divf %210, %211 : vector<10x1xf32>
    %cst_93 = arith.constant 9.99999997E-7 : f32
    %213 = vector.broadcast %cst_93 : f32 to vector<10x1xf32>
    %214 = arith.addf %212, %213 : vector<10x1xf32>
    %215 = math.rsqrt %214 : vector<10x1xf32>
    %216 = vector.broadcast %215 : vector<10x1xf32> to vector<10x128xf32>
    %217 = arith.mulf %207, %216 : vector<10x128xf32>
    %218 = vector.broadcast %199 : vector<1x128xf32> to vector<10x128xf32>
    %219 = arith.mulf %217, %218 : vector<10x128xf32>
    %220 = vector.broadcast %201 : vector<1x128xf32> to vector<10x128xf32>
    %221 = arith.addf %219, %220 : vector<10x128xf32>
    %222 = arith.truncf %221 : vector<10x128xf32> to vector<10x128xbf16>
    %c1_94 = arith.constant 1 : index
    %c0_95 = arith.constant 0 : index
    %c0_96 = arith.constant 0 : index
    %223 = vector.load %arg7[%c1_94, %c0_95, %c0_96] : memref<2x128x384xbf16, #tpu.memory_space<vmem>>, vector<1x128x384xbf16>
    %224 = vector.shape_cast %223 : vector<1x128x384xbf16> to vector<128x384xbf16>
    %cst_97 = arith.constant dense<0.000000e+00> : vector<10x384xf32>
    %225 = tpu.matmul %222, %224, %cst_97 {dimension_numbers = #tpu.dot_dimension_numbers<[1], [0], [0], [1], [0, 0, 1, 1], [], []>} : vector<10x128xbf16>, vector<128x384xbf16>, vector<10x384xf32> -> vector<10x384xf32>
    %c1_98 = arith.constant 1 : index
    %c0_99 = arith.constant 0 : index
    %c0_100 = arith.constant 0 : index
    %226 = vector.load %arg8[%c1_98, %c0_99, %c0_100] : memref<2x1x384xf32, #tpu.memory_space<vmem>>, vector<1x1x384xf32>
    %227 = vector.shape_cast %226 : vector<1x1x384xf32> to vector<1x384xf32>
    %228 = vector.broadcast %227 : vector<1x384xf32> to vector<10x384xf32>
    %229 = arith.addf %225, %228 : vector<10x384xf32>
    %c1_101 = arith.constant 1 : index
    %c0_102 = arith.constant 0 : index
    %c0_103 = arith.constant 0 : index
    %230 = vector.load %arg9[%c1_101, %c0_102, %c0_103] : memref<2x128x128xbf16, #tpu.memory_space<vmem>>, vector<1x128x128xbf16>
    %231 = vector.shape_cast %230 : vector<1x128x128xbf16> to vector<128x128xbf16>
    %c1_104 = arith.constant 1 : index
    %c0_105 = arith.constant 0 : index
    %c0_106 = arith.constant 0 : index
    %232 = vector.load %arg10[%c1_104, %c0_105, %c0_106] : memref<2x1x128xf32, #tpu.memory_space<vmem>>, vector<1x1x128xf32>
    %233 = vector.shape_cast %232 : vector<1x1x128xf32> to vector<1x128xf32>
    %234 = vector.broadcast %233 : vector<1x128xf32> to vector<10x128xf32>
    %235 = arith.addf %197, %234 : vector<10x128xf32>
    %236 = vector.extract_strided_slice %229 {offsets = [0, 0], sizes = [10, 32], strides = [1, 1]} : vector<10x384xf32> to vector<10x32xf32>
    %237 = arith.truncf %236 : vector<10x32xf32> to vector<10x32xbf16>
    %238 = vector.extract_strided_slice %229 {offsets = [0, 128], sizes = [10, 32], strides = [1, 1]} : vector<10x384xf32> to vector<10x32xf32>
    %239 = arith.truncf %238 : vector<10x32xf32> to vector<10x32xbf16>
    %240 = vector.extract_strided_slice %229 {offsets = [0, 256], sizes = [10, 32], strides = [1, 1]} : vector<10x384xf32> to vector<10x32xf32>
    %241 = arith.truncf %240 : vector<10x32xf32> to vector<10x32xbf16>
    %cst_107 = arith.constant dense<0.000000e+00> : vector<10x10xf32>
    %242 = tpu.matmul %237, %239, %cst_107 {dimension_numbers = #tpu.dot_dimension_numbers<[1], [1], [0], [0], [0, 0, 1, 0], [], []>} : vector<10x32xbf16>, vector<10x32xbf16>, vector<10x10xf32> -> vector<10x10xf32>
    %cst_108 = arith.constant 0.176776692 : f32
    %243 = vector.broadcast %cst_108 : f32 to vector<10x10xf32>
    %244 = arith.mulf %242, %243 : vector<10x10xf32>
    %245 = arith.addf %244, %0 : vector<10x10xf32>
    %cst_109 = arith.constant dense<0xFF800000> : vector<10xf32>
    %246 = vector.multi_reduction <maximumf>, %245, %cst_109 [1] : vector<10x10xf32> to vector<10xf32>
    %247 = vector.shape_cast %246 : vector<10xf32> to vector<10x1xf32>
    %248 = vector.broadcast %247 : vector<10x1xf32> to vector<10x10xf32>
    %249 = arith.subf %245, %248 : vector<10x10xf32>
    %250 = math.exp %249 : vector<10x10xf32>
    %cst_110 = arith.constant dense<0.000000e+00> : vector<10xf32>
    %251 = vector.multi_reduction <add>, %250, %cst_110 [1] : vector<10x10xf32> to vector<10xf32>
    %252 = vector.shape_cast %251 : vector<10xf32> to vector<10x1xf32>
    %253 = arith.truncf %250 : vector<10x10xf32> to vector<10x10xbf16>
    %cst_111 = arith.constant dense<0.000000e+00> : vector<10x32xf32>
    %254 = tpu.matmul %253, %241, %cst_111 {dimension_numbers = #tpu.dot_dimension_numbers<[1], [0], [0], [1], [0, 0, 1, 1], [], []>} : vector<10x10xbf16>, vector<10x32xbf16>, vector<10x32xf32> -> vector<10x32xf32>
    %255 = vector.broadcast %252 : vector<10x1xf32> to vector<10x32xf32>
    %256 = arith.divf %254, %255 : vector<10x32xf32>
    %257 = arith.truncf %256 : vector<10x32xf32> to vector<10x32xbf16>
    %258 = vector.extract_strided_slice %231 {offsets = [0, 0], sizes = [32, 128], strides = [1, 1]} : vector<128x128xbf16> to vector<32x128xbf16>
    %cst_112 = arith.constant dense<0.000000e+00> : vector<10x128xf32>
    %259 = tpu.matmul %257, %258, %cst_112 {dimension_numbers = #tpu.dot_dimension_numbers<[1], [0], [0], [1], [0, 0, 1, 1], [], []>} : vector<10x32xbf16>, vector<32x128xbf16>, vector<10x128xf32> -> vector<10x128xf32>
    %260 = arith.addf %235, %259 : vector<10x128xf32>
    %261 = vector.extract_strided_slice %229 {offsets = [0, 32], sizes = [10, 32], strides = [1, 1]} : vector<10x384xf32> to vector<10x32xf32>
    %262 = arith.truncf %261 : vector<10x32xf32> to vector<10x32xbf16>
    %263 = vector.extract_strided_slice %229 {offsets = [0, 160], sizes = [10, 32], strides = [1, 1]} : vector<10x384xf32> to vector<10x32xf32>
    %264 = arith.truncf %263 : vector<10x32xf32> to vector<10x32xbf16>
    %265 = vector.extract_strided_slice %229 {offsets = [0, 288], sizes = [10, 32], strides = [1, 1]} : vector<10x384xf32> to vector<10x32xf32>
    %266 = arith.truncf %265 : vector<10x32xf32> to vector<10x32xbf16>
    %cst_113 = arith.constant dense<0.000000e+00> : vector<10x10xf32>
    %267 = tpu.matmul %262, %264, %cst_113 {dimension_numbers = #tpu.dot_dimension_numbers<[1], [1], [0], [0], [0, 0, 1, 0], [], []>} : vector<10x32xbf16>, vector<10x32xbf16>, vector<10x10xf32> -> vector<10x10xf32>
    %cst_114 = arith.constant 0.176776692 : f32
    %268 = vector.broadcast %cst_114 : f32 to vector<10x10xf32>
    %269 = arith.mulf %267, %268 : vector<10x10xf32>
    %270 = arith.addf %269, %0 : vector<10x10xf32>
    %cst_115 = arith.constant dense<0xFF800000> : vector<10xf32>
    %271 = vector.multi_reduction <maximumf>, %270, %cst_115 [1] : vector<10x10xf32> to vector<10xf32>
    %272 = vector.shape_cast %271 : vector<10xf32> to vector<10x1xf32>
    %273 = vector.broadcast %272 : vector<10x1xf32> to vector<10x10xf32>
    %274 = arith.subf %270, %273 : vector<10x10xf32>
    %275 = math.exp %274 : vector<10x10xf32>
    %cst_116 = arith.constant dense<0.000000e+00> : vector<10xf32>
    %276 = vector.multi_reduction <add>, %275, %cst_116 [1] : vector<10x10xf32> to vector<10xf32>
    %277 = vector.shape_cast %276 : vector<10xf32> to vector<10x1xf32>
    %278 = arith.truncf %275 : vector<10x10xf32> to vector<10x10xbf16>
    %cst_117 = arith.constant dense<0.000000e+00> : vector<10x32xf32>
    %279 = tpu.matmul %278, %266, %cst_117 {dimension_numbers = #tpu.dot_dimension_numbers<[1], [0], [0], [1], [0, 0, 1, 1], [], []>} : vector<10x10xbf16>, vector<10x32xbf16>, vector<10x32xf32> -> vector<10x32xf32>
    %280 = vector.broadcast %277 : vector<10x1xf32> to vector<10x32xf32>
    %281 = arith.divf %279, %280 : vector<10x32xf32>
    %282 = arith.truncf %281 : vector<10x32xf32> to vector<10x32xbf16>
    %283 = vector.extract_strided_slice %231 {offsets = [32, 0], sizes = [32, 128], strides = [1, 1]} : vector<128x128xbf16> to vector<32x128xbf16>
    %cst_118 = arith.constant dense<0.000000e+00> : vector<10x128xf32>
    %284 = tpu.matmul %282, %283, %cst_118 {dimension_numbers = #tpu.dot_dimension_numbers<[1], [0], [0], [1], [0, 0, 1, 1], [], []>} : vector<10x32xbf16>, vector<32x128xbf16>, vector<10x128xf32> -> vector<10x128xf32>
    %285 = arith.addf %260, %284 : vector<10x128xf32>
    %286 = vector.extract_strided_slice %229 {offsets = [0, 64], sizes = [10, 32], strides = [1, 1]} : vector<10x384xf32> to vector<10x32xf32>
    %287 = arith.truncf %286 : vector<10x32xf32> to vector<10x32xbf16>
    %288 = vector.extract_strided_slice %229 {offsets = [0, 192], sizes = [10, 32], strides = [1, 1]} : vector<10x384xf32> to vector<10x32xf32>
    %289 = arith.truncf %288 : vector<10x32xf32> to vector<10x32xbf16>
    %290 = vector.extract_strided_slice %229 {offsets = [0, 320], sizes = [10, 32], strides = [1, 1]} : vector<10x384xf32> to vector<10x32xf32>
    %291 = arith.truncf %290 : vector<10x32xf32> to vector<10x32xbf16>
    %cst_119 = arith.constant dense<0.000000e+00> : vector<10x10xf32>
    %292 = tpu.matmul %287, %289, %cst_119 {dimension_numbers = #tpu.dot_dimension_numbers<[1], [1], [0], [0], [0, 0, 1, 0], [], []>} : vector<10x32xbf16>, vector<10x32xbf16>, vector<10x10xf32> -> vector<10x10xf32>
    %cst_120 = arith.constant 0.176776692 : f32
    %293 = vector.broadcast %cst_120 : f32 to vector<10x10xf32>
    %294 = arith.mulf %292, %293 : vector<10x10xf32>
    %295 = arith.addf %294, %0 : vector<10x10xf32>
    %cst_121 = arith.constant dense<0xFF800000> : vector<10xf32>
    %296 = vector.multi_reduction <maximumf>, %295, %cst_121 [1] : vector<10x10xf32> to vector<10xf32>
    %297 = vector.shape_cast %296 : vector<10xf32> to vector<10x1xf32>
    %298 = vector.broadcast %297 : vector<10x1xf32> to vector<10x10xf32>
    %299 = arith.subf %295, %298 : vector<10x10xf32>
    %300 = math.exp %299 : vector<10x10xf32>
    %cst_122 = arith.constant dense<0.000000e+00> : vector<10xf32>
    %301 = vector.multi_reduction <add>, %300, %cst_122 [1] : vector<10x10xf32> to vector<10xf32>
    %302 = vector.shape_cast %301 : vector<10xf32> to vector<10x1xf32>
    %303 = arith.truncf %300 : vector<10x10xf32> to vector<10x10xbf16>
    %cst_123 = arith.constant dense<0.000000e+00> : vector<10x32xf32>
    %304 = tpu.matmul %303, %291, %cst_123 {dimension_numbers = #tpu.dot_dimension_numbers<[1], [0], [0], [1], [0, 0, 1, 1], [], []>} : vector<10x10xbf16>, vector<10x32xbf16>, vector<10x32xf32> -> vector<10x32xf32>
    %305 = vector.broadcast %302 : vector<10x1xf32> to vector<10x32xf32>
    %306 = arith.divf %304, %305 : vector<10x32xf32>
    %307 = arith.truncf %306 : vector<10x32xf32> to vector<10x32xbf16>
    %308 = vector.extract_strided_slice %231 {offsets = [64, 0], sizes = [32, 128], strides = [1, 1]} : vector<128x128xbf16> to vector<32x128xbf16>
    %cst_124 = arith.constant dense<0.000000e+00> : vector<10x128xf32>
    %309 = tpu.matmul %307, %308, %cst_124 {dimension_numbers = #tpu.dot_dimension_numbers<[1], [0], [0], [1], [0, 0, 1, 1], [], []>} : vector<10x32xbf16>, vector<32x128xbf16>, vector<10x128xf32> -> vector<10x128xf32>
    %310 = arith.addf %285, %309 : vector<10x128xf32>
    %311 = vector.extract_strided_slice %229 {offsets = [0, 96], sizes = [10, 32], strides = [1, 1]} : vector<10x384xf32> to vector<10x32xf32>
    %312 = arith.truncf %311 : vector<10x32xf32> to vector<10x32xbf16>
    %313 = vector.extract_strided_slice %229 {offsets = [0, 224], sizes = [10, 32], strides = [1, 1]} : vector<10x384xf32> to vector<10x32xf32>
    %314 = arith.truncf %313 : vector<10x32xf32> to vector<10x32xbf16>
    %315 = vector.extract_strided_slice %229 {offsets = [0, 352], sizes = [10, 32], strides = [1, 1]} : vector<10x384xf32> to vector<10x32xf32>
    %316 = arith.truncf %315 : vector<10x32xf32> to vector<10x32xbf16>
    %cst_125 = arith.constant dense<0.000000e+00> : vector<10x10xf32>
    %317 = tpu.matmul %312, %314, %cst_125 {dimension_numbers = #tpu.dot_dimension_numbers<[1], [1], [0], [0], [0, 0, 1, 0], [], []>} : vector<10x32xbf16>, vector<10x32xbf16>, vector<10x10xf32> -> vector<10x10xf32>
    %cst_126 = arith.constant 0.176776692 : f32
    %318 = vector.broadcast %cst_126 : f32 to vector<10x10xf32>
    %319 = arith.mulf %317, %318 : vector<10x10xf32>
    %320 = arith.addf %319, %0 : vector<10x10xf32>
    %cst_127 = arith.constant dense<0xFF800000> : vector<10xf32>
    %321 = vector.multi_reduction <maximumf>, %320, %cst_127 [1] : vector<10x10xf32> to vector<10xf32>
    %322 = vector.shape_cast %321 : vector<10xf32> to vector<10x1xf32>
    %323 = vector.broadcast %322 : vector<10x1xf32> to vector<10x10xf32>
    %324 = arith.subf %320, %323 : vector<10x10xf32>
    %325 = math.exp %324 : vector<10x10xf32>
    %cst_128 = arith.constant dense<0.000000e+00> : vector<10xf32>
    %326 = vector.multi_reduction <add>, %325, %cst_128 [1] : vector<10x10xf32> to vector<10xf32>
    %327 = vector.shape_cast %326 : vector<10xf32> to vector<10x1xf32>
    %328 = arith.truncf %325 : vector<10x10xf32> to vector<10x10xbf16>
    %cst_129 = arith.constant dense<0.000000e+00> : vector<10x32xf32>
    %329 = tpu.matmul %328, %316, %cst_129 {dimension_numbers = #tpu.dot_dimension_numbers<[1], [0], [0], [1], [0, 0, 1, 1], [], []>} : vector<10x10xbf16>, vector<10x32xbf16>, vector<10x32xf32> -> vector<10x32xf32>
    %330 = vector.broadcast %327 : vector<10x1xf32> to vector<10x32xf32>
    %331 = arith.divf %329, %330 : vector<10x32xf32>
    %332 = arith.truncf %331 : vector<10x32xf32> to vector<10x32xbf16>
    %333 = vector.extract_strided_slice %231 {offsets = [96, 0], sizes = [32, 128], strides = [1, 1]} : vector<128x128xbf16> to vector<32x128xbf16>
    %cst_130 = arith.constant dense<0.000000e+00> : vector<10x128xf32>
    %334 = tpu.matmul %332, %333, %cst_130 {dimension_numbers = #tpu.dot_dimension_numbers<[1], [0], [0], [1], [0, 0, 1, 1], [], []>} : vector<10x32xbf16>, vector<32x128xbf16>, vector<10x128xf32> -> vector<10x128xf32>
    %335 = arith.addf %310, %334 : vector<10x128xf32>
    %c1_131 = arith.constant 1 : index
    %c0_132 = arith.constant 0 : index
    %c0_133 = arith.constant 0 : index
    %336 = vector.load %arg11[%c1_131, %c0_132, %c0_133] : memref<2x1x128xf32, #tpu.memory_space<vmem>>, vector<1x1x128xf32>
    %337 = vector.shape_cast %336 : vector<1x1x128xf32> to vector<1x128xf32>
    %c1_134 = arith.constant 1 : index
    %c0_135 = arith.constant 0 : index
    %c0_136 = arith.constant 0 : index
    %338 = vector.load %arg12[%c1_134, %c0_135, %c0_136] : memref<2x1x128xf32, #tpu.memory_space<vmem>>, vector<1x1x128xf32>
    %339 = vector.shape_cast %338 : vector<1x1x128xf32> to vector<1x128xf32>
    %cst_137 = arith.constant dense<0.000000e+00> : vector<10xf32>
    %340 = vector.multi_reduction <add>, %335, %cst_137 [1] : vector<10x128xf32> to vector<10xf32>
    %341 = vector.shape_cast %340 : vector<10xf32> to vector<10x1xf32>
    %cst_138 = arith.constant 1.280000e+02 : f32
    %342 = vector.broadcast %cst_138 : f32 to vector<10x1xf32>
    %343 = arith.divf %341, %342 : vector<10x1xf32>
    %344 = vector.broadcast %343 : vector<10x1xf32> to vector<10x128xf32>
    %345 = arith.subf %335, %344 : vector<10x128xf32>
    %346 = arith.mulf %345, %345 : vector<10x128xf32>
    %cst_139 = arith.constant dense<0.000000e+00> : vector<10xf32>
    %347 = vector.multi_reduction <add>, %346, %cst_139 [1] : vector<10x128xf32> to vector<10xf32>
    %348 = vector.shape_cast %347 : vector<10xf32> to vector<10x1xf32>
    %cst_140 = arith.constant 1.280000e+02 : f32
    %349 = vector.broadcast %cst_140 : f32 to vector<10x1xf32>
    %350 = arith.divf %348, %349 : vector<10x1xf32>
    %cst_141 = arith.constant 9.99999997E-7 : f32
    %351 = vector.broadcast %cst_141 : f32 to vector<10x1xf32>
    %352 = arith.addf %350, %351 : vector<10x1xf32>
    %353 = math.rsqrt %352 : vector<10x1xf32>
    %354 = vector.broadcast %353 : vector<10x1xf32> to vector<10x128xf32>
    %355 = arith.mulf %345, %354 : vector<10x128xf32>
    %356 = vector.broadcast %337 : vector<1x128xf32> to vector<10x128xf32>
    %357 = arith.mulf %355, %356 : vector<10x128xf32>
    %358 = vector.broadcast %339 : vector<1x128xf32> to vector<10x128xf32>
    %359 = arith.addf %357, %358 : vector<10x128xf32>
    %360 = arith.truncf %359 : vector<10x128xf32> to vector<10x128xbf16>
    %c1_142 = arith.constant 1 : index
    %c0_143 = arith.constant 0 : index
    %c0_144 = arith.constant 0 : index
    %361 = vector.load %arg13[%c1_142, %c0_143, %c0_144] : memref<2x128x512xbf16, #tpu.memory_space<vmem>>, vector<1x128x512xbf16>
    %362 = vector.shape_cast %361 : vector<1x128x512xbf16> to vector<128x512xbf16>
    %cst_145 = arith.constant dense<0.000000e+00> : vector<10x512xf32>
    %363 = tpu.matmul %360, %362, %cst_145 {dimension_numbers = #tpu.dot_dimension_numbers<[1], [0], [0], [1], [0, 0, 1, 1], [], []>} : vector<10x128xbf16>, vector<128x512xbf16>, vector<10x512xf32> -> vector<10x512xf32>
    %c1_146 = arith.constant 1 : index
    %c0_147 = arith.constant 0 : index
    %c0_148 = arith.constant 0 : index
    %364 = vector.load %arg14[%c1_146, %c0_147, %c0_148] : memref<2x1x512xf32, #tpu.memory_space<vmem>>, vector<1x1x512xf32>
    %365 = vector.shape_cast %364 : vector<1x1x512xf32> to vector<1x512xf32>
    %366 = vector.broadcast %365 : vector<1x512xf32> to vector<10x512xf32>
    %367 = arith.addf %363, %366 : vector<10x512xf32>
    %cst_149 = arith.constant 5.000000e-01 : f32
    %368 = vector.broadcast %cst_149 : f32 to vector<10x512xf32>
    %369 = arith.mulf %368, %367 : vector<10x512xf32>
    %cst_150 = arith.constant 4.471500e-02 : f32
    %370 = vector.broadcast %cst_150 : f32 to vector<10x512xf32>
    %371 = arith.mulf %370, %367 : vector<10x512xf32>
    %372 = arith.mulf %371, %367 : vector<10x512xf32>
    %373 = arith.mulf %372, %367 : vector<10x512xf32>
    %374 = arith.addf %367, %373 : vector<10x512xf32>
    %cst_151 = arith.constant 0.797884583 : f32
    %375 = vector.broadcast %cst_151 : f32 to vector<10x512xf32>
    %376 = arith.mulf %375, %374 : vector<10x512xf32>
    %377 = math.tanh %376 : vector<10x512xf32>
    %cst_152 = arith.constant 1.000000e+00 : f32
    %378 = vector.broadcast %cst_152 : f32 to vector<10x512xf32>
    %379 = arith.addf %378, %377 : vector<10x512xf32>
    %380 = arith.mulf %369, %379 : vector<10x512xf32>
    %381 = arith.truncf %380 : vector<10x512xf32> to vector<10x512xbf16>
    %c1_153 = arith.constant 1 : index
    %c0_154 = arith.constant 0 : index
    %c0_155 = arith.constant 0 : index
    %382 = vector.load %arg15[%c1_153, %c0_154, %c0_155] : memref<2x512x128xbf16, #tpu.memory_space<vmem>>, vector<1x512x128xbf16>
    %383 = vector.shape_cast %382 : vector<1x512x128xbf16> to vector<512x128xbf16>
    %cst_156 = arith.constant dense<0.000000e+00> : vector<10x128xf32>
    %384 = tpu.matmul %381, %383, %cst_156 {dimension_numbers = #tpu.dot_dimension_numbers<[1], [0], [0], [1], [0, 0, 1, 1], [], []>} : vector<10x512xbf16>, vector<512x128xbf16>, vector<10x128xf32> -> vector<10x128xf32>
    %385 = arith.addf %335, %384 : vector<10x128xf32>
    %c1_157 = arith.constant 1 : index
    %c0_158 = arith.constant 0 : index
    %c0_159 = arith.constant 0 : index
    %386 = vector.load %arg16[%c1_157, %c0_158, %c0_159] : memref<2x1x128xf32, #tpu.memory_space<vmem>>, vector<1x1x128xf32>
    %387 = vector.shape_cast %386 : vector<1x1x128xf32> to vector<1x128xf32>
    %388 = vector.broadcast %387 : vector<1x128xf32> to vector<10x128xf32>
    %389 = arith.addf %385, %388 : vector<10x128xf32>
    %c0_160 = arith.constant 0 : index
    %c0_161 = arith.constant 0 : index
    %390 = vector.load %arg3[%c0_160, %c0_161] : memref<2x10xf32, #tpu.memory_space<vmem>>, vector<2x10xf32>
    %cst_162 = arith.constant dense<0.000000e+00> : vector<2x128xf32>
    %391 = tpu.matmul %390, %389, %cst_162 {dimension_numbers = #tpu.dot_dimension_numbers<[1], [0], [0], [1], [0, 0, 1, 1], [], []>} : vector<2x10xf32>, vector<10x128xf32>, vector<2x128xf32> -> vector<2x128xf32>
    %c0_163 = arith.constant 0 : index
    %c0_164 = arith.constant 0 : index
    %392 = vector.load %arg17[%c0_163, %c0_164] : memref<1x128xf32, #tpu.memory_space<vmem>>, vector<1x128xf32>
    %c0_165 = arith.constant 0 : index
    %c0_166 = arith.constant 0 : index
    %393 = vector.load %arg18[%c0_165, %c0_166] : memref<1x128xf32, #tpu.memory_space<vmem>>, vector<1x128xf32>
    %cst_167 = arith.constant dense<0.000000e+00> : vector<2xf32>
    %394 = vector.multi_reduction <add>, %391, %cst_167 [1] : vector<2x128xf32> to vector<2xf32>
    %395 = vector.shape_cast %394 : vector<2xf32> to vector<2x1xf32>
    %cst_168 = arith.constant 1.280000e+02 : f32
    %396 = vector.broadcast %cst_168 : f32 to vector<2x1xf32>
    %397 = arith.divf %395, %396 : vector<2x1xf32>
    %398 = vector.broadcast %397 : vector<2x1xf32> to vector<2x128xf32>
    %399 = arith.subf %391, %398 : vector<2x128xf32>
    %400 = arith.mulf %399, %399 : vector<2x128xf32>
    %cst_169 = arith.constant dense<0.000000e+00> : vector<2xf32>
    %401 = vector.multi_reduction <add>, %400, %cst_169 [1] : vector<2x128xf32> to vector<2xf32>
    %402 = vector.shape_cast %401 : vector<2xf32> to vector<2x1xf32>
    %cst_170 = arith.constant 1.280000e+02 : f32
    %403 = vector.broadcast %cst_170 : f32 to vector<2x1xf32>
    %404 = arith.divf %402, %403 : vector<2x1xf32>
    %cst_171 = arith.constant 9.99999997E-7 : f32
    %405 = vector.broadcast %cst_171 : f32 to vector<2x1xf32>
    %406 = arith.addf %404, %405 : vector<2x1xf32>
    %407 = math.rsqrt %406 : vector<2x1xf32>
    %408 = vector.broadcast %407 : vector<2x1xf32> to vector<2x128xf32>
    %409 = arith.mulf %399, %408 : vector<2x128xf32>
    %410 = vector.broadcast %392 : vector<1x128xf32> to vector<2x128xf32>
    %411 = arith.mulf %409, %410 : vector<2x128xf32>
    %412 = vector.broadcast %393 : vector<1x128xf32> to vector<2x128xf32>
    %413 = arith.addf %411, %412 : vector<2x128xf32>
    %414 = arith.truncf %413 : vector<2x128xf32> to vector<2x128xbf16>
    %c0_172 = arith.constant 0 : index
    %c0_173 = arith.constant 0 : index
    %415 = vector.load %arg19[%c0_172, %c0_173] : memref<128x768xbf16, #tpu.memory_space<vmem>>, vector<128x768xbf16>
    %cst_174 = arith.constant dense<0.000000e+00> : vector<2x768xf32>
    %416 = tpu.matmul %414, %415, %cst_174 {dimension_numbers = #tpu.dot_dimension_numbers<[1], [0], [0], [1], [0, 0, 1, 1], [], []>} : vector<2x128xbf16>, vector<128x768xbf16>, vector<2x768xf32> -> vector<2x768xf32>
    %c0_175 = arith.constant 0 : index
    %c0_176 = arith.constant 0 : index
    %417 = vector.load %arg20[%c0_175, %c0_176] : memref<1x768xf32, #tpu.memory_space<vmem>>, vector<1x768xf32>
    %418 = vector.broadcast %417 : vector<1x768xf32> to vector<2x768xf32>
    %419 = arith.addf %416, %418 : vector<2x768xf32>
    %cst_177 = arith.constant 0.000000e+00 : f32
    %420 = vector.broadcast %cst_177 : f32 to vector<2x768xf32>
    %421 = arith.maximumf %419, %420 : vector<2x768xf32>
    %422 = arith.truncf %421 : vector<2x768xf32> to vector<2x768xbf16>
    %c0_178 = arith.constant 0 : index
    %c0_179 = arith.constant 0 : index
    %423 = vector.load %arg21[%c0_178, %c0_179] : memref<768x128xbf16, #tpu.memory_space<vmem>>, vector<768x128xbf16>
    %cst_180 = arith.constant dense<0.000000e+00> : vector<2x128xf32>
    %424 = tpu.matmul %422, %423, %cst_180 {dimension_numbers = #tpu.dot_dimension_numbers<[1], [0], [0], [1], [0, 0, 1, 1], [], []>} : vector<2x768xbf16>, vector<768x128xbf16>, vector<2x128xf32> -> vector<2x128xf32>
    %c0_181 = arith.constant 0 : index
    %c0_182 = arith.constant 0 : index
    %425 = vector.load %arg22[%c0_181, %c0_182] : memref<1x128xf32, #tpu.memory_space<vmem>>, vector<1x128xf32>
    %426 = vector.broadcast %425 : vector<1x128xf32> to vector<2x128xf32>
    %427 = arith.addf %424, %426 : vector<2x128xf32>
    %c0_183 = arith.constant 0 : index
    %c0_184 = arith.constant 0 : index
    %428 = vector.load %arg23[%c0_183, %c0_184] : memref<2x128xf32, #tpu.memory_space<vmem>>, vector<2x128xf32>
    tpu.vector_store %arg23[%c0_183, %c0_184], %427 {strides = array<i32>} : memref<2x128xf32, #tpu.memory_space<vmem>>, vector<2x128xf32>,
    return
  }
}

</mosaic_0001>

<llo_original>
// kernel: tile.7
$region0: #{tile.7}
  %s0 = inlined_call_operand.vmem [shape: f32[2,5,128], index: 0, kind: input, shape index: {}]
  %s1 = inlined_call_operand.vmem [shape: f32[10,128], index: 1, kind: output, shape index: {}]
  %v2 = vld [vmem:[%s0] sm:$0x1f]
  %3 = vst [vmem:[%s1] sm:$0x1f] %v2
  %s4 = scalar_lea.vmem %s0, 8
  %v5 = vld [vmem:[%s4] sm:$0x1f]
  %s6 = scalar_lea.vmem %s1, 5
  %7 = vst [vmem:[%s6] sm:$0x1f] %v5

// kernel: _lambda_.1
$region0: #{_lambda_.1}
  #allocation0 [shape = 'u32[]', space=smem, size = 0x4, offset = 0x4, fixed_abs, tag = 'smem constant byte address 0x4 - core index']
  #allocation1 [shape = 'u32[144,128]{1,0:T(1,128)}', space=vmem, size = 0x12000, scoped, tag = 'internal scratch']
  %s0 = inlined_call_operand.vmem [shape: bf16[10,192], index: 0, kind: input, shape index: {}]
  %s1 = inlined_call_operand.vmem [shape: f32[10,128], index: 1, kind: input, shape index: {}]
  %s2 = inlined_call_operand.vmem [shape: f32[10,10], index: 2, kind: input, shape index: {}]
  %s3 = inlined_call_operand.vmem [shape: f32[2,10], index: 3, kind: input, shape index: {}]
  %s4 = inlined_call_operand.vmem [shape: bf16[192,128], index: 4, kind: input, shape index: {}]
  %s5 = inlined_call_operand.vmem [shape: f32[2,1,128], index: 5, kind: input, shape index: {}, may-alias: {5,11}]
  %s6 = inlined_call_operand.vmem [shape: f32[2,1,128], index: 6, kind: input, shape index: {}, may-alias: {6,12}]
  %s7 = inlined_call_operand.vmem [shape: bf16[2,128,384], index: 7, kind: input, shape index: {}]
  %s8 = inlined_call_operand.vmem [shape: f32[2,1,384], index: 8, kind: input, shape index: {}]
  %s9 = inlined_call_operand.vmem [shape: bf16[2,128,128], index: 9, kind: input, shape index: {}]
  %s10 = inlined_call_operand.vmem [shape: f32[2,1,128], index: 10, kind: input, shape index: {}]
  %s11 = inlined_call_operand.vmem [shape: f32[2,1,128], index: 11, kind: input, shape index: {}, may-alias: {5,11}]
  %s12 = inlined_call_operand.vmem [shape: f32[2,1,128], index: 12, kind: input, shape index: {}, may-alias: {6,12}]
  %s13 = inlined_call_operand.vmem [shape: bf16[2,128,512], index: 13, kind: input, shape index: {}]
  %s14 = inlined_call_operand.vmem [shape: f32[2,1,512], index: 14, kind: input, shape index: {}]
  %s15 = inlined_call_operand.vmem [shape: bf16[2,512,128], index: 15, kind: input, shape index: {}]
  %s16 = inlined_call_operand.vmem [shape: f32[2,1,128], index: 16, kind: input, shape index: {}]
  %s17 = inlined_call_operand.vmem [shape: f32[1,128], index: 17, kind: input, shape index: {}]
  %s18 = inlined_call_operand.vmem [shape: f32[1,128], index: 18, kind: input, shape index: {}]
  %s19 = inlined_call_operand.vmem [shape: bf16[128,768], index: 19, kind: input, shape index: {}]
  %s20 = inlined_call_operand.vmem [shape: f32[1,768], index: 20, kind: input, shape index: {}]
  %s21 = inlined_call_operand.vmem [shape: bf16[768,128], index: 21, kind: input, shape index: {}]
  %s22 = inlined_call_operand.vmem [shape: f32[1,128], index: 22, kind: input, shape index: {}]
  %s23 = inlined_call_operand.vmem [shape: f32[2,128], index: 23, kind: output, shape index: {}]
  %s24 = sld [smem:[#allocation0]]
  $region102: #{_lambda_.1} parent=0
    _
  %s26 = ssub.s32 1, %s24
  %s27 = scalar_select 0, %s26, %s24
  // Predicated region
  $region2: #{_lambda_.1} parent=0 // pred_check
    _
  $region3: #{_lambda_.1} parent=0 // pred_check_branch
    %29 = sbr.rel (0) target = $region5
  $region4: #{_lambda_.1} parent=0 // pred_region
    _
  $region5: #{_lambda_.1} parent=0 // pred_fallthru
    _
  // Predicated region
  $region6: #{_lambda_.1} parent=0 // pred_check
    _
  $region7: #{_lambda_.1} parent=0 // pred_check_branch
    %31 = sbr.rel (0) target = $region9
  $region8: #{_lambda_.1} parent=0 // pred_region
    _
  $region9: #{_lambda_.1} parent=0 // pred_fallthru
    _
  // Predicated region
  $region10: #{_lambda_.1} parent=0 // pred_check
    _
  $region11: #{_lambda_.1} parent=0 // pred_check_branch
    %33 = sbr.rel (0) target = $region13
  $region12: #{_lambda_.1} parent=0 // pred_region
    _
  $region13: #{_lambda_.1} parent=0 // pred_fallthru
    _
  // Predicated region
  $region14: #{_lambda_.1} parent=0 // pred_check
    _
  $region15: #{_lambda_.1} parent=0 // pred_check_branch
    %35 = sbr.rel (0) target = $region17
  $region16: #{_lambda_.1} parent=0 // pred_region
    _
  $region17: #{_lambda_.1} parent=0 // pred_fallthru
    _
  // Predicated region
  $region18: #{_lambda_.1} parent=0 // pred_check
    _
  $region19: #{_lambda_.1} parent=0 // pred_check_branch
    %37 = sbr.rel (0) target = $region21
  $region20: #{_lambda_.1} parent=0 // pred_region
    _
  $region21: #{_lambda_.1} parent=0 // pred_fallthru
    _
  // Predicated region
  $region22: #{_lambda_.1} parent=0 // pred_check
    _
  $region23: #{_lambda_.1} parent=0 // pred_check_branch
    %39 = sbr.rel (0) target = $region25
  $region24: #{_lambda_.1} parent=0 // pred_region
    _
  $region25: #{_lambda_.1} parent=0 // pred_fallthru
    _
  // Predicated region
  $region26: #{_lambda_.1} parent=0 // pred_check
    _
  $region27: #{_lambda_.1} parent=0 // pred_check_branch
    %41 = sbr.rel (0) target = $region29
  $region28: #{_lambda_.1} parent=0 // pred_region
    _
  $region29: #{_lambda_.1} parent=0 // pred_fallthru
    _
  // Predicated region
  $region30: #{_lambda_.1} parent=0 // pred_check
    _
  $region31: #{_lambda_.1} parent=0 // pred_check_branch
    %43 = sbr.rel (0) target = $region33
  $region32: #{_lambda_.1} parent=0 // pred_region
    _
  $region33: #{_lambda_.1} parent=0 // pred_fallthru
    _
  // Predicated region
  $region34: #{_lambda_.1} parent=0 // pred_check
    _
  $region35: #{_lambda_.1} parent=0 // pred_check_branch
    %45 = sbr.rel (0) target = $region37
  $region36: #{_lambda_.1} parent=0 // pred_region
    _
  $region37: #{_lambda_.1} parent=0 // pred_fallthru
    _
  // Predicated region
  $region38: #{_lambda_.1} parent=0 // pred_check
    _
  $region39: #{_lambda_.1} parent=0 // pred_check_branch
    %47 = sbr.rel (0) target = $region41
  $region40: #{_lambda_.1} parent=0 // pred_region
    _
  $region41: #{_lambda_.1} parent=0 // pred_fallthru
    _
  // Predicated region
  $region42: #{_lambda_.1} parent=0 // pred_check
    _
  $region43: #{_lambda_.1} parent=0 // pred_check_branch
    %49 = sbr.rel (0) target = $region45
  $region44: #{_lambda_.1} parent=0 // pred_region
    _
  $region45: #{_lambda_.1} parent=0 // pred_fallthru
    _
  // Predicated region
  $region46: #{_lambda_.1} parent=0 // pred_check
    _
  $region47: #{_lambda_.1} parent=0 // pred_check_branch
    %51 = sbr.rel (0) target = $region49
  $region48: #{_lambda_.1} parent=0 // pred_region
    _
  $region49: #{_lambda_.1} parent=0 // pred_fallthru
    _
  // Predicated region
  $region50: #{_lambda_.1} parent=0 // pred_check
    _
  $region51: #{_lambda_.1} parent=0 // pred_check_branch
    %53 = sbr.rel (0) target = $region53
  $region52: #{_lambda_.1} parent=0 // pred_region
    _
  $region53: #{_lambda_.1} parent=0 // pred_fallthru
    _
  // Predicated region
  $region54: #{_lambda_.1} parent=0 // pred_check
    _
  $region55: #{_lambda_.1} parent=0 // pred_check_branch
    %55 = sbr.rel (0) target = $region57
  $region56: #{_lambda_.1} parent=0 // pred_region
    _
  $region57: #{_lambda_.1} parent=0 // pred_fallthru
    _
  // Predicated region
  $region58: #{_lambda_.1} parent=0 // pred_check
    _
  $region59: #{_lambda_.1} parent=0 // pred_check_branch
    %57 = sbr.rel (0) target = $region61
  $region60: #{_lambda_.1} parent=0 // pred_region
    _
  $region61: #{_lambda_.1} parent=0 // pred_fallthru
    _
  // Predicated region
  $region62: #{_lambda_.1} parent=0 // pred_check
    _
  $region63: #{_lambda_.1} parent=0 // pred_check_branch
    %59 = sbr.rel (0) target = $region65
  $region64: #{_lambda_.1} parent=0 // pred_region
    _
  $region65: #{_lambda_.1} parent=0 // pred_fallthru
    _
  // Predicated region
  $region66: #{_lambda_.1} parent=0 // pred_check
    _
  $region67: #{_lambda_.1} parent=0 // pred_check_branch
    %61 = sbr.rel (0) target = $region69
  $region68: #{_lambda_.1} parent=0 // pred_region
    _
  $region69: #{_lambda_.1} parent=0 // pred_fallthru
    _
  // Predicated region
  $region70: #{_lambda_.1} parent=0 // pred_check
    _
  $region71: #{_lambda_.1} parent=0 // pred_check_branch
    %63 = sbr.rel (0) target = $region73
  $region72: #{_lambda_.1} parent=0 // pred_region
    _
  $region73: #{_lambda_.1} parent=0 // pred_fallthru
    _
  // Predicated region
  $region74: #{_lambda_.1} parent=0 // pred_check
    _
  $region75: #{_lambda_.1} parent=0 // pred_check_branch
    %65 = sbr.rel (0) target = $region77
  $region76: #{_lambda_.1} parent=0 // pred_region
    _
  $region77: #{_lambda_.1} parent=0 // pred_fallthru
    _
  // Predicated region
  $region78: #{_lambda_.1} parent=0 // pred_check
    _
  $region79: #{_lambda_.1} parent=0 // pred_check_branch
    %67 = sbr.rel (0) target = $region81
  $region80: #{_lambda_.1} parent=0 // pred_region
    _
  $region81: #{_lambda_.1} parent=0 // pred_fallthru
    _
  // Predicated region
  $region82: #{_lambda_.1} parent=0 // pred_check
    _
  $region83: #{_lambda_.1} parent=0 // pred_check_branch
    %69 = sbr.rel (0) target = $region85
  $region84: #{_lambda_.1} parent=0 // pred_region
    _
  $region85: #{_lambda_.1} parent=0 // pred_fallthru
    _
  // Predicated region
  $region86: #{_lambda_.1} parent=0 // pred_check
    _
  $region87: #{_lambda_.1} parent=0 // pred_check_branch
    %71 = sbr.rel (0) target = $region89
  $region88: #{_lambda_.1} parent=0 // pred_region
    _
  $region89: #{_lambda_.1} parent=0 // pred_fallthru
    _
  // Predicated region
  $region90: #{_lambda_.1} parent=0 // pred_check
    _
  $region91: #{_lambda_.1} parent=0 // pred_check_branch
    %73 = sbr.rel (0) target = $region93
  $region92: #{_lambda_.1} parent=0 // pred_region
    _
  $region93: #{_lambda_.1} parent=0 // pred_fallthru
    _
  %v75 = vld [vmem:[%s2] sm:$0xff]
  %v76 = vld [vmem:[%s2 + $0x8] sm:$0x3]
  %v77 = vld [vmem:[%s0] sm:$0xff]
  %v78 = vld [vmem:[%s0 + $0x8] sm:$0x11]
  %v79 = vld [vmem:[%s4] sm:$0xf]
  %v80 = vld [vmem:[%s4 + $0x4] sm:$0xf]
  %v81 = vld [vmem:[%s4 + $0x8] sm:$0xf]
  %v82 = vld [vmem:[%s4 + $0xc] sm:$0xf]
  %v83 = vld [vmem:[%s4 + $0x10] sm:$0xf]
  %v84 = vld [vmem:[%s4 + $0x14] sm:$0xf]
  %v85 = vld [vmem:[%s4 + $0x18] sm:$0xf]
  %v86 = vld [vmem:[%s4 + $0x1c] sm:$0xf]
  %v87 = vld [vmem:[%s4 + $0x20] sm:$0xf]
  %v88 = vld [vmem:[%s4 + $0x24] sm:$0xf]
  %v89 = vld [vmem:[%s4 + $0x28] sm:$0xf]
  %v90 = vld [vmem:[%s4 + $0x2c] sm:$0xf]
  %v91 = vld [vmem:[%s4 + $0x30] sm:$0xf]
  %v92 = vld [vmem:[%s4 + $0x34] sm:$0xf]
  %v93 = vld [vmem:[%s4 + $0x38] sm:$0xf]
  %v94 = vld [vmem:[%s4 + $0x3c] sm:$0xf]
  %v95 = vld [vmem:[%s4 + $0x40] sm:$0xf]
  %v96 = vld [vmem:[%s4 + $0x44] sm:$0xf]
  %v97 = vld [vmem:[%s4 + $0x48] sm:$0xf]
  %v98 = vld [vmem:[%s4 + $0x4c] sm:$0xf]
  %v99 = vld [vmem:[%s4 + $0x50] sm:$0xf]
  %v100 = vld [vmem:[%s4 + $0x54] sm:$0xf]
  %v101 = vld [vmem:[%s4 + $0x58] sm:$0xf]
  %v102 = vld [vmem:[%s4 + $0x5c] sm:$0xf]
  %v103 = vld [vmem:[%s1] sm:$0xff]
  %v104 = vld [vmem:[%s1 + $0x8] sm:$0x3]
  %v107 = vunpack.c.l.b16 %v77
  %v108 = vunpack.c.h.b16 %v77
  %v109 = vunpack.c.l.b16 %v78
  %v110 = vunpack.c.h.b16 %v78
  %v111 = vpack.c.b16 %v109, %v107
  %v112 = vpack.c.b16 %v110, %v108
  %v138 = vunpack.c.l.b16 %v79
  %v139 = vunpack.c.l.b16 %v80
  %v140 = vunpack.c.l.b16 %v81
  %v141 = vunpack.c.l.b16 %v82
  %v142 = vunpack.c.l.b16 %v83
  %v143 = vunpack.c.l.b16 %v84
  %v144 = vunpack.c.l.b16 %v85
  %v145 = vunpack.c.l.b16 %v86
  %v146 = vunpack.c.l.b16 %v87
  %v147 = vunpack.c.l.b16 %v88
  %v148 = vunpack.c.l.b16 %v89
  %v149 = vunpack.c.l.b16 %v90
  %v150 = vunpack.c.l.b16 %v91
  %v151 = vunpack.c.l.b16 %v92
  %v152 = vunpack.c.l.b16 %v93
  %v153 = vunpack.c.l.b16 %v94
  %v154 = vunpack.c.l.b16 %v95
  %v155 = vunpack.c.l.b16 %v96
  %v156 = vunpack.c.l.b16 %v97
  %v157 = vunpack.c.l.b16 %v98
  %v158 = vunpack.c.l.b16 %v99
  %v159 = vunpack.c.l.b16 %v100
  %v160 = vunpack.c.l.b16 %v101
  %v161 = vunpack.c.l.b16 %v102
  %v162 = vpack.c.b16 %v139, %v138
  %v163 = vpack.c.b16 %v141, %v140
  %v164 = vpack.c.b16 %v143, %v142
  %v165 = vpack.c.b16 %v145, %v144
  %v166 = vpack.c.b16 %v147, %v146
  %v167 = vpack.c.b16 %v149, %v148
  %v168 = vpack.c.b16 %v151, %v150
  %v169 = vpack.c.b16 %v153, %v152
  %v170 = vpack.c.b16 %v155, %v154
  %v171 = vpack.c.b16 %v157, %v156
  %v172 = vpack.c.b16 %v159, %v158
  %v173 = vpack.c.b16 %v161, %v160
  %vm186 = vcmask 523264
  %v188 = vsel %vm186, %v112, 0
  %190 = vmatprep.subr.bf16.mxu0 0
  %191 = vmatpush1.bf16.msra.mxu0 %v162
  %192 = vmatprep.subr.bf16.mxu0 0
  %193 = vmatpush1.bf16.msra.mxu0 %v163
  %194 = vmatprep.subr.bf16.mxu0 0
  %195 = vmatpush1.bf16.msra.mxu0 %v164
  %196 = vmatprep.subr.bf16.mxu0 0
  %197 = vmatpush1.bf16.msra.mxu0 %v165
  %198 = vmatprep.subr.bf16.mxu0 0
  %199 = vmatpush1.bf16.msra.mxu0 %v166
  %200 = vmatprep.subr.bf16.mxu0 0
  %201 = vmatpush1.bf16.msra.mxu0 %v167
  %202 = vmatprep.subr.bf16.mxu0 0
  %203 = vmatpush1.bf16.msra.mxu0 %v168
  %204 = vmatprep.subr.bf16.mxu0 0
  %205 = vmatpush1.bf16.msra.mxu0 %v169
  %206 = vmatprep.subr.bf16.mxu0 0
  %207 = vmatpush1.bf16.msra.mxu0 %v170
  %208 = vmatprep.subr.bf16.mxu0 0
  %209 = vmatpush1.bf16.msra.mxu0 %v171
  %210 = vmatprep.subr.bf16.mxu0 0
  %211 = vmatpush1.bf16.msra.mxu0 %v172
  %212 = vmatprep.subr.bf16.mxu0 0
  %213 = vmatpush1.bf16.msra.mxu0 %v173
  %214 = vmatprep.subr.bf16.mxu0 0
  %215 = vmatpush1.bf16.msra.mxu0 0
  %216 = vmatprep.subr.bf16.mxu0 0
  %217 = vmatpush1.bf16.msra.mxu0 0
  %218 = vmatprep.subr.bf16.mxu0 0
  %219 = vmatpush1.bf16.msra.mxu0 0
  %220 = vmatprep.subr.bf16.mxu0 0
  %221 = vmatpush1.bf16.msra.mxu0 0
  %222 = vmatprep.mubr.bf16.mxu0 %v188
  %223 = vmatmul.mubr.bf16.gmra.mrb[0].mxu0 %v111
  %v224 = vpop.f32.mrb[0].mxu0
  %v225 = vadd.f32 %v103, %v224
  %v226 = vpop.f32.mrb[0].mxu0
  %v227 = vpop.f32.mrb[0].mxu0
  %v228 = vadd.f32 %v104, %v227
  %v229 = vpop.f32.mrb[0].mxu0
  %230 = vdwg.mxu0
  %v231 = vld [vmem:[%s5] sm:$0x1]
  %v232 = vld [vmem:[%s6] sm:$0x1]
  %233 = vadd.xlane.f32.xlu0 %v225
  %v234 = vpop.xlane.xlu0 %233
  %vm235 = vcmask 1041408
  %v236 = vsel %vm235, %v228, 0.0
  %237 = vadd.xlane.f32.xlu0 %v236
  %v238 = vpop.xlane.xlu0 %237
  %v239 = vrcp.pop 128.0
  %v240 = vmul.f32 %v234, %v239
  %v241 = vmul.f32 %v238, %v239
  %v242 = vsub.f32 %v225, %v240
  %v243 = vsub.f32 %v228, %v241
  %v244 = vmul.f32 %v242, %v242
  %v245 = vmul.f32 %v243, %v243
  %246 = vadd.xlane.f32.xlu0 %v244
  %v247 = vpop.xlane.xlu0 %246
  %v248 = vsel %vm235, %v245, 0.0
  %249 = vadd.xlane.f32.xlu0 %v248
  %v250 = vpop.xlane.xlu0 %249
  %v251 = vmul.f32 %v247, %v239
  %v252 = vmul.f32 %v250, %v239
  %v253 = vadd.f32 %v251, 1e-06
  %v254 = vadd.f32 %v252, 1e-06
  %v255 = vrsqrt.pop %v253
  %v256 = vrsqrt.pop %v254
  %v257 = vmul.f32 %v242, %v255
  %v258 = vmul.f32 %v243, %v256
  %v260 = vlaneseq
  %v261 = vshrl.u32 %v260, 7
  %v262 = vsub.s32 0, %v261
  %v263 = vrot.slane %v231, %v262
  %v265 = vmul.f32 %v257, %v263
  %v266 = vmul.f32 %v258, %v263
  %v268 = vlaneseq
  %v269 = vshrl.u32 %v268, 7
  %v270 = vsub.s32 0, %v269
  %v271 = vrot.slane %v232, %v270
  %v273 = vadd.f32 %v265, %v271
  %v274 = vadd.f32 %v266, %v271
  %v275 = vpack.c.bf16 %v274, %v273
  %v276 = vld [vmem:[%s7] sm:$0xff]
  %v277 = vld [vmem:[%s7 + $0x8] sm:$0xf]
  %v278 = vld [vmem:[%s7 + $0xc] sm:$0xff]
  %v279 = vld [vmem:[%s7 + $0x14] sm:$0xf]
  %v280 = vld [vmem:[%s7 + $0x18] sm:$0xff]
  %v281 = vld [vmem:[%s7 + $0x20] sm:$0xf]
  %v282 = vld [vmem:[%s7 + $0x24] sm:$0xff]
  %v283 = vld [vmem:[%s7 + $0x2c] sm:$0xf]
  %v284 = vld [vmem:[%s7 + $0x30] sm:$0xff]
  %v285 = vld [vmem:[%s7 + $0x38] sm:$0xf]
  %v286 = vld [vmem:[%s7 + $0x3c] sm:$0xff]
  %v287 = vld [vmem:[%s7 + $0x44] sm:$0xf]
  %v288 = vld [vmem:[%s7 + $0x48] sm:$0xff]
  %v289 = vld [vmem:[%s7 + $0x50] sm:$0xf]
  %v290 = vld [vmem:[%s7 + $0x54] sm:$0xff]
  %v291 = vld [vmem:[%s7 + $0x5c] sm:$0xf]
  %v292 = vld [vmem:[%s7 + $0x60] sm:$0xff]
  %v293 = vld [vmem:[%s7 + $0x68] sm:$0xf]
  %v294 = vld [vmem:[%s7 + $0x6c] sm:$0xff]
  %v295 = vld [vmem:[%s7 + $0x74] sm:$0xf]
  %v296 = vld [vmem:[%s7 + $0x78] sm:$0xff]
  %v297 = vld [vmem:[%s7 + $0x80] sm:$0xf]
  %v298 = vld [vmem:[%s7 + $0x84] sm:$0xff]
  %v299 = vld [vmem:[%s7 + $0x8c] sm:$0xf]
  %v300 = vld [vmem:[%s7 + $0x90] sm:$0xff]
  %v301 = vld [vmem:[%s7 + $0x98] sm:$0xf]
  %v302 = vld [vmem:[%s7 + $0x9c] sm:$0xff]
  %v303 = vld [vmem:[%s7 + $0xa4] sm:$0xf]
  %v304 = vld [vmem:[%s7 + $0xa8] sm:$0xff]
  %v305 = vld [vmem:[%s7 + $0xb0] sm:$0xf]
  %v306 = vld [vmem:[%s7 + $0xb4] sm:$0xff]
  %v307 = vld [vmem:[%s7 + $0xbc] sm:$0xf]
  %v308 = vld [vmem:[%s8] sm:$0x7]
  %v310 = vlaneseq
  %v311 = vshrl.u32 %v310, 7
  %v312 = vsub.s32 0, %v311
  %v313 = vrot.slane %v308, %v312
  %v314 = vlaneseq
  %v315 = vshrl.u32 %v314, 7
  %v316 = vsub.s32 1, %v315
  %v317 = vrot.slane %v308, %v316
  %v318 = vlaneseq
  %v319 = vshrl.u32 %v318, 7
  %v320 = vsub.s32 2, %v319
  %v321 = vrot.slane %v308, %v320
  %v357 = vunpack.c.l.b16 %v276
  %v358 = vunpack.c.h.b16 %v276
  %v359 = vunpack.c.l.b16 %v277
  %v360 = vunpack.c.l.b16 %v278
  %v361 = vunpack.c.h.b16 %v278
  %v362 = vunpack.c.l.b16 %v279
  %v363 = vunpack.c.l.b16 %v280
  %v364 = vunpack.c.h.b16 %v280
  %v365 = vunpack.c.l.b16 %v281
  %v366 = vunpack.c.l.b16 %v282
  %v367 = vunpack.c.h.b16 %v282
  %v368 = vunpack.c.l.b16 %v283
  %v369 = vunpack.c.l.b16 %v284
  %v370 = vunpack.c.h.b16 %v284
  %v371 = vunpack.c.l.b16 %v285
  %v372 = vunpack.c.l.b16 %v286
  %v373 = vunpack.c.h.b16 %v286
  %v374 = vunpack.c.l.b16 %v287
  %v375 = vunpack.c.l.b16 %v288
  %v376 = vunpack.c.h.b16 %v288
  %v377 = vunpack.c.l.b16 %v289
  %v378 = vunpack.c.l.b16 %v290
  %v379 = vunpack.c.h.b16 %v290
  %v380 = vunpack.c.l.b16 %v291
  %v381 = vunpack.c.l.b16 %v292
  %v382 = vunpack.c.h.b16 %v292
  %v383 = vunpack.c.l.b16 %v293
  %v384 = vunpack.c.l.b16 %v294
  %v385 = vunpack.c.h.b16 %v294
  %v386 = vunpack.c.l.b16 %v295
  %v387 = vunpack.c.l.b16 %v296
  %v388 = vunpack.c.h.b16 %v296
  %v389 = vunpack.c.l.b16 %v297
  %v390 = vunpack.c.l.b16 %v298
  %v391 = vunpack.c.h.b16 %v298
  %v392 = vunpack.c.l.b16 %v299
  %v393 = vunpack.c.l.b16 %v300
  %v394 = vunpack.c.h.b16 %v300
  %v395 = vunpack.c.l.b16 %v301
  %v396 = vunpack.c.l.b16 %v302
  %v397 = vunpack.c.h.b16 %v302
  %v398 = vunpack.c.l.b16 %v303
  %v399 = vunpack.c.l.b16 %v304
  %v400 = vunpack.c.h.b16 %v304
  %v401 = vunpack.c.l.b16 %v305
  %v402 = vunpack.c.l.b16 %v306
  %v403 = vunpack.c.h.b16 %v306
  %v404 = vunpack.c.l.b16 %v307
  %v405 = vpack.c.b16 %v360, %v357
  %v406 = vpack.c.b16 %v361, %v358
  %v407 = vpack.c.b16 %v362, %v359
  %v408 = vpack.c.b16 %v366, %v363
  %v409 = vpack.c.b16 %v367, %v364
  %v410 = vpack.c.b16 %v368, %v365
  %v411 = vpack.c.b16 %v372, %v369
  %v412 = vpack.c.b16 %v373, %v370
  %v413 = vpack.c.b16 %v374, %v371
  %v414 = vpack.c.b16 %v378, %v375
  %v415 = vpack.c.b16 %v379, %v376
  %v416 = vpack.c.b16 %v380, %v377
  %v417 = vpack.c.b16 %v384, %v381
  %v418 = vpack.c.b16 %v385, %v382
  %v419 = vpack.c.b16 %v386, %v383
  %v420 = vpack.c.b16 %v390, %v387
  %v421 = vpack.c.b16 %v391, %v388
  %v422 = vpack.c.b16 %v392, %v389
  %v423 = vpack.c.b16 %v396, %v393
  %v424 = vpack.c.b16 %v397, %v394
  %v425 = vpack.c.b16 %v398, %v395
  %v426 = vpack.c.b16 %v402, %v399
  %v427 = vpack.c.b16 %v403, %v400
  %v428 = vpack.c.b16 %v404, %v401
  %453 = vmatprep.subr.bf16.mxu0 %v406
  %454 = vmatpush1.bf16.msra.mxu0 %v405
  %455 = vmatprep.subr.bf16.mxu0 %v409
  %456 = vmatpush1.bf16.msra.mxu0 %v408
  %457 = vmatprep.subr.bf16.mxu0 %v412
  %458 = vmatpush1.bf16.msra.mxu0 %v411
  %459 = vmatprep.subr.bf16.mxu0 %v415
  %460 = vmatpush1.bf16.msra.mxu0 %v414
  %461 = vmatprep.subr.bf16.mxu0 %v418
  %462 = vmatpush1.bf16.msra.mxu0 %v417
  %463 = vmatprep.subr.bf16.mxu0 %v421
  %464 = vmatpush1.bf16.msra.mxu0 %v420
  %465 = vmatprep.subr.bf16.mxu0 %v424
  %466 = vmatpush1.bf16.msra.mxu0 %v423
  %467 = vmatprep.subr.bf16.mxu0 %v427
  %468 = vmatpush1.bf16.msra.mxu0 %v426
  %469 = vmatprep.subr.bf16.mxu0 0
  %470 = vmatpush1.bf16.msra.mxu0 0
  %471 = vmatprep.subr.bf16.mxu0 0
  %472 = vmatpush1.bf16.msra.mxu0 0
  %473 = vmatprep.subr.bf16.mxu0 0
  %474 = vmatpush1.bf16.msra.mxu0 0
  %475 = vmatprep.subr.bf16.mxu0 0
  %476 = vmatpush1.bf16.msra.mxu0 0
  %477 = vmatprep.subr.bf16.mxu0 0
  %478 = vmatpush1.bf16.msra.mxu0 0
  %479 = vmatprep.subr.bf16.mxu0 0
  %480 = vmatpush1.bf16.msra.mxu0 0
  %481 = vmatprep.subr.bf16.mxu0 0
  %482 = vmatpush1.bf16.msra.mxu0 0
  %483 = vmatprep.subr.bf16.mxu0 0
  %484 = vmatpush1.bf16.msra.mxu0 0
  %485 = vmatprep.mubr.bf16.mxu0 0
  %486 = vmatmul.mubr.bf16.gmra.mrb[0].mxu0 %v275
  %v487 = vpop.f32.mrb[0].mxu0
  %v488 = vadd.f32 %v313, %v487
  %v489 = vpop.f32.mrb[0].mxu0
  %v490 = vadd.f32 %v317, %v489
  %v491 = vpop.f32.mrb[0].mxu0
  %v492 = vadd.f32 %v313, %v491
  %v493 = vpop.f32.mrb[0].mxu0
  %v494 = vadd.f32 %v317, %v493
  %495 = vdwg.mxu0
  %496 = vmatprep.subr.bf16.mxu0 0
  %497 = vmatpush1.bf16.msra.mxu0 %v407
  %498 = vmatprep.subr.bf16.mxu0 0
  %499 = vmatpush1.bf16.msra.mxu0 %v410
  %500 = vmatprep.subr.bf16.mxu0 0
  %501 = vmatpush1.bf16.msra.mxu0 %v413
  %502 = vmatprep.subr.bf16.mxu0 0
  %503 = vmatpush1.bf16.msra.mxu0 %v416
  %504 = vmatprep.subr.bf16.mxu0 0
  %505 = vmatpush1.bf16.msra.mxu0 %v419
  %506 = vmatprep.subr.bf16.mxu0 0
  %507 = vmatpush1.bf16.msra.mxu0 %v422
  %508 = vmatprep.subr.bf16.mxu0 0
  %509 = vmatpush1.bf16.msra.mxu0 %v425
  %510 = vmatprep.subr.bf16.mxu0 0
  %511 = vmatpush1.bf16.msra.mxu0 %v428
  %512 = vmatprep.subr.bf16.mxu0 0
  %513 = vmatpush1.bf16.msra.mxu0 0
  %514 = vmatprep.subr.bf16.mxu0 0
  %515 = vmatpush1.bf16.msra.mxu0 0
  %516 = vmatprep.subr.bf16.mxu0 0
  %517 = vmatpush1.bf16.msra.mxu0 0
  %518 = vmatprep.subr.bf16.mxu0 0
  %519 = vmatpush1.bf16.msra.mxu0 0
  %520 = vmatprep.subr.bf16.mxu0 0
  %521 = vmatpush1.bf16.msra.mxu0 0
  %522 = vmatprep.subr.bf16.mxu0 0
  %523 = vmatpush1.bf16.msra.mxu0 0
  %524 = vmatprep.subr.bf16.mxu0 0
  %525 = vmatpush1.bf16.msra.mxu0 0
  %526 = vmatprep.subr.bf16.mxu0 0
  %527 = vmatpush1.bf16.msra.mxu0 0
  %528 = vmatprep.mubr.bf16.mxu0 0
  %529 = vmatmul.mubr.bf16.gmra.mrb[0].mxu0 %v275
  %v530 = vpop.f32.mrb[0].mxu0
  %v531 = vadd.f32 %v321, %v530
  %v532 = vpop.f32.mrb[0].mxu0
  %v533 = vpop.f32.mrb[0].mxu0
  %v534 = vadd.f32 %v321, %v533
  %v535 = vpop.f32.mrb[0].mxu0
  %536 = vdwg.mxu0
  %v537 = vld [vmem:[%s9] sm:$0xf]
  %v538 = vld [vmem:[%s9 + $0x4] sm:$0xf]
  %v539 = vld [vmem:[%s9 + $0x8] sm:$0xf]
  %v540 = vld [vmem:[%s9 + $0xc] sm:$0xf]
  %v541 = vld [vmem:[%s9 + $0x10] sm:$0xf]
  %v542 = vld [vmem:[%s9 + $0x14] sm:$0xf]
  %v543 = vld [vmem:[%s9 + $0x18] sm:$0xf]
  %v544 = vld [vmem:[%s9 + $0x1c] sm:$0xf]
  %v545 = vld [vmem:[%s9 + $0x20] sm:$0xf]
  %v546 = vld [vmem:[%s9 + $0x24] sm:$0xf]
  %v547 = vld [vmem:[%s9 + $0x28] sm:$0xf]
  %v548 = vld [vmem:[%s9 + $0x2c] sm:$0xf]
  %v549 = vld [vmem:[%s9 + $0x30] sm:$0xf]
  %v550 = vld [vmem:[%s9 + $0x34] sm:$0xf]
  %v551 = vld [vmem:[%s9 + $0x38] sm:$0xf]
  %v552 = vld [vmem:[%s9 + $0x3c] sm:$0xf]
  %v553 = vld [vmem:[%s10] sm:$0x1]
  %v555 = vlaneseq
  %v556 = vshrl.u32 %v555, 7
  %v557 = vsub.s32 0, %v556
  %v558 = vrot.slane %v553, %v557
  %v560 = vadd.f32 %v225, %v558
  %v561 = vadd.f32 %v228, %v558
  %v562 = vpack.c.bf16 %v492, %v488
  %v563 = vpack.c.bf16 %v494, %v490
  %v564 = vpack.c.bf16 %v534, %v531
  %vm565 = vcmask 261120
  %v567 = vsel %vm565, %v562, 0
  %v570 = vsel %vm565, %v563, 0
  %572 = vmatprep.subr.bf16.mxu0 0
  %573 = vmatpush1.bf16.xpose.msra.mxu0 %v570
  %574 = vmatprep.subr.bf16.mxu0 0
  %575 = vmatpush1.bf16.xpose.msra.mxu0 0
  %576 = vmatprep.subr.bf16.mxu0 0
  %577 = vmatpush1.bf16.xpose.msra.mxu0 0
  %578 = vmatprep.subr.bf16.mxu0 0
  %579 = vmatpush1.bf16.xpose.msra.mxu0 0
  %580 = vmatprep.subr.bf16.mxu0 0
  %581 = vmatpush1.bf16.xpose.msra.mxu0 0
  %582 = vmatprep.subr.bf16.mxu0 0
  %583 = vmatpush1.bf16.xpose.msra.mxu0 0
  %584 = vmatprep.subr.bf16.mxu0 0
  %585 = vmatpush1.bf16.xpose.msra.mxu0 0
  %586 = vmatprep.subr.bf16.mxu0 0
  %587 = vmatpush1.bf16.xpose.msra.mxu0 0
  %588 = vmatprep.subr.bf16.mxu0 0
  %589 = vmatpush1.bf16.xpose.msra.mxu0 0
  %590 = vmatprep.subr.bf16.mxu0 0
  %591 = vmatpush1.bf16.xpose.msra.mxu0 0
  %592 = vmatprep.subr.bf16.mxu0 0
  %593 = vmatpush1.bf16.xpose.msra.mxu0 0
  %594 = vmatprep.subr.bf16.mxu0 0
  %595 = vmatpush1.bf16.xpose.msra.mxu0 0
  %596 = vmatprep.subr.bf16.mxu0 0
  %597 = vmatpush1.bf16.xpose.msra.mxu0 0
  %598 = vmatprep.subr.bf16.mxu0 0
  %599 = vmatpush1.bf16.xpose.msra.mxu0 0
  %600 = vmatprep.subr.bf16.mxu0 0
  %601 = vmatpush1.bf16.xpose.msra.mxu0 0
  %602 = vmatprep.subr.bf16.mxu0 0
  %603 = vmatpush1.bf16.xpose.msra.mxu0 0
  %604 = vmatprep.mubr.bf16.mxu0 0
  %605 = vmatmul.mubr.bf16.gmra.mrb[0].mxu0 %v567
  %v606 = vpop.f32.mrb[0].mxu0
  %v607 = vadd.f32 0.0, %v606
  %v608 = vpop.f32.mrb[0].mxu0
  %v609 = vpop.f32.mrb[0].mxu0
  %v610 = vadd.f32 0.0, %v609
  %v611 = vpop.f32.mrb[0].mxu0
  %612 = vdwg.mxu0
  %v613 = vmul.f32 %v607, 0.17677669
  %v614 = vmul.f32 %v610, 0.17677669
  %v615 = vadd.f32 %v613, %v75
  %v616 = vadd.f32 %v614, %v76
  %vm617 = vcmask 80896
  %v618 = vsel %vm617, %v615, -inf
  %619 = vmax.xlane.f32.xlu0 %v618
  %v620 = vpop.xlane.xlu0 %619
  %vm621 = vcmask 74752
  %v622 = vsel %vm621, %v616, -inf
  %623 = vmax.xlane.f32.xlu0 %v622
  %v624 = vpop.xlane.xlu0 %623
  %v625 = vsub.f32 %v615, %v620
  %v626 = vsub.f32 %v616, %v624
  %v627 = vmul.f32 %v625, 1.442695
  %v628 = vpow.pop %v627
  %v629 = vmul.f32 %v626, 1.442695
  %v630 = vpow.pop %v629
  %v631 = vsel %vm617, %v628, 0.0
  %632 = vadd.xlane.f32.xlu0 %v631
  %v633 = vpop.xlane.xlu0 %632
  %v634 = vsel %vm621, %v630, 0.0
  %635 = vadd.xlane.f32.xlu0 %v634
  %v636 = vpop.xlane.xlu0 %635
  %v637 = vpack.c.bf16 %v630, %v628
  %v639 = vsel %vm617, %v637, 0
  %vm641 = vcmask 1044480
  %v643 = vsel %vm641, %v564, 0
  %645 = vmatprep.subr.bf16.mxu0 0
  %646 = vmatpush1.bf16.msra.mxu0 %v643
  %647 = vmatprep.subr.bf16.mxu0 0
  %648 = vmatpush1.bf16.msra.mxu0 0
  %649 = vmatprep.subr.bf16.mxu0 0
  %650 = vmatpush1.bf16.msra.mxu0 0
  %651 = vmatprep.subr.bf16.mxu0 0
  %652 = vmatpush1.bf16.msra.mxu0 0
  %653 = vmatprep.subr.bf16.mxu0 0
  %654 = vmatpush1.bf16.msra.mxu0 0
  %655 = vmatprep.subr.bf16.mxu0 0
  %656 = vmatpush1.bf16.msra.mxu0 0
  %657 = vmatprep.subr.bf16.mxu0 0
  %658 = vmatpush1.bf16.msra.mxu0 0
  %659 = vmatprep.subr.bf16.mxu0 0
  %660 = vmatpush1.bf16.msra.mxu0 0
  %661 = vmatprep.subr.bf16.mxu0 0
  %662 = vmatpush1.bf16.msra.mxu0 0
  %663 = vmatprep.subr.bf16.mxu0 0
  %664 = vmatpush1.bf16.msra.mxu0 0
  %665 = vmatprep.subr.bf16.mxu0 0
  %666 = vmatpush1.bf16.msra.mxu0 0
  %667 = vmatprep.subr.bf16.mxu0 0
  %668 = vmatpush1.bf16.msra.mxu0 0
  %669 = vmatprep.subr.bf16.mxu0 0
  %670 = vmatpush1.bf16.msra.mxu0 0
  %671 = vmatprep.subr.bf16.mxu0 0
  %672 = vmatpush1.bf16.msra.mxu0 0
  %673 = vmatprep.subr.bf16.mxu0 0
  %674 = vmatpush1.bf16.msra.mxu0 0
  %675 = vmatprep.subr.bf16.mxu0 0
  %676 = vmatpush1.bf16.msra.mxu0 0
  %677 = vmatprep.mubr.bf16.mxu0 0
  %678 = vmatmul.mubr.bf16.gmra.mrb[0].mxu0 %v639
  %v679 = vpop.f32.mrb[0].mxu0
  %v680 = vadd.f32 0.0, %v679
  %v681 = vpop.f32.mrb[0].mxu0
  %v682 = vpop.f32.mrb[0].mxu0
  %v683 = vadd.f32 0.0, %v682
  %v684 = vpop.f32.mrb[0].mxu0
  %685 = vdwg.mxu0
  %v686 = vrcp.pop %v633
  %v687 = vmul.f32 %v680, %v686
  %v688 = vrcp.pop %v636
  %v689 = vmul.f32 %v683, %v688
  %v690 = vpack.c.bf16 %v689, %v687
  %v695 = vunpack.c.l.b16 %v537
  %v696 = vunpack.c.l.b16 %v538
  %v697 = vunpack.c.l.b16 %v539
  %v698 = vunpack.c.l.b16 %v540
  %v699 = vpack.c.b16 %v696, %v695
  %v700 = vpack.c.b16 %v698, %v697
  %v704 = vsel %vm565, %v690, 0
  %706 = vmatprep.subr.bf16.mxu0 0
  %707 = vmatpush1.bf16.msra.mxu0 %v699
  %708 = vmatprep.subr.bf16.mxu0 0
  %709 = vmatpush1.bf16.msra.mxu0 %v700
  %710 = vmatprep.subr.bf16.mxu0 0
  %711 = vmatpush1.bf16.msra.mxu0 0
  %712 = vmatprep.subr.bf16.mxu0 0
  %713 = vmatpush1.bf16.msra.mxu0 0
  %714 = vmatprep.subr.bf16.mxu0 0
  %715 = vmatpush1.bf16.msra.mxu0 0
  %716 = vmatprep.subr.bf16.mxu0 0
  %717 = vmatpush1.bf16.msra.mxu0 0
  %718 = vmatprep.subr.bf16.mxu0 0
  %719 = vmatpush1.bf16.msra.mxu0 0
  %720 = vmatprep.subr.bf16.mxu0 0
  %721 = vmatpush1.bf16.msra.mxu0 0
  %722 = vmatprep.subr.bf16.mxu0 0
  %723 = vmatpush1.bf16.msra.mxu0 0
  %724 = vmatprep.subr.bf16.mxu0 0
  %725 = vmatpush1.bf16.msra.mxu0 0
  %726 = vmatprep.subr.bf16.mxu0 0
  %727 = vmatpush1.bf16.msra.mxu0 0
  %728 = vmatprep.subr.bf16.mxu0 0
  %729 = vmatpush1.bf16.msra.mxu0 0
  %730 = vmatprep.subr.bf16.mxu0 0
  %731 = vmatpush1.bf16.msra.mxu0 0
  %732 = vmatprep.subr.bf16.mxu0 0
  %733 = vmatpush1.bf16.msra.mxu0 0
  %734 = vmatprep.subr.bf16.mxu0 0
  %735 = vmatpush1.bf16.msra.mxu0 0
  %736 = vmatprep.subr.bf16.mxu0 0
  %737 = vmatpush1.bf16.msra.mxu0 0
  %738 = vmatprep.mubr.bf16.mxu0 0
  %739 = vmatmul.mubr.bf16.gmra.mrb[0].mxu0 %v704
  %v740 = vpop.f32.mrb[0].mxu0
  %v741 = vadd.f32 0.0, %v740
  %v742 = vpop.f32.mrb[0].mxu0
  %v743 = vpop.f32.mrb[0].mxu0
  %v744 = vadd.f32 0.0, %v743
  %v745 = vpop.f32.mrb[0].mxu0
  %746 = vdwg.mxu0
  %v747 = vadd.f32 %v560, %v741
  %v748 = vadd.f32 %v561, %v744
  %750 = vrot.lane.b32.xlu0 %v562, 96
  %v751 = vpop.permute.xlu0 %750
  %753 = vrot.lane.b32.xlu0 %v563, 96
  %v754 = vpop.permute.xlu0 %753
  %v756 = vsel %vm565, %v751, 0
  %v759 = vsel %vm565, %v754, 0
  %761 = vmatprep.subr.bf16.mxu0 0
  %762 = vmatpush1.bf16.xpose.msra.mxu0 %v759
  %763 = vmatprep.subr.bf16.mxu0 0
  %764 = vmatpush1.bf16.xpose.msra.mxu0 0
  %765 = vmatprep.subr.bf16.mxu0 0
  %766 = vmatpush1.bf16.xpose.msra.mxu0 0
  %767 = vmatprep.subr.bf16.mxu0 0
  %768 = vmatpush1.bf16.xpose.msra.mxu0 0
  %769 = vmatprep.subr.bf16.mxu0 0
  %770 = vmatpush1.bf16.xpose.msra.mxu0 0
  %771 = vmatprep.subr.bf16.mxu0 0
  %772 = vmatpush1.bf16.xpose.msra.mxu0 0
  %773 = vmatprep.subr.bf16.mxu0 0
  %774 = vmatpush1.bf16.xpose.msra.mxu0 0
  %775 = vmatprep.subr.bf16.mxu0 0
  %776 = vmatpush1.bf16.xpose.msra.mxu0 0
  %777 = vmatprep.subr.bf16.mxu0 0
  %778 = vmatpush1.bf16.xpose.msra.mxu0 0
  %779 = vmatprep.subr.bf16.mxu0 0
  %780 = vmatpush1.bf16.xpose.msra.mxu0 0
  %781 = vmatprep.subr.bf16.mxu0 0
  %782 = vmatpush1.bf16.xpose.msra.mxu0 0
  %783 = vmatprep.subr.bf16.mxu0 0
  %784 = vmatpush1.bf16.xpose.msra.mxu0 0
  %785 = vmatprep.subr.bf16.mxu0 0
  %786 = vmatpush1.bf16.xpose.msra.mxu0 0
  %787 = vmatprep.subr.bf16.mxu0 0
  %788 = vmatpush1.bf16.xpose.msra.mxu0 0
  %789 = vmatprep.subr.bf16.mxu0 0
  %790 = vmatpush1.bf16.xpose.msra.mxu0 0
  %791 = vmatprep.subr.bf16.mxu0 0
  %792 = vmatpush1.bf16.xpose.msra.mxu0 0
  %793 = vmatprep.mubr.bf16.mxu0 0
  %794 = vmatmul.mubr.bf16.gmra.mrb[0].mxu0 %v756
  %v795 = vpop.f32.mrb[0].mxu0
  %v796 = vadd.f32 0.0, %v795
  %v797 = vpop.f32.mrb[0].mxu0
  %v798 = vpop.f32.mrb[0].mxu0
  %v799 = vadd.f32 0.0, %v798
  %v800 = vpop.f32.mrb[0].mxu0
  %801 = vdwg.mxu0
  %v802 = vmul.f32 %v796, 0.17677669
  %v803 = vmul.f32 %v799, 0.17677669
  %v804 = vadd.f32 %v802, %v75
  %v805 = vadd.f32 %v803, %v76
  %v806 = vsel %vm617, %v804, -inf
  %807 = vmax.xlane.f32.xlu0 %v806
  %v808 = vpop.xlane.xlu0 %807
  %v809 = vsel %vm621, %v805, -inf
  %810 = vmax.xlane.f32.xlu0 %v809
  %v811 = vpop.xlane.xlu0 %810
  %v812 = vsub.f32 %v804, %v808
  %v813 = vsub.f32 %v805, %v811
  %v814 = vmul.f32 %v812, 1.442695
  %v815 = vpow.pop %v814
  %v816 = vmul.f32 %v813, 1.442695
  %v817 = vpow.pop %v816
  %v818 = vsel %vm617, %v815, 0.0
  %819 = vadd.xlane.f32.xlu0 %v818
  %v820 = vpop.xlane.xlu0 %819
  %v821 = vsel %vm621, %v817, 0.0
  %822 = vadd.xlane.f32.xlu0 %v821
  %v823 = vpop.xlane.xlu0 %822
  %v824 = vpack.c.bf16 %v817, %v815
  %826 = vrot.lane.b32.xlu0 %v564, 96
  %v827 = vpop.permute.xlu0 %826
  %v829 = vsel %vm617, %v824, 0
  %v832 = vsel %vm641, %v827, 0
  %834 = vmatprep.subr.bf16.mxu0 0
  %835 = vmatpush1.bf16.msra.mxu0 %v832
  %836 = vmatprep.subr.bf16.mxu0 0
  %837 = vmatpush1.bf16.msra.mxu0 0
  %838 = vmatprep.subr.bf16.mxu0 0
  %839 = vmatpush1.bf16.msra.mxu0 0
  %840 = vmatprep.subr.bf16.mxu0 0
  %841 = vmatpush1.bf16.msra.mxu0 0
  %842 = vmatprep.subr.bf16.mxu0 0
  %843 = vmatpush1.bf16.msra.mxu0 0
  %844 = vmatprep.subr.bf16.mxu0 0
  %845 = vmatpush1.bf16.msra.mxu0 0
  %846 = vmatprep.subr.bf16.mxu0 0
  %847 = vmatpush1.bf16.msra.mxu0 0
  %848 = vmatprep.subr.bf16.mxu0 0
  %849 = vmatpush1.bf16.msra.mxu0 0
  %850 = vmatprep.subr.bf16.mxu0 0
  %851 = vmatpush1.bf16.msra.mxu0 0
  %852 = vmatprep.subr.bf16.mxu0 0
  %853 = vmatpush1.bf16.msra.mxu0 0
  %854 = vmatprep.subr.bf16.mxu0 0
  %855 = vmatpush1.bf16.msra.mxu0 0
  %856 = vmatprep.subr.bf16.mxu0 0
  %857 = vmatpush1.bf16.msra.mxu0 0
  %858 = vmatprep.subr.bf16.mxu0 0
  %859 = vmatpush1.bf16.msra.mxu0 0
  %860 = vmatprep.subr.bf16.mxu0 0
  %861 = vmatpush1.bf16.msra.mxu0 0
  %862 = vmatprep.subr.bf16.mxu0 0
  %863 = vmatpush1.bf16.msra.mxu0 0
  %864 = vmatprep.subr.bf16.mxu0 0
  %865 = vmatpush1.bf16.msra.mxu0 0
  %866 = vmatprep.mubr.bf16.mxu0 0
  %867 = vmatmul.mubr.bf16.gmra.mrb[0].mxu0 %v829
  %v868 = vpop.f32.mrb[0].mxu0
  %v869 = vadd.f32 0.0, %v868
  %v870 = vpop.f32.mrb[0].mxu0
  %v871 = vpop.f32.mrb[0].mxu0
  %v872 = vadd.f32 0.0, %v871
  %v873 = vpop.f32.mrb[0].mxu0
  %874 = vdwg.mxu0
  %v875 = vrcp.pop %v820
  %v876 = vmul.f32 %v869, %v875
  %v877 = vrcp.pop %v823
  %v878 = vmul.f32 %v872, %v877
  %v879 = vpack.c.bf16 %v878, %v876
  %v884 = vunpack.c.l.b16 %v541
  %v885 = vunpack.c.l.b16 %v542
  %v886 = vunpack.c.l.b16 %v543
  %v887 = vunpack.c.l.b16 %v544
  %v888 = vpack.c.b16 %v885, %v884
  %v889 = vpack.c.b16 %v887, %v886
  %v893 = vsel %vm565, %v879, 0
  %895 = vmatprep.subr.bf16.mxu0 0
  %896 = vmatpush1.bf16.msra.mxu0 %v888
  %897 = vmatprep.subr.bf16.mxu0 0
  %898 = vmatpush1.bf16.msra.mxu0 %v889
  %899 = vmatprep.subr.bf16.mxu0 0
  %900 = vmatpush1.bf16.msra.mxu0 0
  %901 = vmatprep.subr.bf16.mxu0 0
  %902 = vmatpush1.bf16.msra.mxu0 0
  %903 = vmatprep.subr.bf16.mxu0 0
  %904 = vmatpush1.bf16.msra.mxu0 0
  %905 = vmatprep.subr.bf16.mxu0 0
  %906 = vmatpush1.bf16.msra.mxu0 0
  %907 = vmatprep.subr.bf16.mxu0 0
  %908 = vmatpush1.bf16.msra.mxu0 0
  %909 = vmatprep.subr.bf16.mxu0 0
  %910 = vmatpush1.bf16.msra.mxu0 0
  %911 = vmatprep.subr.bf16.mxu0 0
  %912 = vmatpush1.bf16.msra.mxu0 0
  %913 = vmatprep.subr.bf16.mxu0 0
  %914 = vmatpush1.bf16.msra.mxu0 0
  %915 = vmatprep.subr.bf16.mxu0 0
  %916 = vmatpush1.bf16.msra.mxu0 0
  %917 = vmatprep.subr.bf16.mxu0 0
  %918 = vmatpush1.bf16.msra.mxu0 0
  %919 = vmatprep.subr.bf16.mxu0 0
  %920 = vmatpush1.bf16.msra.mxu0 0
  %921 = vmatprep.subr.bf16.mxu0 0
  %922 = vmatpush1.bf16.msra.mxu0 0
  %923 = vmatprep.subr.bf16.mxu0 0
  %924 = vmatpush1.bf16.msra.mxu0 0
  %925 = vmatprep.subr.bf16.mxu0 0
  %926 = vmatpush1.bf16.msra.mxu0 0
  %927 = vmatprep.mubr.bf16.mxu0 0
  %928 = vmatmul.mubr.bf16.gmra.mrb[0].mxu0 %v893
  %v929 = vpop.f32.mrb[0].mxu0
  %v930 = vadd.f32 0.0, %v929
  %v931 = vpop.f32.mrb[0].mxu0
  %v932 = vpop.f32.mrb[0].mxu0
  %v933 = vadd.f32 0.0, %v932
  %v934 = vpop.f32.mrb[0].mxu0
  %935 = vdwg.mxu0
  %v936 = vadd.f32 %v747, %v930
  %v937 = vadd.f32 %v748, %v933
  %938 = vrot.lane.b32.xlu0 %v562, 64
  %v939 = vpop.permute.xlu0 %938
  %940 = vrot.lane.b32.xlu0 %v563, 64
  %v941 = vpop.permute.xlu0 %940
  %v943 = vsel %vm565, %v939, 0
  %v946 = vsel %vm565, %v941, 0
  %948 = vmatprep.subr.bf16.mxu0 0
  %949 = vmatpush1.bf16.xpose.msra.mxu0 %v946
  %950 = vmatprep.subr.bf16.mxu0 0
  %951 = vmatpush1.bf16.xpose.msra.mxu0 0
  %952 = vmatprep.subr.bf16.mxu0 0
  %953 = vmatpush1.bf16.xpose.msra.mxu0 0
  %954 = vmatprep.subr.bf16.mxu0 0
  %955 = vmatpush1.bf16.xpose.msra.mxu0 0
  %956 = vmatprep.subr.bf16.mxu0 0
  %957 = vmatpush1.bf16.xpose.msra.mxu0 0
  %958 = vmatprep.subr.bf16.mxu0 0
  %959 = vmatpush1.bf16.xpose.msra.mxu0 0
  %960 = vmatprep.subr.bf16.mxu0 0
  %961 = vmatpush1.bf16.xpose.msra.mxu0 0
  %962 = vmatprep.subr.bf16.mxu0 0
  %963 = vmatpush1.bf16.xpose.msra.mxu0 0
  %964 = vmatprep.subr.bf16.mxu0 0
  %965 = vmatpush1.bf16.xpose.msra.mxu0 0
  %966 = vmatprep.subr.bf16.mxu0 0
  %967 = vmatpush1.bf16.xpose.msra.mxu0 0
  %968 = vmatprep.subr.bf16.mxu0 0
  %969 = vmatpush1.bf16.xpose.msra.mxu0 0
  %970 = vmatprep.subr.bf16.mxu0 0
  %971 = vmatpush1.bf16.xpose.msra.mxu0 0
  %972 = vmatprep.subr.bf16.mxu0 0
  %973 = vmatpush1.bf16.xpose.msra.mxu0 0
  %974 = vmatprep.subr.bf16.mxu0 0
  %975 = vmatpush1.bf16.xpose.msra.mxu0 0
  %976 = vmatprep.subr.bf16.mxu0 0
  %977 = vmatpush1.bf16.xpose.msra.mxu0 0
  %978 = vmatprep.subr.bf16.mxu0 0
  %979 = vmatpush1.bf16.xpose.msra.mxu0 0
  %980 = vmatprep.mubr.bf16.mxu0 0
  %981 = vmatmul.mubr.bf16.gmra.mrb[0].mxu0 %v943
  %v982 = vpop.f32.mrb[0].mxu0
  %v983 = vadd.f32 0.0, %v982
  %v984 = vpop.f32.mrb[0].mxu0
  %v985 = vpop.f32.mrb[0].mxu0
  %v986 = vadd.f32 0.0, %v985
  %v987 = vpop.f32.mrb[0].mxu0
  %988 = vdwg.mxu0
  %v989 = vmul.f32 %v983, 0.17677669
  %v990 = vmul.f32 %v986, 0.17677669
  %v991 = vadd.f32 %v989, %v75
  %v992 = vadd.f32 %v990, %v76
  %v993 = vsel %vm617, %v991, -inf
  %994 = vmax.xlane.f32.xlu0 %v993
  %v995 = vpop.xlane.xlu0 %994
  %v996 = vsel %vm621, %v992, -inf
  %997 = vmax.xlane.f32.xlu0 %v996
  %v998 = vpop.xlane.xlu0 %997
  %v999 = vsub.f32 %v991, %v995
  %v1000 = vsub.f32 %v992, %v998
  %v1001 = vmul.f32 %v999, 1.442695
  %v1002 = vpow.pop %v1001
  %v1003 = vmul.f32 %v1000, 1.442695
  %v1004 = vpow.pop %v1003
  %v1005 = vsel %vm617, %v1002, 0.0
  %1006 = vadd.xlane.f32.xlu0 %v1005
  %v1007 = vpop.xlane.xlu0 %1006
  %v1008 = vsel %vm621, %v1004, 0.0
  %1009 = vadd.xlane.f32.xlu0 %v1008
  %v1010 = vpop.xlane.xlu0 %1009
  %v1011 = vpack.c.bf16 %v1004, %v1002
  %1012 = vrot.lane.b32.xlu0 %v564, 64
  %v1013 = vpop.permute.xlu0 %1012
  %v1015 = vsel %vm617, %v1011, 0
  %v1018 = vsel %vm641, %v1013, 0
  %1020 = vmatprep.subr.bf16.mxu0 0
  %1021 = vmatpush1.bf16.msra.mxu0 %v1018
  %1022 = vmatprep.subr.bf16.mxu0 0
  %1023 = vmatpush1.bf16.msra.mxu0 0
  %1024 = vmatprep.subr.bf16.mxu0 0
  %1025 = vmatpush1.bf16.msra.mxu0 0
  %1026 = vmatprep.subr.bf16.mxu0 0
  %1027 = vmatpush1.bf16.msra.mxu0 0
  %1028 = vmatprep.subr.bf16.mxu0 0
  %1029 = vmatpush1.bf16.msra.mxu0 0
  %1030 = vmatprep.subr.bf16.mxu0 0
  %1031 = vmatpush1.bf16.msra.mxu0 0
  %1032 = vmatprep.subr.bf16.mxu0 0
  %1033 = vmatpush1.bf16.msra.mxu0 0
  %1034 = vmatprep.subr.bf16.mxu0 0
  %1035 = vmatpush1.bf16.msra.mxu0 0
  %1036 = vmatprep.subr.bf16.mxu0 0
  %1037 = vmatpush1.bf16.msra.mxu0 0
  %1038 = vmatprep.subr.bf16.mxu0 0
  %1039 = vmatpush1.bf16.msra.mxu0 0
  %1040 = vmatprep.subr.bf16.mxu0 0
  %1041 = vmatpush1.bf16.msra.mxu0 0
  %1042 = vmatprep.subr.bf16.mxu0 0
  %1043 = vmatpush1.bf16.msra.mxu0 0
  %1044 = vmatprep.subr.bf16.mxu0 0
  %1045 = vmatpush1.bf16.msra.mxu0 0
  %1046 = vmatprep.subr.bf16.mxu0 0
  %1047 = vmatpush1.bf16.msra.mxu0 0
  %1048 = vmatprep.subr.bf16.mxu0 0
  %1049 = vmatpush1.bf16.msra.mxu0 0
  %1050 = vmatprep.subr.bf16.mxu0 0
  %1051 = vmatpush1.bf16.msra.mxu0 0
  %1052 = vmatprep.mubr.bf16.mxu0 0
  %1053 = vmatmul.mubr.bf16.gmra.mrb[0].mxu0 %v1015
  %v1054 = vpop.f32.mrb[0].mxu0
  %v1055 = vadd.f32 0.0, %v1054
  %v1056 = vpop.f32.mrb[0].mxu0
  %v1057 = vpop.f32.mrb[0].mxu0
  %v1058 = vadd.f32 0.0, %v1057
  %v1059 = vpop.f32.mrb[0].mxu0
  %1060 = vdwg.mxu0
  %v1061 = vrcp.pop %v1007
  %v1062 = vmul.f32 %v1055, %v1061
  %v1063 = vrcp.pop %v1010
  %v1064 = vmul.f32 %v1058, %v1063
  %v1065 = vpack.c.bf16 %v1064, %v1062
  %v1070 = vunpack.c.l.b16 %v545
  %v1071 = vunpack.c.l.b16 %v546
  %v1072 = vunpack.c.l.b16 %v547
  %v1073 = vunpack.c.l.b16 %v548
  %v1074 = vpack.c.b16 %v1071, %v1070
  %v1075 = vpack.c.b16 %v1073, %v1072
  %v1079 = vsel %vm565, %v1065, 0
  %1081 = vmatprep.subr.bf16.mxu0 0
  %1082 = vmatpush1.bf16.msra.mxu0 %v1074
  %1083 = vmatprep.subr.bf16.mxu0 0
  %1084 = vmatpush1.bf16.msra.mxu0 %v1075
  %1085 = vmatprep.subr.bf16.mxu0 0
  %1086 = vmatpush1.bf16.msra.mxu0 0
  %1087 = vmatprep.subr.bf16.mxu0 0
  %1088 = vmatpush1.bf16.msra.mxu0 0
  %1089 = vmatprep.subr.bf16.mxu0 0
  %1090 = vmatpush1.bf16.msra.mxu0 0
  %1091 = vmatprep.subr.bf16.mxu0 0
  %1092 = vmatpush1.bf16.msra.mxu0 0
  %1093 = vmatprep.subr.bf16.mxu0 0
  %1094 = vmatpush1.bf16.msra.mxu0 0
  %1095 = vmatprep.subr.bf16.mxu0 0
  %1096 = vmatpush1.bf16.msra.mxu0 0
  %1097 = vmatprep.subr.bf16.mxu0 0
  %1098 = vmatpush1.bf16.msra.mxu0 0
  %1099 = vmatprep.subr.bf16.mxu0 0
  %1100 = vmatpush1.bf16.msra.mxu0 0
  %1101 = vmatprep.subr.bf16.mxu0 0
  %1102 = vmatpush1.bf16.msra.mxu0 0
  %1103 = vmatprep.subr.bf16.mxu0 0
  %1104 = vmatpush1.bf16.msra.mxu0 0
  %1105 = vmatprep.subr.bf16.mxu0 0
  %1106 = vmatpush1.bf16.msra.mxu0 0
  %1107 = vmatprep.subr.bf16.mxu0 0
  %1108 = vmatpush1.bf16.msra.mxu0 0
  %1109 = vmatprep.subr.bf16.mxu0 0
  %1110 = vmatpush1.bf16.msra.mxu0 0
  %1111 = vmatprep.subr.bf16.mxu0 0
  %1112 = vmatpush1.bf16.msra.mxu0 0
  %1113 = vmatprep.mubr.bf16.mxu0 0
  %1114 = vmatmul.mubr.bf16.gmra.mrb[0].mxu0 %v1079
  %v1115 = vpop.f32.mrb[0].mxu0
  %v1116 = vadd.f32 0.0, %v1115
  %v1117 = vpop.f32.mrb[0].mxu0
  %v1118 = vpop.f32.mrb[0].mxu0
  %v1119 = vadd.f32 0.0, %v1118
  %v1120 = vpop.f32.mrb[0].mxu0
  %1121 = vdwg.mxu0
  %v1122 = vadd.f32 %v936, %v1116
  %v1123 = vadd.f32 %v937, %v1119
  %1124 = vrot.lane.b32.xlu0 %v562, 32
  %v1125 = vpop.permute.xlu0 %1124
  %1126 = vrot.lane.b32.xlu0 %v563, 32
  %v1127 = vpop.permute.xlu0 %1126
  %v1129 = vsel %vm565, %v1125, 0
  %v1132 = vsel %vm565, %v1127, 0
  %1134 = vmatprep.subr.bf16.mxu0 0
  %1135 = vmatpush1.bf16.xpose.msra.mxu0 %v1132
  %1136 = vmatprep.subr.bf16.mxu0 0
  %1137 = vmatpush1.bf16.xpose.msra.mxu0 0
  %1138 = vmatprep.subr.bf16.mxu0 0
  %1139 = vmatpush1.bf16.xpose.msra.mxu0 0
  %1140 = vmatprep.subr.bf16.mxu0 0
  %1141 = vmatpush1.bf16.xpose.msra.mxu0 0
  %1142 = vmatprep.subr.bf16.mxu0 0
  %1143 = vmatpush1.bf16.xpose.msra.mxu0 0
  %1144 = vmatprep.subr.bf16.mxu0 0
  %1145 = vmatpush1.bf16.xpose.msra.mxu0 0
  %1146 = vmatprep.subr.bf16.mxu0 0
  %1147 = vmatpush1.bf16.xpose.msra.mxu0 0
  %1148 = vmatprep.subr.bf16.mxu0 0
  %1149 = vmatpush1.bf16.xpose.msra.mxu0 0
  %1150 = vmatprep.subr.bf16.mxu0 0
  %1151 = vmatpush1.bf16.xpose.msra.mxu0 0
  %1152 = vmatprep.subr.bf16.mxu0 0
  %1153 = vmatpush1.bf16.xpose.msra.mxu0 0
  %1154 = vmatprep.subr.bf16.mxu0 0
  %1155 = vmatpush1.bf16.xpose.msra.mxu0 0
  %1156 = vmatprep.subr.bf16.mxu0 0
  %1157 = vmatpush1.bf16.xpose.msra.mxu0 0
  %1158 = vmatprep.subr.bf16.mxu0 0
  %1159 = vmatpush1.bf16.xpose.msra.mxu0 0
  %1160 = vmatprep.subr.bf16.mxu0 0
  %1161 = vmatpush1.bf16.xpose.msra.mxu0 0
  %1162 = vmatprep.subr.bf16.mxu0 0
  %1163 = vmatpush1.bf16.xpose.msra.mxu0 0
  %1164 = vmatprep.subr.bf16.mxu0 0
  %1165 = vmatpush1.bf16.xpose.msra.mxu0 0
  %1166 = vmatprep.mubr.bf16.mxu0 0
  %1167 = vmatmul.mubr.bf16.gmra.mrb[0].mxu0 %v1129
  %v1168 = vpop.f32.mrb[0].mxu0
  %v1169 = vadd.f32 0.0, %v1168
  %v1170 = vpop.f32.mrb[0].mxu0
  %v1171 = vpop.f32.mrb[0].mxu0
  %v1172 = vadd.f32 0.0, %v1171
  %v1173 = vpop.f32.mrb[0].mxu0
  %1174 = vdwg.mxu0
  %v1175 = vmul.f32 %v1169, 0.17677669
  %v1176 = vmul.f32 %v1172, 0.17677669
  %v1177 = vadd.f32 %v1175, %v75
  %v1178 = vadd.f32 %v1176, %v76
  %v1179 = vsel %vm617, %v1177, -inf
  %1180 = vmax.xlane.f32.xlu0 %v1179
  %v1181 = vpop.xlane.xlu0 %1180
  %v1182 = vsel %vm621, %v1178, -inf
  %1183 = vmax.xlane.f32.xlu0 %v1182
  %v1184 = vpop.xlane.xlu0 %1183
  %v1185 = vsub.f32 %v1177, %v1181
  %v1186 = vsub.f32 %v1178, %v1184
  %v1187 = vmul.f32 %v1185, 1.442695
  %v1188 = vpow.pop %v1187
  %v1189 = vmul.f32 %v1186, 1.442695
  %v1190 = vpow.pop %v1189
  %v1191 = vsel %vm617, %v1188, 0.0
  %1192 = vadd.xlane.f32.xlu0 %v1191
  %v1193 = vpop.xlane.xlu0 %1192
  %v1194 = vsel %vm621, %v1190, 0.0
  %1195 = vadd.xlane.f32.xlu0 %v1194
  %v1196 = vpop.xlane.xlu0 %1195
  %v1197 = vpack.c.bf16 %v1190, %v1188
  %1198 = vrot.lane.b32.xlu0 %v564, 32
  %v1199 = vpop.permute.xlu0 %1198
  %v1201 = vsel %vm617, %v1197, 0
  %v1204 = vsel %vm641, %v1199, 0
  %1206 = vmatprep.subr.bf16.mxu0 0
  %1207 = vmatpush1.bf16.msra.mxu0 %v1204
  %1208 = vmatprep.subr.bf16.mxu0 0
  %1209 = vmatpush1.bf16.msra.mxu0 0
  %1210 = vmatprep.subr.bf16.mxu0 0
  %1211 = vmatpush1.bf16.msra.mxu0 0
  %1212 = vmatprep.subr.bf16.mxu0 0
  %1213 = vmatpush1.bf16.msra.mxu0 0
  %1214 = vmatprep.subr.bf16.mxu0 0
  %1215 = vmatpush1.bf16.msra.mxu0 0
  %1216 = vmatprep.subr.bf16.mxu0 0
  %1217 = vmatpush1.bf16.msra.mxu0 0
  %1218 = vmatprep.subr.bf16.mxu0 0
  %1219 = vmatpush1.bf16.msra.mxu0 0
  %1220 = vmatprep.subr.bf16.mxu0 0
  %1221 = vmatpush1.bf16.msra.mxu0 0
  %1222 = vmatprep.subr.bf16.mxu0 0
  %1223 = vmatpush1.bf16.msra.mxu0 0
  %1224 = vmatprep.subr.bf16.mxu0 0
  %1225 = vmatpush1.bf16.msra.mxu0 0
  %1226 = vmatprep.subr.bf16.mxu0 0
  %1227 = vmatpush1.bf16.msra.mxu0 0
  %1228 = vmatprep.subr.bf16.mxu0 0
  %1229 = vmatpush1.bf16.msra.mxu0 0
  %1230 = vmatprep.subr.bf16.mxu0 0
  %1231 = vmatpush1.bf16.msra.mxu0 0
  %1232 = vmatprep.subr.bf16.mxu0 0
  %1233 = vmatpush1.bf16.msra.mxu0 0
  %1234 = vmatprep.subr.bf16.mxu0 0
  %1235 = vmatpush1.bf16.msra.mxu0 0
  %1236 = vmatprep.subr.bf16.mxu0 0
  %1237 = vmatpush1.bf16.msra.mxu0 0
  %1238 = vmatprep.mubr.bf16.mxu0 0
  %1239 = vmatmul.mubr.bf16.gmra.mrb[0].mxu0 %v1201
  %v1240 = vpop.f32.mrb[0].mxu0
  %v1241 = vadd.f32 0.0, %v1240
  %v1242 = vpop.f32.mrb[0].mxu0
  %v1243 = vpop.f32.mrb[0].mxu0
  %v1244 = vadd.f32 0.0, %v1243
  %v1245 = vpop.f32.mrb[0].mxu0
  %1246 = vdwg.mxu0
  %v1247 = vrcp.pop %v1193
  %v1248 = vmul.f32 %v1241, %v1247
  %v1249 = vrcp.pop %v1196
  %v1250 = vmul.f32 %v1244, %v1249
  %v1251 = vpack.c.bf16 %v1250, %v1248
  %v1256 = vunpack.c.l.b16 %v549
  %v1257 = vunpack.c.l.b16 %v550
  %v1258 = vunpack.c.l.b16 %v551
  %v1259 = vunpack.c.l.b16 %v552
  %v1260 = vpack.c.b16 %v1257, %v1256
  %v1261 = vpack.c.b16 %v1259, %v1258
  %v1265 = vsel %vm565, %v1251, 0
  %1267 = vmatprep.subr.bf16.mxu0 0
  %1268 = vmatpush1.bf16.msra.mxu0 %v1260
  %1269 = vmatprep.subr.bf16.mxu0 0
  %1270 = vmatpush1.bf16.msra.mxu0 %v1261
  %1271 = vmatprep.subr.bf16.mxu0 0
  %1272 = vmatpush1.bf16.msra.mxu0 0
  %1273 = vmatprep.subr.bf16.mxu0 0
  %1274 = vmatpush1.bf16.msra.mxu0 0
  %1275 = vmatprep.subr.bf16.mxu0 0
  %1276 = vmatpush1.bf16.msra.mxu0 0
  %1277 = vmatprep.subr.bf16.mxu0 0
  %1278 = vmatpush1.bf16.msra.mxu0 0
  %1279 = vmatprep.subr.bf16.mxu0 0
  %1280 = vmatpush1.bf16.msra.mxu0 0
  %1281 = vmatprep.subr.bf16.mxu0 0
  %1282 = vmatpush1.bf16.msra.mxu0 0
  %1283 = vmatprep.subr.bf16.mxu0 0
  %1284 = vmatpush1.bf16.msra.mxu0 0
  %1285 = vmatprep.subr.bf16.mxu0 0
  %1286 = vmatpush1.bf16.msra.mxu0 0
  %1287 = vmatprep.subr.bf16.mxu0 0
  %1288 = vmatpush1.bf16.msra.mxu0 0
  %1289 = vmatprep.subr.bf16.mxu0 0
  %1290 = vmatpush1.bf16.msra.mxu0 0
  %1291 = vmatprep.subr.bf16.mxu0 0
  %1292 = vmatpush1.bf16.msra.mxu0 0
  %1293 = vmatprep.subr.bf16.mxu0 0
  %1294 = vmatpush1.bf16.msra.mxu0 0
  %1295 = vmatprep.subr.bf16.mxu0 0
  %1296 = vmatpush1.bf16.msra.mxu0 0
  %1297 = vmatprep.subr.bf16.mxu0 0
  %1298 = vmatpush1.bf16.msra.mxu0 0
  %1299 = vmatprep.mubr.bf16.mxu0 0
  %1300 = vmatmul.mubr.bf16.gmra.mrb[0].mxu0 %v1265
  %v1301 = vpop.f32.mrb[0].mxu0
  %v1302 = vadd.f32 0.0, %v1301
  %v1303 = vpop.f32.mrb[0].mxu0
  %v1304 = vpop.f32.mrb[0].mxu0
  %v1305 = vadd.f32 0.0, %v1304
  %v1306 = vpop.f32.mrb[0].mxu0
  %1307 = vdwg.mxu0
  %v1308 = vadd.f32 %v1122, %v1302
  %v1309 = vadd.f32 %v1123, %v1305
  %v1310 = vld [vmem:[%s11] sm:$0x1]
  %v1311 = vld [vmem:[%s12] sm:$0x1]
  %1312 = vadd.xlane.f32.xlu0 %v1308
  %v1313 = vpop.xlane.xlu0 %1312
  %v1314 = vsel %vm235, %v1309, 0.0
  %1315 = vadd.xlane.f32.xlu0 %v1314
  %v1316 = vpop.xlane.xlu0 %1315
  %v1317 = vmul.f32 %v1313, %v239
  %v1318 = vmul.f32 %v1316, %v239
  %v1319 = vsub.f32 %v1308, %v1317
  %v1320 = vsub.f32 %v1309, %v1318
  %v1321 = vmul.f32 %v1319, %v1319
  %v1322 = vmul.f32 %v1320, %v1320
  %1323 = vadd.xlane.f32.xlu0 %v1321
  %v1324 = vpop.xlane.xlu0 %1323
  %v1325 = vsel %vm235, %v1322, 0.0
  %1326 = vadd.xlane.f32.xlu0 %v1325
  %v1327 = vpop.xlane.xlu0 %1326
  %v1328 = vmul.f32 %v1324, %v239
  %v1329 = vmul.f32 %v1327, %v239
  %v1330 = vadd.f32 %v1328, 1e-06
  %v1331 = vadd.f32 %v1329, 1e-06
  %v1332 = vrsqrt.pop %v1330
  %v1333 = vrsqrt.pop %v1331
  %v1334 = vmul.f32 %v1319, %v1332
  %v1335 = vmul.f32 %v1320, %v1333
  %v1337 = vlaneseq
  %v1338 = vshrl.u32 %v1337, 7
  %v1339 = vsub.s32 0, %v1338
  %v1340 = vrot.slane %v1310, %v1339
  %v1342 = vmul.f32 %v1334, %v1340
  %v1343 = vmul.f32 %v1335, %v1340
  %v1345 = vlaneseq
  %v1346 = vshrl.u32 %v1345, 7
  %v1347 = vsub.s32 0, %v1346
  %v1348 = vrot.slane %v1311, %v1347
  %v1350 = vadd.f32 %v1342, %v1348
  %v1351 = vadd.f32 %v1343, %v1348
  %v1352 = vpack.c.bf16 %v1351, %v1350
  %v1353 = vld [vmem:[%s13] sm:$0xff]
  %v1354 = vld [vmem:[%s13 + $0x8] sm:$0xff]
  %v1355 = vld [vmem:[%s13 + $0x10] sm:$0xff]
  %v1356 = vld [vmem:[%s13 + $0x18] sm:$0xff]
  %v1357 = vld [vmem:[%s13 + $0x20] sm:$0xff]
  %v1358 = vld [vmem:[%s13 + $0x28] sm:$0xff]
  %v1359 = vld [vmem:[%s13 + $0x30] sm:$0xff]
  %v1360 = vld [vmem:[%s13 + $0x38] sm:$0xff]
  %v1361 = vld [vmem:[%s13 + $0x40] sm:$0xff]
  %v1362 = vld [vmem:[%s13 + $0x48] sm:$0xff]
  %v1363 = vld [vmem:[%s13 + $0x50] sm:$0xff]
  %v1364 = vld [vmem:[%s13 + $0x58] sm:$0xff]
  %v1365 = vld [vmem:[%s13 + $0x60] sm:$0xff]
  %v1366 = vld [vmem:[%s13 + $0x68] sm:$0xff]
  %v1367 = vld [vmem:[%s13 + $0x70] sm:$0xff]
  %v1368 = vld [vmem:[%s13 + $0x78] sm:$0xff]
  %v1369 = vld [vmem:[%s13 + $0x80] sm:$0xff]
  %v1370 = vld [vmem:[%s13 + $0x88] sm:$0xff]
  %v1371 = vld [vmem:[%s13 + $0x90] sm:$0xff]
  %v1372 = vld [vmem:[%s13 + $0x98] sm:$0xff]
  %v1373 = vld [vmem:[%s13 + $0xa0] sm:$0xff]
  %v1374 = vld [vmem:[%s13 + $0xa8] sm:$0xff]
  %v1375 = vld [vmem:[%s13 + $0xb0] sm:$0xff]
  %v1376 = vld [vmem:[%s13 + $0xb8] sm:$0xff]
  %v1377 = vld [vmem:[%s13 + $0xc0] sm:$0xff]
  %v1378 = vld [vmem:[%s13 + $0xc8] sm:$0xff]
  %v1379 = vld [vmem:[%s13 + $0xd0] sm:$0xff]
  %v1380 = vld [vmem:[%s13 + $0xd8] sm:$0xff]
  %v1381 = vld [vmem:[%s13 + $0xe0] sm:$0xff]
  %v1382 = vld [vmem:[%s13 + $0xe8] sm:$0xff]
  %v1383 = vld [vmem:[%s13 + $0xf0] sm:$0xff]
  %v1384 = vld [vmem:[%s13 + $0xf8] sm:$0xff]
  %v1385 = vld [vmem:[%s14] sm:$0xf]
  %v1387 = vlaneseq
  %v1388 = vshrl.u32 %v1387, 7
  %v1389 = vsub.s32 0, %v1388
  %v1390 = vrot.slane %v1385, %v1389
  %v1391 = vlaneseq
  %v1392 = vshrl.u32 %v1391, 7
  %v1393 = vsub.s32 1, %v1392
  %v1394 = vrot.slane %v1385, %v1393
  %v1395 = vlaneseq
  %v1396 = vshrl.u32 %v1395, 7
  %v1397 = vsub.s32 2, %v1396
  %v1398 = vrot.slane %v1385, %v1397
  %v1399 = vlaneseq
  %v1400 = vshrl.u32 %v1399, 7
  %v1401 = vsub.s32 3, %v1400
  %v1402 = vrot.slane %v1385, %v1401
  %v1439 = vunpack.c.l.b16 %v1353
  %v1440 = vunpack.c.h.b16 %v1353
  %v1441 = vunpack.c.l.b16 %v1354
  %v1442 = vunpack.c.h.b16 %v1354
  %v1443 = vunpack.c.l.b16 %v1355
  %v1444 = vunpack.c.h.b16 %v1355
  %v1445 = vunpack.c.l.b16 %v1356
  %v1446 = vunpack.c.h.b16 %v1356
  %v1447 = vunpack.c.l.b16 %v1357
  %v1448 = vunpack.c.h.b16 %v1357
  %v1449 = vunpack.c.l.b16 %v1358
  %v1450 = vunpack.c.h.b16 %v1358
  %v1451 = vunpack.c.l.b16 %v1359
  %v1452 = vunpack.c.h.b16 %v1359
  %v1453 = vunpack.c.l.b16 %v1360
  %v1454 = vunpack.c.h.b16 %v1360
  %v1455 = vunpack.c.l.b16 %v1361
  %v1456 = vunpack.c.h.b16 %v1361
  %v1457 = vunpack.c.l.b16 %v1362
  %v1458 = vunpack.c.h.b16 %v1362
  %v1459 = vunpack.c.l.b16 %v1363
  %v1460 = vunpack.c.h.b16 %v1363
  %v1461 = vunpack.c.l.b16 %v1364
  %v1462 = vunpack.c.h.b16 %v1364
  %v1463 = vunpack.c.l.b16 %v1365
  %v1464 = vunpack.c.h.b16 %v1365
  %v1465 = vunpack.c.l.b16 %v1366
  %v1466 = vunpack.c.h.b16 %v1366
  %v1467 = vunpack.c.l.b16 %v1367
  %v1468 = vunpack.c.h.b16 %v1367
  %v1469 = vunpack.c.l.b16 %v1368
  %v1470 = vunpack.c.h.b16 %v1368
  %v1471 = vunpack.c.l.b16 %v1369
  %v1472 = vunpack.c.h.b16 %v1369
  %v1473 = vunpack.c.l.b16 %v1370
  %v1474 = vunpack.c.h.b16 %v1370
  %v1475 = vunpack.c.l.b16 %v1371
  %v1476 = vunpack.c.h.b16 %v1371
  %v1477 = vunpack.c.l.b16 %v1372
  %v1478 = vunpack.c.h.b16 %v1372
  %v1479 = vunpack.c.l.b16 %v1373
  %v1480 = vunpack.c.h.b16 %v1373
  %v1481 = vunpack.c.l.b16 %v1374
  %v1482 = vunpack.c.h.b16 %v1374
  %v1483 = vunpack.c.l.b16 %v1375
  %v1484 = vunpack.c.h.b16 %v1375
  %v1485 = vunpack.c.l.b16 %v1376
  %v1486 = vunpack.c.h.b16 %v1376
  %v1487 = vunpack.c.l.b16 %v1377
  %v1488 = vunpack.c.h.b16 %v1377
  %v1489 = vunpack.c.l.b16 %v1378
  %v1490 = vunpack.c.h.b16 %v1378
  %v1491 = vunpack.c.l.b16 %v1379
  %v1492 = vunpack.c.h.b16 %v1379
  %v1493 = vunpack.c.l.b16 %v1380
  %v1494 = vunpack.c.h.b16 %v1380
  %v1495 = vunpack.c.l.b16 %v1381
  %v1496 = vunpack.c.h.b16 %v1381
  %v1497 = vunpack.c.l.b16 %v1382
  %v1498 = vunpack.c.h.b16 %v1382
  %v1499 = vunpack.c.l.b16 %v1383
  %v1500 = vunpack.c.h.b16 %v1383
  %v1501 = vunpack.c.l.b16 %v1384
  %v1502 = vunpack.c.h.b16 %v1384
  %v1503 = vpack.c.b16 %v1443, %v1439
  %v1504 = vpack.c.b16 %v1444, %v1440
  %v1505 = vpack.c.b16 %v1445, %v1441
  %v1506 = vpack.c.b16 %v1446, %v1442
  %v1507 = vpack.c.b16 %v1451, %v1447
  %v1508 = vpack.c.b16 %v1452, %v1448
  %v1509 = vpack.c.b16 %v1453, %v1449
  %v1510 = vpack.c.b16 %v1454, %v1450
  %v1511 = vpack.c.b16 %v1459, %v1455
  %v1512 = vpack.c.b16 %v1460, %v1456
  %v1513 = vpack.c.b16 %v1461, %v1457
  %v1514 = vpack.c.b16 %v1462, %v1458
  %v1515 = vpack.c.b16 %v1467, %v1463
  %v1516 = vpack.c.b16 %v1468, %v1464
  %v1517 = vpack.c.b16 %v1469, %v1465
  %v1518 = vpack.c.b16 %v1470, %v1466
  %v1519 = vpack.c.b16 %v1475, %v1471
  %v1520 = vpack.c.b16 %v1476, %v1472
  %v1521 = vpack.c.b16 %v1477, %v1473
  %v1522 = vpack.c.b16 %v1478, %v1474
  %v1523 = vpack.c.b16 %v1483, %v1479
  %v1524 = vpack.c.b16 %v1484, %v1480
  %v1525 = vpack.c.b16 %v1485, %v1481
  %v1526 = vpack.c.b16 %v1486, %v1482
  %v1527 = vpack.c.b16 %v1491, %v1487
  %v1528 = vpack.c.b16 %v1492, %v1488
  %v1529 = vpack.c.b16 %v1493, %v1489
  %v1530 = vpack.c.b16 %v1494, %v1490
  %v1531 = vpack.c.b16 %v1499, %v1495
  %v1532 = vpack.c.b16 %v1500, %v1496
  %v1533 = vpack.c.b16 %v1501, %v1497
  %v1534 = vpack.c.b16 %v1502, %v1498
  %1567 = vmatprep.subr.bf16.mxu0 %v1504
  %1568 = vmatpush1.bf16.msra.mxu0 %v1503
  %1569 = vmatprep.subr.bf16.mxu0 %v1508
  %1570 = vmatpush1.bf16.msra.mxu0 %v1507
  %1571 = vmatprep.subr.bf16.mxu0 %v1512
  %1572 = vmatpush1.bf16.msra.mxu0 %v1511
  %1573 = vmatprep.subr.bf16.mxu0 %v1516
  %1574 = vmatpush1.bf16.msra.mxu0 %v1515
  %1575 = vmatprep.subr.bf16.mxu0 %v1520
  %1576 = vmatpush1.bf16.msra.mxu0 %v1519
  %1577 = vmatprep.subr.bf16.mxu0 %v1524
  %1578 = vmatpush1.bf16.msra.mxu0 %v1523
  %1579 = vmatprep.subr.bf16.mxu0 %v1528
  %1580 = vmatpush1.bf16.msra.mxu0 %v1527
  %1581 = vmatprep.subr.bf16.mxu0 %v1532
  %1582 = vmatpush1.bf16.msra.mxu0 %v1531
  %1583 = vmatprep.subr.bf16.mxu0 0
  %1584 = vmatpush1.bf16.msra.mxu0 0
  %1585 = vmatprep.subr.bf16.mxu0 0
  %1586 = vmatpush1.bf16.msra.mxu0 0
  %1587 = vmatprep.subr.bf16.mxu0 0
  %1588 = vmatpush1.bf16.msra.mxu0 0
  %1589 = vmatprep.subr.bf16.mxu0 0
  %1590 = vmatpush1.bf16.msra.mxu0 0
  %1591 = vmatprep.subr.bf16.mxu0 0
  %1592 = vmatpush1.bf16.msra.mxu0 0
  %1593 = vmatprep.subr.bf16.mxu0 0
  %1594 = vmatpush1.bf16.msra.mxu0 0
  %1595 = vmatprep.subr.bf16.mxu0 0
  %1596 = vmatpush1.bf16.msra.mxu0 0
  %1597 = vmatprep.subr.bf16.mxu0 0
  %1598 = vmatpush1.bf16.msra.mxu0 0
  %1599 = vmatprep.mubr.bf16.mxu0 0
  %1600 = vmatmul.mubr.bf16.gmra.mrb[0].mxu0 %v1352
  %v1601 = vpop.f32.mrb[0].mxu0
  %v1602 = vadd.f32 %v1390, %v1601
  %v1603 = vpop.f32.mrb[0].mxu0
  %v1604 = vadd.f32 %v1394, %v1603
  %v1605 = vpop.f32.mrb[0].mxu0
  %v1606 = vadd.f32 %v1390, %v1605
  %v1607 = vpop.f32.mrb[0].mxu0
  %v1608 = vadd.f32 %v1394, %v1607
  %1609 = vdwg.mxu0
  %1610 = vmatprep.subr.bf16.mxu0 %v1506
  %1611 = vmatpush1.bf16.msra.mxu0 %v1505
  %1612 = vmatprep.subr.bf16.mxu0 %v1510
  %1613 = vmatpush1.bf16.msra.mxu0 %v1509
  %1614 = vmatprep.subr.bf16.mxu0 %v1514
  %1615 = vmatpush1.bf16.msra.mxu0 %v1513
  %1616 = vmatprep.subr.bf16.mxu0 %v1518
  %1617 = vmatpush1.bf16.msra.mxu0 %v1517
  %1618 = vmatprep.subr.bf16.mxu0 %v1522
  %1619 = vmatpush1.bf16.msra.mxu0 %v1521
  %1620 = vmatprep.subr.bf16.mxu0 %v1526
  %1621 = vmatpush1.bf16.msra.mxu0 %v1525
  %1622 = vmatprep.subr.bf16.mxu0 %v1530
  %1623 = vmatpush1.bf16.msra.mxu0 %v1529
  %1624 = vmatprep.subr.bf16.mxu0 %v1534
  %1625 = vmatpush1.bf16.msra.mxu0 %v1533
  %1626 = vmatprep.subr.bf16.mxu0 0
  %1627 = vmatpush1.bf16.msra.mxu0 0
  %1628 = vmatprep.subr.bf16.mxu0 0
  %1629 = vmatpush1.bf16.msra.mxu0 0
  %1630 = vmatprep.subr.bf16.mxu0 0
  %1631 = vmatpush1.bf16.msra.mxu0 0
  %1632 = vmatprep.subr.bf16.mxu0 0
  %1633 = vmatpush1.bf16.msra.mxu0 0
  %1634 = vmatprep.subr.bf16.mxu0 0
  %1635 = vmatpush1.bf16.msra.mxu0 0
  %1636 = vmatprep.subr.bf16.mxu0 0
  %1637 = vmatpush1.bf16.msra.mxu0 0
  %1638 = vmatprep.subr.bf16.mxu0 0
  %1639 = vmatpush1.bf16.msra.mxu0 0
  %1640 = vmatprep.subr.bf16.mxu0 0
  %1641 = vmatpush1.bf16.msra.mxu0 0
  %1642 = vmatprep.mubr.bf16.mxu0 0
  %1643 = vmatmul.mubr.bf16.gmra.mrb[0].mxu0 %v1352
  %v1644 = vpop.f32.mrb[0].mxu0
  %v1645 = vadd.f32 %v1398, %v1644
  %v1646 = vpop.f32.mrb[0].mxu0
  %v1647 = vadd.f32 %v1402, %v1646
  %v1648 = vpop.f32.mrb[0].mxu0
  %v1649 = vadd.f32 %v1398, %v1648
  %v1650 = vpop.f32.mrb[0].mxu0
  %v1651 = vadd.f32 %v1402, %v1650
  %1652 = vdwg.mxu0
  %v1653 = vmul.f32 %v1602, 0.5
  %v1654 = vmul.f32 %v1604, 0.5
  %v1655 = vmul.f32 %v1645, 0.5
  %v1656 = vmul.f32 %v1647, 0.5
  %v1657 = vmul.f32 %v1606, 0.5
  %v1658 = vmul.f32 %v1608, 0.5
  %v1659 = vmul.f32 %v1649, 0.5
  %v1660 = vmul.f32 %v1651, 0.5
  %v1661 = vmul.f32 %v1602, 0.044715
  %v1662 = vmul.f32 %v1604, 0.044715
  %v1663 = vmul.f32 %v1645, 0.044715
  %v1664 = vmul.f32 %v1647, 0.044715
  %v1665 = vmul.f32 %v1606, 0.044715
  %v1666 = vmul.f32 %v1608, 0.044715
  %v1667 = vmul.f32 %v1649, 0.044715
  %v1668 = vmul.f32 %v1651, 0.044715
  %v1669 = vmul.f32 %v1661, %v1602
  %v1670 = vmul.f32 %v1662, %v1604
  %v1671 = vmul.f32 %v1663, %v1645
  %v1672 = vmul.f32 %v1664, %v1647
  %v1673 = vmul.f32 %v1665, %v1606
  %v1674 = vmul.f32 %v1666, %v1608
  %v1675 = vmul.f32 %v1667, %v1649
  %v1676 = vmul.f32 %v1668, %v1651
  %v1677 = vmul.f32 %v1669, %v1602
  %v1678 = vmul.f32 %v1670, %v1604
  %v1679 = vmul.f32 %v1671, %v1645
  %v1680 = vmul.f32 %v1672, %v1647
  %v1681 = vmul.f32 %v1673, %v1606
  %v1682 = vmul.f32 %v1674, %v1608
  %v1683 = vmul.f32 %v1675, %v1649
  %v1684 = vmul.f32 %v1676, %v1651
  %v1685 = vadd.f32 %v1602, %v1677
  %v1686 = vadd.f32 %v1604, %v1678
  %v1687 = vadd.f32 %v1645, %v1679
  %v1688 = vadd.f32 %v1647, %v1680
  %v1689 = vadd.f32 %v1606, %v1681
  %v1690 = vadd.f32 %v1608, %v1682
  %v1691 = vadd.f32 %v1649, %v1683
  %v1692 = vadd.f32 %v1651, %v1684
  %v1693 = vmul.f32 %v1685, 0.7978846
  %v1694 = vmul.f32 %v1686, 0.7978846
  %v1695 = vmul.f32 %v1687, 0.7978846
  %v1696 = vmul.f32 %v1688, 0.7978846
  %v1697 = vmul.f32 %v1689, 0.7978846
  %v1698 = vmul.f32 %v1690, 0.7978846
  %v1699 = vmul.f32 %v1691, 0.7978846
  %v1700 = vmul.f32 %v1692, 0.7978846
  %v1701 = vtanh.pop %v1693
  %v1702 = vtanh.pop %v1694
  %v1703 = vtanh.pop %v1695
  %v1704 = vtanh.pop %v1696
  %v1705 = vtanh.pop %v1697
  %v1706 = vtanh.pop %v1698
  %v1707 = vtanh.pop %v1699
  %v1708 = vtanh.pop %v1700
  %v1709 = vadd.f32 %v1701, 1.0
  %v1710 = vadd.f32 %v1702, 1.0
  %v1711 = vadd.f32 %v1703, 1.0
  %v1712 = vadd.f32 %v1704, 1.0
  %v1713 = vadd.f32 %v1705, 1.0
  %v1714 = vadd.f32 %v1706, 1.0
  %v1715 = vadd.f32 %v1707, 1.0
  %v1716 = vadd.f32 %v1708, 1.0
  %v1717 = vmul.f32 %v1653, %v1709
  %v1718 = vmul.f32 %v1654, %v1710
  %v1719 = vmul.f32 %v1655, %v1711
  %v1720 = vmul.f32 %v1656, %v1712
  %v1721 = vmul.f32 %v1657, %v1713
  %v1722 = vmul.f32 %v1658, %v1714
  %v1723 = vmul.f32 %v1659, %v1715
  %v1724 = vmul.f32 %v1660, %v1716
  %v1725 = vpack.c.bf16 %v1721, %v1717
  %v1726 = vpack.c.bf16 %v1722, %v1718
  %v1727 = vpack.c.bf16 %v1723, %v1719
  %v1728 = vpack.c.bf16 %v1724, %v1720
  %v1729 = vld [vmem:[%s15] sm:$0xf]
  %v1730 = vld [vmem:[%s15 + $0x4] sm:$0xf]
  %v1731 = vld [vmem:[%s15 + $0x8] sm:$0xf]
  %v1732 = vld [vmem:[%s15 + $0xc] sm:$0xf]
  %v1733 = vld [vmem:[%s15 + $0x10] sm:$0xf]
  %v1734 = vld [vmem:[%s15 + $0x14] sm:$0xf]
  %v1735 = vld [vmem:[%s15 + $0x18] sm:$0xf]
  %v1736 = vld [vmem:[%s15 + $0x1c] sm:$0xf]
  %v1737 = vld [vmem:[%s15 + $0x20] sm:$0xf]
  %v1738 = vld [vmem:[%s15 + $0x24] sm:$0xf]
  %v1739 = vld [vmem:[%s15 + $0x28] sm:$0xf]
  %v1740 = vld [vmem:[%s15 + $0x2c] sm:$0xf]
  %v1741 = vld [vmem:[%s15 + $0x30] sm:$0xf]
  %v1742 = vld [vmem:[%s15 + $0x34] sm:$0xf]
  %v1743 = vld [vmem:[%s15 + $0x38] sm:$0xf]
  %v1744 = vld [vmem:[%s15 + $0x3c] sm:$0xf]
  %v1745 = vld [vmem:[%s15 + $0x40] sm:$0xf]
  %v1746 = vld [vmem:[%s15 + $0x44] sm:$0xf]
  %v1747 = vld [vmem:[%s15 + $0x48] sm:$0xf]
  %v1748 = vld [vmem:[%s15 + $0x4c] sm:$0xf]
  %v1749 = vld [vmem:[%s15 + $0x50] sm:$0xf]
  %v1750 = vld [vmem:[%s15 + $0x54] sm:$0xf]
  %v1751 = vld [vmem:[%s15 + $0x58] sm:$0xf]
  %v1752 = vld [vmem:[%s15 + $0x5c] sm:$0xf]
  %v1753 = vld [vmem:[%s15 + $0x60] sm:$0xf]
  %v1754 = vld [vmem:[%s15 + $0x64] sm:$0xf]
  %v1755 = vld [vmem:[%s15 + $0x68] sm:$0xf]
  %v1756 = vld [vmem:[%s15 + $0x6c] sm:$0xf]
  %v1757 = vld [vmem:[%s15 + $0x70] sm:$0xf]
  %v1758 = vld [vmem:[%s15 + $0x74] sm:$0xf]
  %v1759 = vld [vmem:[%s15 + $0x78] sm:$0xf]
  %v1760 = vld [vmem:[%s15 + $0x7c] sm:$0xf]
  %v1761 = vld [vmem:[%s15 + $0x80] sm:$0xf]
  %v1762 = vld [vmem:[%s15 + $0x84] sm:$0xf]
  %v1763 = vld [vmem:[%s15 + $0x88] sm:$0xf]
  %v1764 = vld [vmem:[%s15 + $0x8c] sm:$0xf]
  %v1765 = vld [vmem:[%s15 + $0x90] sm:$0xf]
  %v1766 = vld [vmem:[%s15 + $0x94] sm:$0xf]
  %v1767 = vld [vmem:[%s15 + $0x98] sm:$0xf]
  %v1768 = vld [vmem:[%s15 + $0x9c] sm:$0xf]
  %v1769 = vld [vmem:[%s15 + $0xa0] sm:$0xf]
  %v1770 = vld [vmem:[%s15 + $0xa4] sm:$0xf]
  %v1771 = vld [vmem:[%s15 + $0xa8] sm:$0xf]
  %v1772 = vld [vmem:[%s15 + $0xac] sm:$0xf]
  %v1773 = vld [vmem:[%s15 + $0xb0] sm:$0xf]
  %v1774 = vld [vmem:[%s15 + $0xb4] sm:$0xf]
  %v1775 = vld [vmem:[%s15 + $0xb8] sm:$0xf]
  %v1776 = vld [vmem:[%s15 + $0xbc] sm:$0xf]
  %v1777 = vld [vmem:[%s15 + $0xc0] sm:$0xf]
  %v1778 = vld [vmem:[%s15 + $0xc4] sm:$0xf]
  %v1779 = vld [vmem:[%s15 + $0xc8] sm:$0xf]
  %v1780 = vld [vmem:[%s15 + $0xcc] sm:$0xf]
  %v1781 = vld [vmem:[%s15 + $0xd0] sm:$0xf]
  %v1782 = vld [vmem:[%s15 + $0xd4] sm:$0xf]
  %v1783 = vld [vmem:[%s15 + $0xd8] sm:$0xf]
  %v1784 = vld [vmem:[%s15 + $0xdc] sm:$0xf]
  %v1785 = vld [vmem:[%s15 + $0xe0] sm:$0xf]
  %v1786 = vld [vmem:[%s15 + $0xe4] sm:$0xf]
  %v1787 = vld [vmem:[%s15 + $0xe8] sm:$0xf]
  %v1788 = vld [vmem:[%s15 + $0xec] sm:$0xf]
  %v1789 = vld [vmem:[%s15 + $0xf0] sm:$0xf]
  %v1790 = vld [vmem:[%s15 + $0xf4] sm:$0xf]
  %v1791 = vld [vmem:[%s15 + $0xf8] sm:$0xf]
  %v1792 = vld [vmem:[%s15 + $0xfc] sm:$0xf]
  %v1857 = vunpack.c.l.b16 %v1729
  %v1858 = vunpack.c.l.b16 %v1730
  %v1859 = vunpack.c.l.b16 %v1731
  %v1860 = vunpack.c.l.b16 %v1732
  %v1861 = vunpack.c.l.b16 %v1733
  %v1862 = vunpack.c.l.b16 %v1734
  %v1863 = vunpack.c.l.b16 %v1735
  %v1864 = vunpack.c.l.b16 %v1736
  %v1865 = vunpack.c.l.b16 %v1737
  %v1866 = vunpack.c.l.b16 %v1738
  %v1867 = vunpack.c.l.b16 %v1739
  %v1868 = vunpack.c.l.b16 %v1740
  %v1869 = vunpack.c.l.b16 %v1741
  %v1870 = vunpack.c.l.b16 %v1742
  %v1871 = vunpack.c.l.b16 %v1743
  %v1872 = vunpack.c.l.b16 %v1744
  %v1873 = vunpack.c.l.b16 %v1745
  %v1874 = vunpack.c.l.b16 %v1746
  %v1875 = vunpack.c.l.b16 %v1747
  %v1876 = vunpack.c.l.b16 %v1748
  %v1877 = vunpack.c.l.b16 %v1749
  %v1878 = vunpack.c.l.b16 %v1750
  %v1879 = vunpack.c.l.b16 %v1751
  %v1880 = vunpack.c.l.b16 %v1752
  %v1881 = vunpack.c.l.b16 %v1753
  %v1882 = vunpack.c.l.b16 %v1754
  %v1883 = vunpack.c.l.b16 %v1755
  %v1884 = vunpack.c.l.b16 %v1756
  %v1885 = vunpack.c.l.b16 %v1757
  %v1886 = vunpack.c.l.b16 %v1758
  %v1887 = vunpack.c.l.b16 %v1759
  %v1888 = vunpack.c.l.b16 %v1760
  %v1889 = vunpack.c.l.b16 %v1761
  %v1890 = vunpack.c.l.b16 %v1762
  %v1891 = vunpack.c.l.b16 %v1763
  %v1892 = vunpack.c.l.b16 %v1764
  %v1893 = vunpack.c.l.b16 %v1765
  %v1894 = vunpack.c.l.b16 %v1766
  %v1895 = vunpack.c.l.b16 %v1767
  %v1896 = vunpack.c.l.b16 %v1768
  %v1897 = vunpack.c.l.b16 %v1769
  %v1898 = vunpack.c.l.b16 %v1770
  %v1899 = vunpack.c.l.b16 %v1771
  %v1900 = vunpack.c.l.b16 %v1772
  %v1901 = vunpack.c.l.b16 %v1773
  %v1902 = vunpack.c.l.b16 %v1774
  %v1903 = vunpack.c.l.b16 %v1775
  %v1904 = vunpack.c.l.b16 %v1776
  %v1905 = vunpack.c.l.b16 %v1777
  %v1906 = vunpack.c.l.b16 %v1778
  %v1907 = vunpack.c.l.b16 %v1779
  %v1908 = vunpack.c.l.b16 %v1780
  %v1909 = vunpack.c.l.b16 %v1781
  %v1910 = vunpack.c.l.b16 %v1782
  %v1911 = vunpack.c.l.b16 %v1783
  %v1912 = vunpack.c.l.b16 %v1784
  %v1913 = vunpack.c.l.b16 %v1785
  %v1914 = vunpack.c.l.b16 %v1786
  %v1915 = vunpack.c.l.b16 %v1787
  %v1916 = vunpack.c.l.b16 %v1788
  %v1917 = vunpack.c.l.b16 %v1789
  %v1918 = vunpack.c.l.b16 %v1790
  %v1919 = vunpack.c.l.b16 %v1791
  %v1920 = vunpack.c.l.b16 %v1792
  %v1921 = vpack.c.b16 %v1858, %v1857
  %v1922 = vpack.c.b16 %v1860, %v1859
  %v1923 = vpack.c.b16 %v1862, %v1861
  %v1924 = vpack.c.b16 %v1864, %v1863
  %v1925 = vpack.c.b16 %v1866, %v1865
  %v1926 = vpack.c.b16 %v1868, %v1867
  %v1927 = vpack.c.b16 %v1870, %v1869
  %v1928 = vpack.c.b16 %v1872, %v1871
  %v1929 = vpack.c.b16 %v1874, %v1873
  %v1930 = vpack.c.b16 %v1876, %v1875
  %v1931 = vpack.c.b16 %v1878, %v1877
  %v1932 = vpack.c.b16 %v1880, %v1879
  %v1933 = vpack.c.b16 %v1882, %v1881
  %v1934 = vpack.c.b16 %v1884, %v1883
  %v1935 = vpack.c.b16 %v1886, %v1885
  %v1936 = vpack.c.b16 %v1888, %v1887
  %v1937 = vpack.c.b16 %v1890, %v1889
  %v1938 = vpack.c.b16 %v1892, %v1891
  %v1939 = vpack.c.b16 %v1894, %v1893
  %v1940 = vpack.c.b16 %v1896, %v1895
  %v1941 = vpack.c.b16 %v1898, %v1897
  %v1942 = vpack.c.b16 %v1900, %v1899
  %v1943 = vpack.c.b16 %v1902, %v1901
  %v1944 = vpack.c.b16 %v1904, %v1903
  %v1945 = vpack.c.b16 %v1906, %v1905
  %v1946 = vpack.c.b16 %v1908, %v1907
  %v1947 = vpack.c.b16 %v1910, %v1909
  %v1948 = vpack.c.b16 %v1912, %v1911
  %v1949 = vpack.c.b16 %v1914, %v1913
  %v1950 = vpack.c.b16 %v1916, %v1915
  %v1951 = vpack.c.b16 %v1918, %v1917
  %v1952 = vpack.c.b16 %v1920, %v1919
  %1985 = vmatprep.subr.bf16.mxu0 0
  %1986 = vmatpush1.bf16.msra.mxu0 %v1921
  %1987 = vmatprep.subr.bf16.mxu0 0
  %1988 = vmatpush1.bf16.msra.mxu0 %v1922
  %1989 = vmatprep.subr.bf16.mxu0 0
  %1990 = vmatpush1.bf16.msra.mxu0 %v1923
  %1991 = vmatprep.subr.bf16.mxu0 0
  %1992 = vmatpush1.bf16.msra.mxu0 %v1924
  %1993 = vmatprep.subr.bf16.mxu0 0
  %1994 = vmatpush1.bf16.msra.mxu0 %v1925
  %1995 = vmatprep.subr.bf16.mxu0 0
  %1996 = vmatpush1.bf16.msra.mxu0 %v1926
  %1997 = vmatprep.subr.bf16.mxu0 0
  %1998 = vmatpush1.bf16.msra.mxu0 %v1927
  %1999 = vmatprep.subr.bf16.mxu0 0
  %2000 = vmatpush1.bf16.msra.mxu0 %v1928
  %2001 = vmatprep.subr.bf16.mxu0 0
  %2002 = vmatpush1.bf16.msra.mxu0 %v1929
  %2003 = vmatprep.subr.bf16.mxu0 0
  %2004 = vmatpush1.bf16.msra.mxu0 %v1930
  %2005 = vmatprep.subr.bf16.mxu0 0
  %2006 = vmatpush1.bf16.msra.mxu0 %v1931
  %2007 = vmatprep.subr.bf16.mxu0 0
  %2008 = vmatpush1.bf16.msra.mxu0 %v1932
  %2009 = vmatprep.subr.bf16.mxu0 0
  %2010 = vmatpush1.bf16.msra.mxu0 %v1933
  %2011 = vmatprep.subr.bf16.mxu0 0
  %2012 = vmatpush1.bf16.msra.mxu0 %v1934
  %2013 = vmatprep.subr.bf16.mxu0 0
  %2014 = vmatpush1.bf16.msra.mxu0 %v1935
  %2015 = vmatprep.subr.bf16.mxu0 0
  %2016 = vmatpush1.bf16.msra.mxu0 %v1936
  %2017 = vmatprep.mubr.bf16.mxu0 %v1726
  %2018 = vmatmul.mubr.bf16.gmra.mrb[0].mxu0 %v1725
  %v2019 = vpop.f32.mrb[0].mxu0
  %v2020 = vadd.f32 0.0, %v2019
  %v2021 = vpop.f32.mrb[0].mxu0
  %v2022 = vpop.f32.mrb[0].mxu0
  %v2023 = vadd.f32 0.0, %v2022
  %v2024 = vpop.f32.mrb[0].mxu0
  %2025 = vdwg.mxu0
  %2026 = vmatprep.subr.bf16.mxu0 0
  %2027 = vmatpush1.bf16.msra.mxu0 %v1937
  %2028 = vmatprep.subr.bf16.mxu0 0
  %2029 = vmatpush1.bf16.msra.mxu0 %v1938
  %2030 = vmatprep.subr.bf16.mxu0 0
  %2031 = vmatpush1.bf16.msra.mxu0 %v1939
  %2032 = vmatprep.subr.bf16.mxu0 0
  %2033 = vmatpush1.bf16.msra.mxu0 %v1940
  %2034 = vmatprep.subr.bf16.mxu0 0
  %2035 = vmatpush1.bf16.msra.mxu0 %v1941
  %2036 = vmatprep.subr.bf16.mxu0 0
  %2037 = vmatpush1.bf16.msra.mxu0 %v1942
  %2038 = vmatprep.subr.bf16.mxu0 0
  %2039 = vmatpush1.bf16.msra.mxu0 %v1943
  %2040 = vmatprep.subr.bf16.mxu0 0
  %2041 = vmatpush1.bf16.msra.mxu0 %v1944
  %2042 = vmatprep.subr.bf16.mxu0 0
  %2043 = vmatpush1.bf16.msra.mxu0 %v1945
  %2044 = vmatprep.subr.bf16.mxu0 0
  %2045 = vmatpush1.bf16.msra.mxu0 %v1946
  %2046 = vmatprep.subr.bf16.mxu0 0
  %2047 = vmatpush1.bf16.msra.mxu0 %v1947
  %2048 = vmatprep.subr.bf16.mxu0 0
  %2049 = vmatpush1.bf16.msra.mxu0 %v1948
  %2050 = vmatprep.subr.bf16.mxu0 0
  %2051 = vmatpush1.bf16.msra.mxu0 %v1949
  %2052 = vmatprep.subr.bf16.mxu0 0
  %2053 = vmatpush1.bf16.msra.mxu0 %v1950
  %2054 = vmatprep.subr.bf16.mxu0 0
  %2055 = vmatpush1.bf16.msra.mxu0 %v1951
  %2056 = vmatprep.subr.bf16.mxu0 0
  %2057 = vmatpush1.bf16.msra.mxu0 %v1952
  %2058 = vmatprep.mubr.bf16.mxu0 %v1728
  %2059 = vmatmul.mubr.bf16.gmra.mrb[0].mxu0 %v1727
  %v2060 = vpop.f32.mrb[0].mxu0
  %v2061 = vadd.f32 %v2020, %v2060
  %v2062 = vpop.f32.mrb[0].mxu0
  %v2063 = vpop.f32.mrb[0].mxu0
  %v2064 = vadd.f32 %v2023, %v2063
  %v2065 = vpop.f32.mrb[0].mxu0
  %2066 = vdwg.mxu0
  %v2067 = vadd.f32 %v1308, %v2061
  %v2068 = vadd.f32 %v1309, %v2064
  %v2069 = vld [vmem:[%s16] sm:$0x1]
  %v2071 = vlaneseq
  %v2072 = vshrl.u32 %v2071, 7
  %v2073 = vsub.s32 0, %v2072
  %v2074 = vrot.slane %v2069, %v2073
  %v2076 = vadd.f32 %v2067, %v2074
  %v2077 = vadd.f32 %v2068, %v2074
  %s2078 = scalar_lea.vmem %s5, 1
  %v2079 = vld [vmem:[%s2078] sm:$0x1]
  %s2080 = scalar_lea.vmem %s6, 1
  %v2081 = vld [vmem:[%s2080] sm:$0x1]
  %2082 = vadd.xlane.f32.xlu0 %v2076
  %v2083 = vpop.xlane.xlu0 %2082
  %v2084 = vsel %vm235, %v2077, 0.0
  %2085 = vadd.xlane.f32.xlu0 %v2084
  %v2086 = vpop.xlane.xlu0 %2085
  %v2087 = vmul.f32 %v2083, %v239
  %v2088 = vmul.f32 %v2086, %v239
  %v2089 = vsub.f32 %v2076, %v2087
  %v2090 = vsub.f32 %v2077, %v2088
  %v2091 = vmul.f32 %v2089, %v2089
  %v2092 = vmul.f32 %v2090, %v2090
  %2093 = vadd.xlane.f32.xlu0 %v2091
  %v2094 = vpop.xlane.xlu0 %2093
  %v2095 = vsel %vm235, %v2092, 0.0
  %2096 = vadd.xlane.f32.xlu0 %v2095
  %v2097 = vpop.xlane.xlu0 %2096
  %v2098 = vmul.f32 %v2094, %v239
  %v2099 = vmul.f32 %v2097, %v239
  %v2100 = vadd.f32 %v2098, 1e-06
  %v2101 = vadd.f32 %v2099, 1e-06
  %v2102 = vrsqrt.pop %v2100
  %v2103 = vrsqrt.pop %v2101
  %v2104 = vmul.f32 %v2089, %v2102
  %v2105 = vmul.f32 %v2090, %v2103
  %v2107 = vlaneseq
  %v2108 = vshrl.u32 %v2107, 7
  %v2109 = vsub.s32 0, %v2108
  %v2110 = vrot.slane %v2079, %v2109
  %v2112 = vmul.f32 %v2104, %v2110
  %v2113 = vmul.f32 %v2105, %v2110
  %v2115 = vlaneseq
  %v2116 = vshrl.u32 %v2115, 7
  %v2117 = vsub.s32 0, %v2116
  %v2118 = vrot.slane %v2081, %v2117
  %v2120 = vadd.f32 %v2112, %v2118
  %v2121 = vadd.f32 %v2113, %v2118
  %v2122 = vpack.c.bf16 %v2121, %v2120
  %s2123 = scalar_lea.vmem %s7, 192
  %v2124 = vld [vmem:[%s2123] sm:$0xff]
  %v2125 = vld [vmem:[%s2123 + $0x8] sm:$0xf]
  %v2126 = vld [vmem:[%s2123 + $0xc] sm:$0xff]
  %v2127 = vld [vmem:[%s2123 + $0x14] sm:$0xf]
  %v2128 = vld [vmem:[%s2123 + $0x18] sm:$0xff]
  %v2129 = vld [vmem:[%s2123 + $0x20] sm:$0xf]
  %v2130 = vld [vmem:[%s2123 + $0x24] sm:$0xff]
  %v2131 = vld [vmem:[%s2123 + $0x2c] sm:$0xf]
  %v2132 = vld [vmem:[%s2123 + $0x30] sm:$0xff]
  %v2133 = vld [vmem:[%s2123 + $0x38] sm:$0xf]
  %v2134 = vld [vmem:[%s2123 + $0x3c] sm:$0xff]
  %v2135 = vld [vmem:[%s2123 + $0x44] sm:$0xf]
  %v2136 = vld [vmem:[%s2123 + $0x48] sm:$0xff]
  %v2137 = vld [vmem:[%s2123 + $0x50] sm:$0xf]
  %v2138 = vld [vmem:[%s2123 + $0x54] sm:$0xff]
  %v2139 = vld [vmem:[%s2123 + $0x5c] sm:$0xf]
  %v2140 = vld [vmem:[%s2123 + $0x60] sm:$0xff]
  %v2141 = vld [vmem:[%s2123 + $0x68] sm:$0xf]
  %v2142 = vld [vmem:[%s2123 + $0x6c] sm:$0xff]
  %v2143 = vld [vmem:[%s2123 + $0x74] sm:$0xf]
  %v2144 = vld [vmem:[%s2123 + $0x78] sm:$0xff]
  %v2145 = vld [vmem:[%s2123 + $0x80] sm:$0xf]
  %v2146 = vld [vmem:[%s2123 + $0x84] sm:$0xff]
  %v2147 = vld [vmem:[%s2123 + $0x8c] sm:$0xf]
  %v2148 = vld [vmem:[%s2123 + $0x90] sm:$0xff]
  %v2149 = vld [vmem:[%s2123 + $0x98] sm:$0xf]
  %v2150 = vld [vmem:[%s2123 + $0x9c] sm:$0xff]
  %v2151 = vld [vmem:[%s2123 + $0xa4] sm:$0xf]
  %v2152 = vld [vmem:[%s2123 + $0xa8] sm:$0xff]
  %v2153 = vld [vmem:[%s2123 + $0xb0] sm:$0xf]
  %v2154 = vld [vmem:[%s2123 + $0xb4] sm:$0xff]
  %v2155 = vld [vmem:[%s2123 + $0xbc] sm:$0xf]
  %s2156 = scalar_lea.vmem %s8, 3
  %v2157 = vld [vmem:[%s2156] sm:$0x7]
  %v2159 = vlaneseq
  %v2160 = vshrl.u32 %v2159, 7
  %v2161 = vsub.s32 0, %v2160
  %v2162 = vrot.slane %v2157, %v2161
  %v2163 = vlaneseq
  %v2164 = vshrl.u32 %v2163, 7
  %v2165 = vsub.s32 1, %v2164
  %v2166 = vrot.slane %v2157, %v2165
  %v2167 = vlaneseq
  %v2168 = vshrl.u32 %v2167, 7
  %v2169 = vsub.s32 2, %v2168
  %v2170 = vrot.slane %v2157, %v2169
  %v2206 = vunpack.c.l.b16 %v2124
  %v2207 = vunpack.c.h.b16 %v2124
  %v2208 = vunpack.c.l.b16 %v2125
  %v2209 = vunpack.c.l.b16 %v2126
  %v2210 = vunpack.c.h.b16 %v2126
  %v2211 = vunpack.c.l.b16 %v2127
  %v2212 = vunpack.c.l.b16 %v2128
  %v2213 = vunpack.c.h.b16 %v2128
  %v2214 = vunpack.c.l.b16 %v2129
  %v2215 = vunpack.c.l.b16 %v2130
  %v2216 = vunpack.c.h.b16 %v2130
  %v2217 = vunpack.c.l.b16 %v2131
  %v2218 = vunpack.c.l.b16 %v2132
  %v2219 = vunpack.c.h.b16 %v2132
  %v2220 = vunpack.c.l.b16 %v2133
  %v2221 = vunpack.c.l.b16 %v2134
  %v2222 = vunpack.c.h.b16 %v2134
  %v2223 = vunpack.c.l.b16 %v2135
  %v2224 = vunpack.c.l.b16 %v2136
  %v2225 = vunpack.c.h.b16 %v2136
  %v2226 = vunpack.c.l.b16 %v2137
  %v2227 = vunpack.c.l.b16 %v2138
  %v2228 = vunpack.c.h.b16 %v2138
  %v2229 = vunpack.c.l.b16 %v2139
  %v2230 = vunpack.c.l.b16 %v2140
  %v2231 = vunpack.c.h.b16 %v2140
  %v2232 = vunpack.c.l.b16 %v2141
  %v2233 = vunpack.c.l.b16 %v2142
  %v2234 = vunpack.c.h.b16 %v2142
  %v2235 = vunpack.c.l.b16 %v2143
  %v2236 = vunpack.c.l.b16 %v2144
  %v2237 = vunpack.c.h.b16 %v2144
  %v2238 = vunpack.c.l.b16 %v2145
  %v2239 = vunpack.c.l.b16 %v2146
  %v2240 = vunpack.c.h.b16 %v2146
  %v2241 = vunpack.c.l.b16 %v2147
  %v2242 = vunpack.c.l.b16 %v2148
  %v2243 = vunpack.c.h.b16 %v2148
  %v2244 = vunpack.c.l.b16 %v2149
  %v2245 = vunpack.c.l.b16 %v2150
  %v2246 = vunpack.c.h.b16 %v2150
  %v2247 = vunpack.c.l.b16 %v2151
  %v2248 = vunpack.c.l.b16 %v2152
  %v2249 = vunpack.c.h.b16 %v2152
  %v2250 = vunpack.c.l.b16 %v2153
  %v2251 = vunpack.c.l.b16 %v2154
  %v2252 = vunpack.c.h.b16 %v2154
  %v2253 = vunpack.c.l.b16 %v2155
  %v2254 = vpack.c.b16 %v2209, %v2206
  %v2255 = vpack.c.b16 %v2210, %v2207
  %v2256 = vpack.c.b16 %v2211, %v2208
  %v2257 = vpack.c.b16 %v2215, %v2212
  %v2258 = vpack.c.b16 %v2216, %v2213
  %v2259 = vpack.c.b16 %v2217, %v2214
  %v2260 = vpack.c.b16 %v2221, %v2218
  %v2261 = vpack.c.b16 %v2222, %v2219
  %v2262 = vpack.c.b16 %v2223, %v2220
  %v2263 = vpack.c.b16 %v2227, %v2224
  %v2264 = vpack.c.b16 %v2228, %v2225
  %v2265 = vpack.c.b16 %v2229, %v2226
  %v2266 = vpack.c.b16 %v2233, %v2230
  %v2267 = vpack.c.b16 %v2234, %v2231
  %v2268 = vpack.c.b16 %v2235, %v2232
  %v2269 = vpack.c.b16 %v2239, %v2236
  %v2270 = vpack.c.b16 %v2240, %v2237
  %v2271 = vpack.c.b16 %v2241, %v2238
  %v2272 = vpack.c.b16 %v2245, %v2242
  %v2273 = vpack.c.b16 %v2246, %v2243
  %v2274 = vpack.c.b16 %v2247, %v2244
  %v2275 = vpack.c.b16 %v2251, %v2248
  %v2276 = vpack.c.b16 %v2252, %v2249
  %v2277 = vpack.c.b16 %v2253, %v2250
  %2302 = vmatprep.subr.bf16.mxu0 %v2255
  %2303 = vmatpush1.bf16.msra.mxu0 %v2254
  %2304 = vmatprep.subr.bf16.mxu0 %v2258
  %2305 = vmatpush1.bf16.msra.mxu0 %v2257
  %2306 = vmatprep.subr.bf16.mxu0 %v2261
  %2307 = vmatpush1.bf16.msra.mxu0 %v2260
  %2308 = vmatprep.subr.bf16.mxu0 %v2264
  %2309 = vmatpush1.bf16.msra.mxu0 %v2263
  %2310 = vmatprep.subr.bf16.mxu0 %v2267
  %2311 = vmatpush1.bf16.msra.mxu0 %v2266
  %2312 = vmatprep.subr.bf16.mxu0 %v2270
  %2313 = vmatpush1.bf16.msra.mxu0 %v2269
  %2314 = vmatprep.subr.bf16.mxu0 %v2273
  %2315 = vmatpush1.bf16.msra.mxu0 %v2272
  %2316 = vmatprep.subr.bf16.mxu0 %v2276
  %2317 = vmatpush1.bf16.msra.mxu0 %v2275
  %2318 = vmatprep.subr.bf16.mxu0 0
  %2319 = vmatpush1.bf16.msra.mxu0 0
  %2320 = vmatprep.subr.bf16.mxu0 0
  %2321 = vmatpush1.bf16.msra.mxu0 0
  %2322 = vmatprep.subr.bf16.mxu0 0
  %2323 = vmatpush1.bf16.msra.mxu0 0
  %2324 = vmatprep.subr.bf16.mxu0 0
  %2325 = vmatpush1.bf16.msra.mxu0 0
  %2326 = vmatprep.subr.bf16.mxu0 0
  %2327 = vmatpush1.bf16.msra.mxu0 0
  %2328 = vmatprep.subr.bf16.mxu0 0
  %2329 = vmatpush1.bf16.msra.mxu0 0
  %2330 = vmatprep.subr.bf16.mxu0 0
  %2331 = vmatpush1.bf16.msra.mxu0 0
  %2332 = vmatprep.subr.bf16.mxu0 0
  %2333 = vmatpush1.bf16.msra.mxu0 0
  %2334 = vmatprep.mubr.bf16.mxu0 0
  %2335 = vmatmul.mubr.bf16.gmra.mrb[0].mxu0 %v2122
  %v2336 = vpop.f32.mrb[0].mxu0
  %v2337 = vadd.f32 %v2162, %v2336
  %v2338 = vpop.f32.mrb[0].mxu0
  %v2339 = vadd.f32 %v2166, %v2338
  %v2340 = vpop.f32.mrb[0].mxu0
  %v2341 = vadd.f32 %v2162, %v2340
  %v2342 = vpop.f32.mrb[0].mxu0
  %v2343 = vadd.f32 %v2166, %v2342
  %2344 = vdwg.mxu0
  %2345 = vmatprep.subr.bf16.mxu0 0
  %2346 = vmatpush1.bf16.msra.mxu0 %v2256
  %2347 = vmatprep.subr.bf16.mxu0 0
  %2348 = vmatpush1.bf16.msra.mxu0 %v2259
  %2349 = vmatprep.subr.bf16.mxu0 0
  %2350 = vmatpush1.bf16.msra.mxu0 %v2262
  %2351 = vmatprep.subr.bf16.mxu0 0
  %2352 = vmatpush1.bf16.msra.mxu0 %v2265
  %2353 = vmatprep.subr.bf16.mxu0 0
  %2354 = vmatpush1.bf16.msra.mxu0 %v2268
  %2355 = vmatprep.subr.bf16.mxu0 0
  %2356 = vmatpush1.bf16.msra.mxu0 %v2271
  %2357 = vmatprep.subr.bf16.mxu0 0
  %2358 = vmatpush1.bf16.msra.mxu0 %v2274
  %2359 = vmatprep.subr.bf16.mxu0 0
  %2360 = vmatpush1.bf16.msra.mxu0 %v2277
  %2361 = vmatprep.subr.bf16.mxu0 0
  %2362 = vmatpush1.bf16.msra.mxu0 0
  %2363 = vmatprep.subr.bf16.mxu0 0
  %2364 = vmatpush1.bf16.msra.mxu0 0
  %2365 = vmatprep.subr.bf16.mxu0 0
  %2366 = vmatpush1.bf16.msra.mxu0 0
  %2367 = vmatprep.subr.bf16.mxu0 0
  %2368 = vmatpush1.bf16.msra.mxu0 0
  %2369 = vmatprep.subr.bf16.mxu0 0
  %2370 = vmatpush1.bf16.msra.mxu0 0
  %2371 = vmatprep.subr.bf16.mxu0 0
  %2372 = vmatpush1.bf16.msra.mxu0 0
  %2373 = vmatprep.subr.bf16.mxu0 0
  %2374 = vmatpush1.bf16.msra.mxu0 0
  %2375 = vmatprep.subr.bf16.mxu0 0
  %2376 = vmatpush1.bf16.msra.mxu0 0
  %2377 = vmatprep.mubr.bf16.mxu0 0
  %2378 = vmatmul.mubr.bf16.gmra.mrb[0].mxu0 %v2122
  %v2379 = vpop.f32.mrb[0].mxu0
  %v2380 = vadd.f32 %v2170, %v2379
  %v2381 = vpop.f32.mrb[0].mxu0
  %v2382 = vpop.f32.mrb[0].mxu0
  %v2383 = vadd.f32 %v2170, %v2382
  %v2384 = vpop.f32.mrb[0].mxu0
  %2385 = vdwg.mxu0
  %s2386 = scalar_lea.vmem %s9, 64
  %v2387 = vld [vmem:[%s2386] sm:$0xf]
  %v2388 = vld [vmem:[%s2386 + $0x4] sm:$0xf]
  %v2389 = vld [vmem:[%s2386 + $0x8] sm:$0xf]
  %v2390 = vld [vmem:[%s2386 + $0xc] sm:$0xf]
  %v2391 = vld [vmem:[%s2386 + $0x10] sm:$0xf]
  %v2392 = vld [vmem:[%s2386 + $0x14] sm:$0xf]
  %v2393 = vld [vmem:[%s2386 + $0x18] sm:$0xf]
  %v2394 = vld [vmem:[%s2386 + $0x1c] sm:$0xf]
  %v2395 = vld [vmem:[%s2386 + $0x20] sm:$0xf]
  %v2396 = vld [vmem:[%s2386 + $0x24] sm:$0xf]
  %v2397 = vld [vmem:[%s2386 + $0x28] sm:$0xf]
  %v2398 = vld [vmem:[%s2386 + $0x2c] sm:$0xf]
  %v2399 = vld [vmem:[%s2386 + $0x30] sm:$0xf]
  %v2400 = vld [vmem:[%s2386 + $0x34] sm:$0xf]
  %v2401 = vld [vmem:[%s2386 + $0x38] sm:$0xf]
  %v2402 = vld [vmem:[%s2386 + $0x3c] sm:$0xf]
  %s2403 = scalar_lea.vmem %s10, 1
  %v2404 = vld [vmem:[%s2403] sm:$0x1]
  %v2406 = vlaneseq
  %v2407 = vshrl.u32 %v2406, 7
  %v2408 = vsub.s32 0, %v2407
  %v2409 = vrot.slane %v2404, %v2408
  %v2411 = vadd.f32 %v2076, %v2409
  %v2412 = vadd.f32 %v2077, %v2409
  %v2413 = vpack.c.bf16 %v2341, %v2337
  %v2414 = vpack.c.bf16 %v2343, %v2339
  %v2415 = vpack.c.bf16 %v2383, %v2380
  %v2417 = vsel %vm565, %v2413, 0
  %v2420 = vsel %vm565, %v2414, 0
  %2422 = vmatprep.subr.bf16.mxu0 0
  %2423 = vmatpush1.bf16.xpose.msra.mxu0 %v2420
  %2424 = vmatprep.subr.bf16.mxu0 0
  %2425 = vmatpush1.bf16.xpose.msra.mxu0 0
  %2426 = vmatprep.subr.bf16.mxu0 0
  %2427 = vmatpush1.bf16.xpose.msra.mxu0 0
  %2428 = vmatprep.subr.bf16.mxu0 0
  %2429 = vmatpush1.bf16.xpose.msra.mxu0 0
  %2430 = vmatprep.subr.bf16.mxu0 0
  %2431 = vmatpush1.bf16.xpose.msra.mxu0 0
  %2432 = vmatprep.subr.bf16.mxu0 0
  %2433 = vmatpush1.bf16.xpose.msra.mxu0 0
  %2434 = vmatprep.subr.bf16.mxu0 0
  %2435 = vmatpush1.bf16.xpose.msra.mxu0 0
  %2436 = vmatprep.subr.bf16.mxu0 0
  %2437 = vmatpush1.bf16.xpose.msra.mxu0 0
  %2438 = vmatprep.subr.bf16.mxu0 0
  %2439 = vmatpush1.bf16.xpose.msra.mxu0 0
  %2440 = vmatprep.subr.bf16.mxu0 0
  %2441 = vmatpush1.bf16.xpose.msra.mxu0 0
  %2442 = vmatprep.subr.bf16.mxu0 0
  %2443 = vmatpush1.bf16.xpose.msra.mxu0 0
  %2444 = vmatprep.subr.bf16.mxu0 0
  %2445 = vmatpush1.bf16.xpose.msra.mxu0 0
  %2446 = vmatprep.subr.bf16.mxu0 0
  %2447 = vmatpush1.bf16.xpose.msra.mxu0 0
  %2448 = vmatprep.subr.bf16.mxu0 0
  %2449 = vmatpush1.bf16.xpose.msra.mxu0 0
  %2450 = vmatprep.subr.bf16.mxu0 0
  %2451 = vmatpush1.bf16.xpose.msra.mxu0 0
  %2452 = vmatprep.subr.bf16.mxu0 0
  %2453 = vmatpush1.bf16.xpose.msra.mxu0 0
  %2454 = vmatprep.mubr.bf16.mxu0 0
  %2455 = vmatmul.mubr.bf16.gmra.mrb[0].mxu0 %v2417
  %v2456 = vpop.f32.mrb[0].mxu0
  %v2457 = vadd.f32 0.0, %v2456
  %v2458 = vpop.f32.mrb[0].mxu0
  %v2459 = vpop.f32.mrb[0].mxu0
  %v2460 = vadd.f32 0.0, %v2459
  %v2461 = vpop.f32.mrb[0].mxu0
  %2462 = vdwg.mxu0
  %v2463 = vmul.f32 %v2457, 0.17677669
  %v2464 = vmul.f32 %v2460, 0.17677669
  %v2465 = vadd.f32 %v2463, %v75
  %v2466 = vadd.f32 %v2464, %v76
  %v2467 = vsel %vm617, %v2465, -inf
  %2468 = vmax.xlane.f32.xlu0 %v2467
  %v2469 = vpop.xlane.xlu0 %2468
  %v2470 = vsel %vm621, %v2466, -inf
  %2471 = vmax.xlane.f32.xlu0 %v2470
  %v2472 = vpop.xlane.xlu0 %2471
  %v2473 = vsub.f32 %v2465, %v2469
  %v2474 = vsub.f32 %v2466, %v2472
  %v2475 = vmul.f32 %v2473, 1.442695
  %v2476 = vpow.pop %v2475
  %v2477 = vmul.f32 %v2474, 1.442695
  %v2478 = vpow.pop %v2477
  %v2479 = vsel %vm617, %v2476, 0.0
  %2480 = vadd.xlane.f32.xlu0 %v2479
  %v2481 = vpop.xlane.xlu0 %2480
  %v2482 = vsel %vm621, %v2478, 0.0
  %2483 = vadd.xlane.f32.xlu0 %v2482
  %v2484 = vpop.xlane.xlu0 %2483
  %v2485 = vpack.c.bf16 %v2478, %v2476
  %v2487 = vsel %vm617, %v2485, 0
  %v2490 = vsel %vm641, %v2415, 0
  %2492 = vmatprep.subr.bf16.mxu0 0
  %2493 = vmatpush1.bf16.msra.mxu0 %v2490
  %2494 = vmatprep.subr.bf16.mxu0 0
  %2495 = vmatpush1.bf16.msra.mxu0 0
  %2496 = vmatprep.subr.bf16.mxu0 0
  %2497 = vmatpush1.bf16.msra.mxu0 0
  %2498 = vmatprep.subr.bf16.mxu0 0
  %2499 = vmatpush1.bf16.msra.mxu0 0
  %2500 = vmatprep.subr.bf16.mxu0 0
  %2501 = vmatpush1.bf16.msra.mxu0 0
  %2502 = vmatprep.subr.bf16.mxu0 0
  %2503 = vmatpush1.bf16.msra.mxu0 0
  %2504 = vmatprep.subr.bf16.mxu0 0
  %2505 = vmatpush1.bf16.msra.mxu0 0
  %2506 = vmatprep.subr.bf16.mxu0 0
  %2507 = vmatpush1.bf16.msra.mxu0 0
  %2508 = vmatprep.subr.bf16.mxu0 0
  %2509 = vmatpush1.bf16.msra.mxu0 0
  %2510 = vmatprep.subr.bf16.mxu0 0
  %2511 = vmatpush1.bf16.msra.mxu0 0
  %2512 = vmatprep.subr.bf16.mxu0 0
  %2513 = vmatpush1.bf16.msra.mxu0 0
  %2514 = vmatprep.subr.bf16.mxu0 0
  %2515 = vmatpush1.bf16.msra.mxu0 0
  %2516 = vmatprep.subr.bf16.mxu0 0
  %2517 = vmatpush1.bf16.msra.mxu0 0
  %2518 = vmatprep.subr.bf16.mxu0 0
  %2519 = vmatpush1.bf16.msra.mxu0 0
  %2520 = vmatprep.subr.bf16.mxu0 0
  %2521 = vmatpush1.bf16.msra.mxu0 0
  %2522 = vmatprep.subr.bf16.mxu0 0
  %2523 = vmatpush1.bf16.msra.mxu0 0
  %2524 = vmatprep.mubr.bf16.mxu0 0
  %2525 = vmatmul.mubr.bf16.gmra.mrb[0].mxu0 %v2487
  %v2526 = vpop.f32.mrb[0].mxu0
  %v2527 = vadd.f32 0.0, %v2526
  %v2528 = vpop.f32.mrb[0].mxu0
  %v2529 = vpop.f32.mrb[0].mxu0
  %v2530 = vadd.f32 0.0, %v2529
  %v2531 = vpop.f32.mrb[0].mxu0
  %2532 = vdwg.mxu0
  %v2533 = vrcp.pop %v2481
  %v2534 = vmul.f32 %v2527, %v2533
  %v2535 = vrcp.pop %v2484
  %v2536 = vmul.f32 %v2530, %v2535
  %v2537 = vpack.c.bf16 %v2536, %v2534
  %v2542 = vunpack.c.l.b16 %v2387
  %v2543 = vunpack.c.l.b16 %v2388
  %v2544 = vunpack.c.l.b16 %v2389
  %v2545 = vunpack.c.l.b16 %v2390
  %v2546 = vpack.c.b16 %v2543, %v2542
  %v2547 = vpack.c.b16 %v2545, %v2544
  %v2551 = vsel %vm565, %v2537, 0
  %2553 = vmatprep.subr.bf16.mxu0 0
  %2554 = vmatpush1.bf16.msra.mxu0 %v2546
  %2555 = vmatprep.subr.bf16.mxu0 0
  %2556 = vmatpush1.bf16.msra.mxu0 %v2547
  %2557 = vmatprep.subr.bf16.mxu0 0
  %2558 = vmatpush1.bf16.msra.mxu0 0
  %2559 = vmatprep.subr.bf16.mxu0 0
  %2560 = vmatpush1.bf16.msra.mxu0 0
  %2561 = vmatprep.subr.bf16.mxu0 0
  %2562 = vmatpush1.bf16.msra.mxu0 0
  %2563 = vmatprep.subr.bf16.mxu0 0
  %2564 = vmatpush1.bf16.msra.mxu0 0
  %2565 = vmatprep.subr.bf16.mxu0 0
  %2566 = vmatpush1.bf16.msra.mxu0 0
  %2567 = vmatprep.subr.bf16.mxu0 0
  %2568 = vmatpush1.bf16.msra.mxu0 0
  %2569 = vmatprep.subr.bf16.mxu0 0
  %2570 = vmatpush1.bf16.msra.mxu0 0
  %2571 = vmatprep.subr.bf16.mxu0 0
  %2572 = vmatpush1.bf16.msra.mxu0 0
  %2573 = vmatprep.subr.bf16.mxu0 0
  %2574 = vmatpush1.bf16.msra.mxu0 0
  %2575 = vmatprep.subr.bf16.mxu0 0
  %2576 = vmatpush1.bf16.msra.mxu0 0
  %2577 = vmatprep.subr.bf16.mxu0 0
  %2578 = vmatpush1.bf16.msra.mxu0 0
  %2579 = vmatprep.subr.bf16.mxu0 0
  %2580 = vmatpush1.bf16.msra.mxu0 0
  %2581 = vmatprep.subr.bf16.mxu0 0
  %2582 = vmatpush1.bf16.msra.mxu0 0
  %2583 = vmatprep.subr.bf16.mxu0 0
  %2584 = vmatpush1.bf16.msra.mxu0 0
  %2585 = vmatprep.mubr.bf16.mxu0 0
  %2586 = vmatmul.mubr.bf16.gmra.mrb[0].mxu0 %v2551
  %v2587 = vpop.f32.mrb[0].mxu0
  %v2588 = vadd.f32 0.0, %v2587
  %v2589 = vpop.f32.mrb[0].mxu0
  %v2590 = vpop.f32.mrb[0].mxu0
  %v2591 = vadd.f32 0.0, %v2590
  %v2592 = vpop.f32.mrb[0].mxu0
  %2593 = vdwg.mxu0
  %v2594 = vadd.f32 %v2411, %v2588
  %v2595 = vadd.f32 %v2412, %v2591
  %2597 = vrot.lane.b32.xlu0 %v2413, 96
  %v2598 = vpop.permute.xlu0 %2597
  %2600 = vrot.lane.b32.xlu0 %v2414, 96
  %v2601 = vpop.permute.xlu0 %2600
  %v2603 = vsel %vm565, %v2598, 0
  %v2606 = vsel %vm565, %v2601, 0
  %2608 = vmatprep.subr.bf16.mxu0 0
  %2609 = vmatpush1.bf16.xpose.msra.mxu0 %v2606
  %2610 = vmatprep.subr.bf16.mxu0 0
  %2611 = vmatpush1.bf16.xpose.msra.mxu0 0
  %2612 = vmatprep.subr.bf16.mxu0 0
  %2613 = vmatpush1.bf16.xpose.msra.mxu0 0
  %2614 = vmatprep.subr.bf16.mxu0 0
  %2615 = vmatpush1.bf16.xpose.msra.mxu0 0
  %2616 = vmatprep.subr.bf16.mxu0 0
  %2617 = vmatpush1.bf16.xpose.msra.mxu0 0
  %2618 = vmatprep.subr.bf16.mxu0 0
  %2619 = vmatpush1.bf16.xpose.msra.mxu0 0
  %2620 = vmatprep.subr.bf16.mxu0 0
  %2621 = vmatpush1.bf16.xpose.msra.mxu0 0
  %2622 = vmatprep.subr.bf16.mxu0 0
  %2623 = vmatpush1.bf16.xpose.msra.mxu0 0
  %2624 = vmatprep.subr.bf16.mxu0 0
  %2625 = vmatpush1.bf16.xpose.msra.mxu0 0
  %2626 = vmatprep.subr.bf16.mxu0 0
  %2627 = vmatpush1.bf16.xpose.msra.mxu0 0
  %2628 = vmatprep.subr.bf16.mxu0 0
  %2629 = vmatpush1.bf16.xpose.msra.mxu0 0
  %2630 = vmatprep.subr.bf16.mxu0 0
  %2631 = vmatpush1.bf16.xpose.msra.mxu0 0
  %2632 = vmatprep.subr.bf16.mxu0 0
  %2633 = vmatpush1.bf16.xpose.msra.mxu0 0
  %2634 = vmatprep.subr.bf16.mxu0 0
  %2635 = vmatpush1.bf16.xpose.msra.mxu0 0
  %2636 = vmatprep.subr.bf16.mxu0 0
  %2637 = vmatpush1.bf16.xpose.msra.mxu0 0
  %2638 = vmatprep.subr.bf16.mxu0 0
  %2639 = vmatpush1.bf16.xpose.msra.mxu0 0
  %2640 = vmatprep.mubr.bf16.mxu0 0
  %2641 = vmatmul.mubr.bf16.gmra.mrb[0].mxu0 %v2603
  %v2642 = vpop.f32.mrb[0].mxu0
  %v2643 = vadd.f32 0.0, %v2642
  %v2644 = vpop.f32.mrb[0].mxu0
  %v2645 = vpop.f32.mrb[0].mxu0
  %v2646 = vadd.f32 0.0, %v2645
  %v2647 = vpop.f32.mrb[0].mxu0
  %2648 = vdwg.mxu0
  %v2649 = vmul.f32 %v2643, 0.17677669
  %v2650 = vmul.f32 %v2646, 0.17677669
  %v2651 = vadd.f32 %v2649, %v75
  %v2652 = vadd.f32 %v2650, %v76
  %v2653 = vsel %vm617, %v2651, -inf
  %2654 = vmax.xlane.f32.xlu0 %v2653
  %v2655 = vpop.xlane.xlu0 %2654
  %v2656 = vsel %vm621, %v2652, -inf
  %2657 = vmax.xlane.f32.xlu0 %v2656
  %v2658 = vpop.xlane.xlu0 %2657
  %v2659 = vsub.f32 %v2651, %v2655
  %v2660 = vsub.f32 %v2652, %v2658
  %v2661 = vmul.f32 %v2659, 1.442695
  %v2662 = vpow.pop %v2661
  %v2663 = vmul.f32 %v2660, 1.442695
  %v2664 = vpow.pop %v2663
  %v2665 = vsel %vm617, %v2662, 0.0
  %2666 = vadd.xlane.f32.xlu0 %v2665
  %v2667 = vpop.xlane.xlu0 %2666
  %v2668 = vsel %vm621, %v2664, 0.0
  %2669 = vadd.xlane.f32.xlu0 %v2668
  %v2670 = vpop.xlane.xlu0 %2669
  %v2671 = vpack.c.bf16 %v2664, %v2662
  %2673 = vrot.lane.b32.xlu0 %v2415, 96
  %v2674 = vpop.permute.xlu0 %2673
  %v2676 = vsel %vm617, %v2671, 0
  %v2679 = vsel %vm641, %v2674, 0
  %2681 = vmatprep.subr.bf16.mxu0 0
  %2682 = vmatpush1.bf16.msra.mxu0 %v2679
  %2683 = vmatprep.subr.bf16.mxu0 0
  %2684 = vmatpush1.bf16.msra.mxu0 0
  %2685 = vmatprep.subr.bf16.mxu0 0
  %2686 = vmatpush1.bf16.msra.mxu0 0
  %2687 = vmatprep.subr.bf16.mxu0 0
  %2688 = vmatpush1.bf16.msra.mxu0 0
  %2689 = vmatprep.subr.bf16.mxu0 0
  %2690 = vmatpush1.bf16.msra.mxu0 0
  %2691 = vmatprep.subr.bf16.mxu0 0
  %2692 = vmatpush1.bf16.msra.mxu0 0
  %2693 = vmatprep.subr.bf16.mxu0 0
  %2694 = vmatpush1.bf16.msra.mxu0 0
  %2695 = vmatprep.subr.bf16.mxu0 0
  %2696 = vmatpush1.bf16.msra.mxu0 0
  %2697 = vmatprep.subr.bf16.mxu0 0
  %2698 = vmatpush1.bf16.msra.mxu0 0
  %2699 = vmatprep.subr.bf16.mxu0 0
  %2700 = vmatpush1.bf16.msra.mxu0 0
  %2701 = vmatprep.subr.bf16.mxu0 0
  %2702 = vmatpush1.bf16.msra.mxu0 0
  %2703 = vmatprep.subr.bf16.mxu0 0
  %2704 = vmatpush1.bf16.msra.mxu0 0
  %2705 = vmatprep.subr.bf16.mxu0 0
  %2706 = vmatpush1.bf16.msra.mxu0 0
  %2707 = vmatprep.subr.bf16.mxu0 0
  %2708 = vmatpush1.bf16.msra.mxu0 0
  %2709 = vmatprep.subr.bf16.mxu0 0
  %2710 = vmatpush1.bf16.msra.mxu0 0
  %2711 = vmatprep.subr.bf16.mxu0 0
  %2712 = vmatpush1.bf16.msra.mxu0 0
  %2713 = vmatprep.mubr.bf16.mxu0 0
  %2714 = vmatmul.mubr.bf16.gmra.mrb[0].mxu0 %v2676
  %v2715 = vpop.f32.mrb[0].mxu0
  %v2716 = vadd.f32 0.0, %v2715
  %v2717 = vpop.f32.mrb[0].mxu0
  %v2718 = vpop.f32.mrb[0].mxu0
  %v2719 = vadd.f32 0.0, %v2718
  %v2720 = vpop.f32.mrb[0].mxu0
  %2721 = vdwg.mxu0
  %v2722 = vrcp.pop %v2667
  %v2723 = vmul.f32 %v2716, %v2722
  %v2724 = vrcp.pop %v2670
  %v2725 = vmul.f32 %v2719, %v2724
  %v2726 = vpack.c.bf16 %v2725, %v2723
  %v2731 = vunpack.c.l.b16 %v2391
  %v2732 = vunpack.c.l.b16 %v2392
  %v2733 = vunpack.c.l.b16 %v2393
  %v2734 = vunpack.c.l.b16 %v2394
  %v2735 = vpack.c.b16 %v2732, %v2731
  %v2736 = vpack.c.b16 %v2734, %v2733
  %v2740 = vsel %vm565, %v2726, 0
  %2742 = vmatprep.subr.bf16.mxu0 0
  %2743 = vmatpush1.bf16.msra.mxu0 %v2735
  %2744 = vmatprep.subr.bf16.mxu0 0
  %2745 = vmatpush1.bf16.msra.mxu0 %v2736
  %2746 = vmatprep.subr.bf16.mxu0 0
  %2747 = vmatpush1.bf16.msra.mxu0 0
  %2748 = vmatprep.subr.bf16.mxu0 0
  %2749 = vmatpush1.bf16.msra.mxu0 0
  %2750 = vmatprep.subr.bf16.mxu0 0
  %2751 = vmatpush1.bf16.msra.mxu0 0
  %2752 = vmatprep.subr.bf16.mxu0 0
  %2753 = vmatpush1.bf16.msra.mxu0 0
  %2754 = vmatprep.subr.bf16.mxu0 0
  %2755 = vmatpush1.bf16.msra.mxu0 0
  %2756 = vmatprep.subr.bf16.mxu0 0
  %2757 = vmatpush1.bf16.msra.mxu0 0
  %2758 = vmatprep.subr.bf16.mxu0 0
  %2759 = vmatpush1.bf16.msra.mxu0 0
  %2760 = vmatprep.subr.bf16.mxu0 0
  %2761 = vmatpush1.bf16.msra.mxu0 0
  %2762 = vmatprep.subr.bf16.mxu0 0
  %2763 = vmatpush1.bf16.msra.mxu0 0
  %2764 = vmatprep.subr.bf16.mxu0 0
  %2765 = vmatpush1.bf16.msra.mxu0 0
  %2766 = vmatprep.subr.bf16.mxu0 0
  %2767 = vmatpush1.bf16.msra.mxu0 0
  %2768 = vmatprep.subr.bf16.mxu0 0
  %2769 = vmatpush1.bf16.msra.mxu0 0
  %2770 = vmatprep.subr.bf16.mxu0 0
  %2771 = vmatpush1.bf16.msra.mxu0 0
  %2772 = vmatprep.subr.bf16.mxu0 0
  %2773 = vmatpush1.bf16.msra.mxu0 0
  %2774 = vmatprep.mubr.bf16.mxu0 0
  %2775 = vmatmul.mubr.bf16.gmra.mrb[0].mxu0 %v2740
  %v2776 = vpop.f32.mrb[0].mxu0
  %v2777 = vadd.f32 0.0, %v2776
  %v2778 = vpop.f32.mrb[0].mxu0
  %v2779 = vpop.f32.mrb[0].mxu0
  %v2780 = vadd.f32 0.0, %v2779
  %v2781 = vpop.f32.mrb[0].mxu0
  %2782 = vdwg.mxu0
  %v2783 = vadd.f32 %v2594, %v2777
  %v2784 = vadd.f32 %v2595, %v2780
  %2785 = vrot.lane.b32.xlu0 %v2413, 64
  %v2786 = vpop.permute.xlu0 %2785
  %2787 = vrot.lane.b32.xlu0 %v2414, 64
  %v2788 = vpop.permute.xlu0 %2787
  %v2790 = vsel %vm565, %v2786, 0
  %v2793 = vsel %vm565, %v2788, 0
  %2795 = vmatprep.subr.bf16.mxu0 0
  %2796 = vmatpush1.bf16.xpose.msra.mxu0 %v2793
  %2797 = vmatprep.subr.bf16.mxu0 0
  %2798 = vmatpush1.bf16.xpose.msra.mxu0 0
  %2799 = vmatprep.subr.bf16.mxu0 0
  %2800 = vmatpush1.bf16.xpose.msra.mxu0 0
  %2801 = vmatprep.subr.bf16.mxu0 0
  %2802 = vmatpush1.bf16.xpose.msra.mxu0 0
  %2803 = vmatprep.subr.bf16.mxu0 0
  %2804 = vmatpush1.bf16.xpose.msra.mxu0 0
  %2805 = vmatprep.subr.bf16.mxu0 0
  %2806 = vmatpush1.bf16.xpose.msra.mxu0 0
  %2807 = vmatprep.subr.bf16.mxu0 0
  %2808 = vmatpush1.bf16.xpose.msra.mxu0 0
  %2809 = vmatprep.subr.bf16.mxu0 0
  %2810 = vmatpush1.bf16.xpose.msra.mxu0 0
  %2811 = vmatprep.subr.bf16.mxu0 0
  %2812 = vmatpush1.bf16.xpose.msra.mxu0 0
  %2813 = vmatprep.subr.bf16.mxu0 0
  %2814 = vmatpush1.bf16.xpose.msra.mxu0 0
  %2815 = vmatprep.subr.bf16.mxu0 0
  %2816 = vmatpush1.bf16.xpose.msra.mxu0 0
  %2817 = vmatprep.subr.bf16.mxu0 0
  %2818 = vmatpush1.bf16.xpose.msra.mxu0 0
  %2819 = vmatprep.subr.bf16.mxu0 0
  %2820 = vmatpush1.bf16.xpose.msra.mxu0 0
  %2821 = vmatprep.subr.bf16.mxu0 0
  %2822 = vmatpush1.bf16.xpose.msra.mxu0 0
  %2823 = vmatprep.subr.bf16.mxu0 0
  %2824 = vmatpush1.bf16.xpose.msra.mxu0 0
  %2825 = vmatprep.subr.bf16.mxu0 0
  %2826 = vmatpush1.bf16.xpose.msra.mxu0 0
  %2827 = vmatprep.mubr.bf16.mxu0 0
  %2828 = vmatmul.mubr.bf16.gmra.mrb[0].mxu0 %v2790
  %v2829 = vpop.f32.mrb[0].mxu0
  %v2830 = vadd.f32 0.0, %v2829
  %v2831 = vpop.f32.mrb[0].mxu0
  %v2832 = vpop.f32.mrb[0].mxu0
  %v2833 = vadd.f32 0.0, %v2832
  %v2834 = vpop.f32.mrb[0].mxu0
  %2835 = vdwg.mxu0
  %v2836 = vmul.f32 %v2830, 0.17677669
  %v2837 = vmul.f32 %v2833, 0.17677669
  %v2838 = vadd.f32 %v2836, %v75
  %v2839 = vadd.f32 %v2837, %v76
  %v2840 = vsel %vm617, %v2838, -inf
  %2841 = vmax.xlane.f32.xlu0 %v2840
  %v2842 = vpop.xlane.xlu0 %2841
  %v2843 = vsel %vm621, %v2839, -inf
  %2844 = vmax.xlane.f32.xlu0 %v2843
  %v2845 = vpop.xlane.xlu0 %2844
  %v2846 = vsub.f32 %v2838, %v2842
  %v2847 = vsub.f32 %v2839, %v2845
  %v2848 = vmul.f32 %v2846, 1.442695
  %v2849 = vpow.pop %v2848
  %v2850 = vmul.f32 %v2847, 1.442695
  %v2851 = vpow.pop %v2850
  %v2852 = vsel %vm617, %v2849, 0.0
  %2853 = vadd.xlane.f32.xlu0 %v2852
  %v2854 = vpop.xlane.xlu0 %2853
  %v2855 = vsel %vm621, %v2851, 0.0
  %2856 = vadd.xlane.f32.xlu0 %v2855
  %v2857 = vpop.xlane.xlu0 %2856
  %v2858 = vpack.c.bf16 %v2851, %v2849
  %2859 = vrot.lane.b32.xlu0 %v2415, 64
  %v2860 = vpop.permute.xlu0 %2859
  %v2862 = vsel %vm617, %v2858, 0
  %v2865 = vsel %vm641, %v2860, 0
  %2867 = vmatprep.subr.bf16.mxu0 0
  %2868 = vmatpush1.bf16.msra.mxu0 %v2865
  %2869 = vmatprep.subr.bf16.mxu0 0
  %2870 = vmatpush1.bf16.msra.mxu0 0
  %2871 = vmatprep.subr.bf16.mxu0 0
  %2872 = vmatpush1.bf16.msra.mxu0 0
  %2873 = vmatprep.subr.bf16.mxu0 0
  %2874 = vmatpush1.bf16.msra.mxu0 0
  %2875 = vmatprep.subr.bf16.mxu0 0
  %2876 = vmatpush1.bf16.msra.mxu0 0
  %2877 = vmatprep.subr.bf16.mxu0 0
  %2878 = vmatpush1.bf16.msra.mxu0 0
  %2879 = vmatprep.subr.bf16.mxu0 0
  %2880 = vmatpush1.bf16.msra.mxu0 0
  %2881 = vmatprep.subr.bf16.mxu0 0
  %2882 = vmatpush1.bf16.msra.mxu0 0
  %2883 = vmatprep.subr.bf16.mxu0 0
  %2884 = vmatpush1.bf16.msra.mxu0 0
  %2885 = vmatprep.subr.bf16.mxu0 0
  %2886 = vmatpush1.bf16.msra.mxu0 0
  %2887 = vmatprep.subr.bf16.mxu0 0
  %2888 = vmatpush1.bf16.msra.mxu0 0
  %2889 = vmatprep.subr.bf16.mxu0 0
  %2890 = vmatpush1.bf16.msra.mxu0 0
  %2891 = vmatprep.subr.bf16.mxu0 0
  %2892 = vmatpush1.bf16.msra.mxu0 0
  %2893 = vmatprep.subr.bf16.mxu0 0
  %2894 = vmatpush1.bf16.msra.mxu0 0
  %2895 = vmatprep.subr.bf16.mxu0 0
  %2896 = vmatpush1.bf16.msra.mxu0 0
  %2897 = vmatprep.subr.bf16.mxu0 0
  %2898 = vmatpush1.bf16.msra.mxu0 0
  %2899 = vmatprep.mubr.bf16.mxu0 0
  %2900 = vmatmul.mubr.bf16.gmra.mrb[0].mxu0 %v2862
  %v2901 = vpop.f32.mrb[0].mxu0
  %v2902 = vadd.f32 0.0, %v2901
  %v2903 = vpop.f32.mrb[0].mxu0
  %v2904 = vpop.f32.mrb[0].mxu0
  %v2905 = vadd.f32 0.0, %v2904
  %v2906 = vpop.f32.mrb[0].mxu0
  %2907 = vdwg.mxu0
  %v2908 = vrcp.pop %v2854
  %v2909 = vmul.f32 %v2902, %v2908
  %v2910 = vrcp.pop %v2857
  %v2911 = vmul.f32 %v2905, %v2910
  %v2912 = vpack.c.bf16 %v2911, %v2909
  %v2917 = vunpack.c.l.b16 %v2395
  %v2918 = vunpack.c.l.b16 %v2396
  %v2919 = vunpack.c.l.b16 %v2397
  %v2920 = vunpack.c.l.b16 %v2398
  %v2921 = vpack.c.b16 %v2918, %v2917
  %v2922 = vpack.c.b16 %v2920, %v2919
  %v2926 = vsel %vm565, %v2912, 0
  %2928 = vmatprep.subr.bf16.mxu0 0
  %2929 = vmatpush1.bf16.msra.mxu0 %v2921
  %2930 = vmatprep.subr.bf16.mxu0 0
  %2931 = vmatpush1.bf16.msra.mxu0 %v2922
  %2932 = vmatprep.subr.bf16.mxu0 0
  %2933 = vmatpush1.bf16.msra.mxu0 0
  %2934 = vmatprep.subr.bf16.mxu0 0
  %2935 = vmatpush1.bf16.msra.mxu0 0
  %2936 = vmatprep.subr.bf16.mxu0 0
  %2937 = vmatpush1.bf16.msra.mxu0 0
  %2938 = vmatprep.subr.bf16.mxu0 0
  %2939 = vmatpush1.bf16.msra.mxu0 0
  %2940 = vmatprep.subr.bf16.mxu0 0
  %2941 = vmatpush1.bf16.msra.mxu0 0
  %2942 = vmatprep.subr.bf16.mxu0 0
  %2943 = vmatpush1.bf16.msra.mxu0 0
  %2944 = vmatprep.subr.bf16.mxu0 0
  %2945 = vmatpush1.bf16.msra.mxu0 0
  %2946 = vmatprep.subr.bf16.mxu0 0
  %2947 = vmatpush1.bf16.msra.mxu0 0
  %2948 = vmatprep.subr.bf16.mxu0 0
  %2949 = vmatpush1.bf16.msra.mxu0 0
  %2950 = vmatprep.subr.bf16.mxu0 0
  %2951 = vmatpush1.bf16.msra.mxu0 0
  %2952 = vmatprep.subr.bf16.mxu0 0
  %2953 = vmatpush1.bf16.msra.mxu0 0
  %2954 = vmatprep.subr.bf16.mxu0 0
  %2955 = vmatpush1.bf16.msra.mxu0 0
  %2956 = vmatprep.subr.bf16.mxu0 0
  %2957 = vmatpush1.bf16.msra.mxu0 0
  %2958 = vmatprep.subr.bf16.mxu0 0
  %2959 = vmatpush1.bf16.msra.mxu0 0
  %2960 = vmatprep.mubr.bf16.mxu0 0
  %2961 = vmatmul.mubr.bf16.gmra.mrb[0].mxu0 %v2926
  %v2962 = vpop.f32.mrb[0].mxu0
  %v2963 = vadd.f32 0.0, %v2962
  %v2964 = vpop.f32.mrb[0].mxu0
  %v2965 = vpop.f32.mrb[0].mxu0
  %v2966 = vadd.f32 0.0, %v2965
  %v2967 = vpop.f32.mrb[0].mxu0
  %2968 = vdwg.mxu0
  %v2969 = vadd.f32 %v2783, %v2963
  %v2970 = vadd.f32 %v2784, %v2966
  %2971 = vrot.lane.b32.xlu0 %v2413, 32
  %v2972 = vpop.permute.xlu0 %2971
  %2973 = vrot.lane.b32.xlu0 %v2414, 32
  %v2974 = vpop.permute.xlu0 %2973
  %v2976 = vsel %vm565, %v2972, 0
  %v2979 = vsel %vm565, %v2974, 0
  %2981 = vmatprep.subr.bf16.mxu0 0
  %2982 = vmatpush1.bf16.xpose.msra.mxu0 %v2979
  %2983 = vmatprep.subr.bf16.mxu0 0
  %2984 = vmatpush1.bf16.xpose.msra.mxu0 0
  %2985 = vmatprep.subr.bf16.mxu0 0
  %2986 = vmatpush1.bf16.xpose.msra.mxu0 0
  %2987 = vmatprep.subr.bf16.mxu0 0
  %2988 = vmatpush1.bf16.xpose.msra.mxu0 0
  %2989 = vmatprep.subr.bf16.mxu0 0
  %2990 = vmatpush1.bf16.xpose.msra.mxu0 0
  %2991 = vmatprep.subr.bf16.mxu0 0
  %2992 = vmatpush1.bf16.xpose.msra.mxu0 0
  %2993 = vmatprep.subr.bf16.mxu0 0
  %2994 = vmatpush1.bf16.xpose.msra.mxu0 0
  %2995 = vmatprep.subr.bf16.mxu0 0
  %2996 = vmatpush1.bf16.xpose.msra.mxu0 0
  %2997 = vmatprep.subr.bf16.mxu0 0
  %2998 = vmatpush1.bf16.xpose.msra.mxu0 0
  %2999 = vmatprep.subr.bf16.mxu0 0
  %3000 = vmatpush1.bf16.xpose.msra.mxu0 0
  %3001 = vmatprep.subr.bf16.mxu0 0
  %3002 = vmatpush1.bf16.xpose.msra.mxu0 0
  %3003 = vmatprep.subr.bf16.mxu0 0
  %3004 = vmatpush1.bf16.xpose.msra.mxu0 0
  %3005 = vmatprep.subr.bf16.mxu0 0
  %3006 = vmatpush1.bf16.xpose.msra.mxu0 0
  %3007 = vmatprep.subr.bf16.mxu0 0
  %3008 = vmatpush1.bf16.xpose.msra.mxu0 0
  %3009 = vmatprep.subr.bf16.mxu0 0
  %3010 = vmatpush1.bf16.xpose.msra.mxu0 0
  %3011 = vmatprep.subr.bf16.mxu0 0
  %3012 = vmatpush1.bf16.xpose.msra.mxu0 0
  %3013 = vmatprep.mubr.bf16.mxu0 0
  %3014 = vmatmul.mubr.bf16.gmra.mrb[0].mxu0 %v2976
  %v3015 = vpop.f32.mrb[0].mxu0
  %v3016 = vadd.f32 0.0, %v3015
  %v3017 = vpop.f32.mrb[0].mxu0
  %v3018 = vpop.f32.mrb[0].mxu0
  %v3019 = vadd.f32 0.0, %v3018
  %v3020 = vpop.f32.mrb[0].mxu0
  %3021 = vdwg.mxu0
  %v3022 = vmul.f32 %v3016, 0.17677669
  %v3023 = vmul.f32 %v3019, 0.17677669
  %v3024 = vadd.f32 %v3022, %v75
  %v3025 = vadd.f32 %v3023, %v76
  %v3026 = vsel %vm617, %v3024, -inf
  %3027 = vmax.xlane.f32.xlu0 %v3026
  %v3028 = vpop.xlane.xlu0 %3027
  %v3029 = vsel %vm621, %v3025, -inf
  %3030 = vmax.xlane.f32.xlu0 %v3029
  %v3031 = vpop.xlane.xlu0 %3030
  %v3032 = vsub.f32 %v3024, %v3028
  %v3033 = vsub.f32 %v3025, %v3031
  %v3034 = vmul.f32 %v3032, 1.442695
  %v3035 = vpow.pop %v3034
  %v3036 = vmul.f32 %v3033, 1.442695
  %v3037 = vpow.pop %v3036
  %v3038 = vsel %vm617, %v3035, 0.0
  %3039 = vadd.xlane.f32.xlu0 %v3038
  %v3040 = vpop.xlane.xlu0 %3039
  %v3041 = vsel %vm621, %v3037, 0.0
  %3042 = vadd.xlane.f32.xlu0 %v3041
  %v3043 = vpop.xlane.xlu0 %3042
  %v3044 = vpack.c.bf16 %v3037, %v3035
  %3045 = vrot.lane.b32.xlu0 %v2415, 32
  %v3046 = vpop.permute.xlu0 %3045
  %v3048 = vsel %vm617, %v3044, 0
  %v3051 = vsel %vm641, %v3046, 0
  %3053 = vmatprep.subr.bf16.mxu0 0
  %3054 = vmatpush1.bf16.msra.mxu0 %v3051
  %3055 = vmatprep.subr.bf16.mxu0 0
  %3056 = vmatpush1.bf16.msra.mxu0 0
  %3057 = vmatprep.subr.bf16.mxu0 0
  %3058 = vmatpush1.bf16.msra.mxu0 0
  %3059 = vmatprep.subr.bf16.mxu0 0
  %3060 = vmatpush1.bf16.msra.mxu0 0
  %3061 = vmatprep.subr.bf16.mxu0 0
  %3062 = vmatpush1.bf16.msra.mxu0 0
  %3063 = vmatprep.subr.bf16.mxu0 0
  %3064 = vmatpush1.bf16.msra.mxu0 0
  %3065 = vmatprep.subr.bf16.mxu0 0
  %3066 = vmatpush1.bf16.msra.mxu0 0
  %3067 = vmatprep.subr.bf16.mxu0 0
  %3068 = vmatpush1.bf16.msra.mxu0 0
  %3069 = vmatprep.subr.bf16.mxu0 0
  %3070 = vmatpush1.bf16.msra.mxu0 0
  %3071 = vmatprep.subr.bf16.mxu0 0
  %3072 = vmatpush1.bf16.msra.mxu0 0
  %3073 = vmatprep.subr.bf16.mxu0 0
  %3074 = vmatpush1.bf16.msra.mxu0 0
  %3075 = vmatprep.subr.bf16.mxu0 0
  %3076 = vmatpush1.bf16.msra.mxu0 0
  %3077 = vmatprep.subr.bf16.mxu0 0
  %3078 = vmatpush1.bf16.msra.mxu0 0
  %3079 = vmatprep.subr.bf16.mxu0 0
  %3080 = vmatpush1.bf16.msra.mxu0 0
  %3081 = vmatprep.subr.bf16.mxu0 0
  %3082 = vmatpush1.bf16.msra.mxu0 0
  %3083 = vmatprep.subr.bf16.mxu0 0
  %3084 = vmatpush1.bf16.msra.mxu0 0
  %3085 = vmatprep.mubr.bf16.mxu0 0
  %3086 = vmatmul.mubr.bf16.gmra.mrb[0].mxu0 %v3048
  %v3087 = vpop.f32.mrb[0].mxu0
  %v3088 = vadd.f32 0.0, %v3087
  %v3089 = vpop.f32.mrb[0].mxu0
  %v3090 = vpop.f32.mrb[0].mxu0
  %v3091 = vadd.f32 0.0, %v3090
  %v3092 = vpop.f32.mrb[0].mxu0
  %3093 = vdwg.mxu0
  %v3094 = vrcp.pop %v3040
  %v3095 = vmul.f32 %v3088, %v3094
  %v3096 = vrcp.pop %v3043
  %v3097 = vmul.f32 %v3091, %v3096
  %v3098 = vpack.c.bf16 %v3097, %v3095
  %v3103 = vunpack.c.l.b16 %v2399
  %v3104 = vunpack.c.l.b16 %v2400
  %v3105 = vunpack.c.l.b16 %v2401
  %v3106 = vunpack.c.l.b16 %v2402
  %v3107 = vpack.c.b16 %v3104, %v3103
  %v3108 = vpack.c.b16 %v3106, %v3105
  %v3112 = vsel %vm565, %v3098, 0
  %3114 = vmatprep.subr.bf16.mxu0 0
  %3115 = vmatpush1.bf16.msra.mxu0 %v3107
  %3116 = vmatprep.subr.bf16.mxu0 0
  %3117 = vmatpush1.bf16.msra.mxu0 %v3108
  %3118 = vmatprep.subr.bf16.mxu0 0
  %3119 = vmatpush1.bf16.msra.mxu0 0
  %3120 = vmatprep.subr.bf16.mxu0 0
  %3121 = vmatpush1.bf16.msra.mxu0 0
  %3122 = vmatprep.subr.bf16.mxu0 0
  %3123 = vmatpush1.bf16.msra.mxu0 0
  %3124 = vmatprep.subr.bf16.mxu0 0
  %3125 = vmatpush1.bf16.msra.mxu0 0
  %3126 = vmatprep.subr.bf16.mxu0 0
  %3127 = vmatpush1.bf16.msra.mxu0 0
  %3128 = vmatprep.subr.bf16.mxu0 0
  %3129 = vmatpush1.bf16.msra.mxu0 0
  %3130 = vmatprep.subr.bf16.mxu0 0
  %3131 = vmatpush1.bf16.msra.mxu0 0
  %3132 = vmatprep.subr.bf16.mxu0 0
  %3133 = vmatpush1.bf16.msra.mxu0 0
  %3134 = vmatprep.subr.bf16.mxu0 0
  %3135 = vmatpush1.bf16.msra.mxu0 0
  %3136 = vmatprep.subr.bf16.mxu0 0
  %3137 = vmatpush1.bf16.msra.mxu0 0
  %3138 = vmatprep.subr.bf16.mxu0 0
  %3139 = vmatpush1.bf16.msra.mxu0 0
  %3140 = vmatprep.subr.bf16.mxu0 0
  %3141 = vmatpush1.bf16.msra.mxu0 0
  %3142 = vmatprep.subr.bf16.mxu0 0
  %3143 = vmatpush1.bf16.msra.mxu0 0
  %3144 = vmatprep.subr.bf16.mxu0 0
  %3145 = vmatpush1.bf16.msra.mxu0 0
  %3146 = vmatprep.mubr.bf16.mxu0 0
  %3147 = vmatmul.mubr.bf16.gmra.mrb[0].mxu0 %v3112
  %v3148 = vpop.f32.mrb[0].mxu0
  %v3149 = vadd.f32 0.0, %v3148
  %v3150 = vpop.f32.mrb[0].mxu0
  %v3151 = vpop.f32.mrb[0].mxu0
  %v3152 = vadd.f32 0.0, %v3151
  %v3153 = vpop.f32.mrb[0].mxu0
  %3154 = vdwg.mxu0
  %v3155 = vadd.f32 %v2969, %v3149
  %v3156 = vadd.f32 %v2970, %v3152
  %s3157 = scalar_lea.vmem %s11, 1
  %v3158 = vld [vmem:[%s3157] sm:$0x1]
  %s3159 = scalar_lea.vmem %s12, 1
  %v3160 = vld [vmem:[%s3159] sm:$0x1]
  %3161 = vadd.xlane.f32.xlu0 %v3155
  %v3162 = vpop.xlane.xlu0 %3161
  %v3163 = vsel %vm235, %v3156, 0.0
  %3164 = vadd.xlane.f32.xlu0 %v3163
  %v3165 = vpop.xlane.xlu0 %3164
  %v3166 = vmul.f32 %v3162, %v239
  %v3167 = vmul.f32 %v3165, %v239
  %v3168 = vsub.f32 %v3155, %v3166
  %v3169 = vsub.f32 %v3156, %v3167
  %v3170 = vmul.f32 %v3168, %v3168
  %v3171 = vmul.f32 %v3169, %v3169
  %3172 = vadd.xlane.f32.xlu0 %v3170
  %v3173 = vpop.xlane.xlu0 %3172
  %v3174 = vsel %vm235, %v3171, 0.0
  %3175 = vadd.xlane.f32.xlu0 %v3174
  %v3176 = vpop.xlane.xlu0 %3175
  %v3177 = vmul.f32 %v3173, %v239
  %v3178 = vmul.f32 %v3176, %v239
  %v3179 = vadd.f32 %v3177, 1e-06
  %v3180 = vadd.f32 %v3178, 1e-06
  %v3181 = vrsqrt.pop %v3179
  %v3182 = vrsqrt.pop %v3180
  %v3183 = vmul.f32 %v3168, %v3181
  %v3184 = vmul.f32 %v3169, %v3182
  %v3186 = vlaneseq
  %v3187 = vshrl.u32 %v3186, 7
  %v3188 = vsub.s32 0, %v3187
  %v3189 = vrot.slane %v3158, %v3188
  %v3191 = vmul.f32 %v3183, %v3189
  %v3192 = vmul.f32 %v3184, %v3189
  %v3194 = vlaneseq
  %v3195 = vshrl.u32 %v3194, 7
  %v3196 = vsub.s32 0, %v3195
  %v3197 = vrot.slane %v3160, %v3196
  %v3199 = vadd.f32 %v3191, %v3197
  %v3200 = vadd.f32 %v3192, %v3197
  %v3201 = vpack.c.bf16 %v3200, %v3199
  %s3202 = scalar_lea.vmem %s13, 256
  %v3203 = vld [vmem:[%s3202] sm:$0xff]
  %v3204 = vld [vmem:[%s3202 + $0x8] sm:$0xff]
  %v3205 = vld [vmem:[%s3202 + $0x10] sm:$0xff]
  %v3206 = vld [vmem:[%s3202 + $0x18] sm:$0xff]
  %v3207 = vld [vmem:[%s3202 + $0x20] sm:$0xff]
  %v3208 = vld [vmem:[%s3202 + $0x28] sm:$0xff]
  %v3209 = vld [vmem:[%s3202 + $0x30] sm:$0xff]
  %v3210 = vld [vmem:[%s3202 + $0x38] sm:$0xff]
  %v3211 = vld [vmem:[%s3202 + $0x40] sm:$0xff]
  %v3212 = vld [vmem:[%s3202 + $0x48] sm:$0xff]
  %v3213 = vld [vmem:[%s3202 + $0x50] sm:$0xff]
  %v3214 = vld [vmem:[%s3202 + $0x58] sm:$0xff]
  %v3215 = vld [vmem:[%s3202 + $0x60] sm:$0xff]
  %v3216 = vld [vmem:[%s3202 + $0x68] sm:$0xff]
  %v3217 = vld [vmem:[%s3202 + $0x70] sm:$0xff]
  %v3218 = vld [vmem:[%s3202 + $0x78] sm:$0xff]
  %v3219 = vld [vmem:[%s3202 + $0x80] sm:$0xff]
  %v3220 = vld [vmem:[%s3202 + $0x88] sm:$0xff]
  %v3221 = vld [vmem:[%s3202 + $0x90] sm:$0xff]
  %v3222 = vld [vmem:[%s3202 + $0x98] sm:$0xff]
  %v3223 = vld [vmem:[%s3202 + $0xa0] sm:$0xff]
  %v3224 = vld [vmem:[%s3202 + $0xa8] sm:$0xff]
  %v3225 = vld [vmem:[%s3202 + $0xb0] sm:$0xff]
  %v3226 = vld [vmem:[%s3202 + $0xb8] sm:$0xff]
  %v3227 = vld [vmem:[%s3202 + $0xc0] sm:$0xff]
  %v3228 = vld [vmem:[%s3202 + $0xc8] sm:$0xff]
  %v3229 = vld [vmem:[%s3202 + $0xd0] sm:$0xff]
  %v3230 = vld [vmem:[%s3202 + $0xd8] sm:$0xff]
  %v3231 = vld [vmem:[%s3202 + $0xe0] sm:$0xff]
  %v3232 = vld [vmem:[%s3202 + $0xe8] sm:$0xff]
  %v3233 = vld [vmem:[%s3202 + $0xf0] sm:$0xff]
  %v3234 = vld [vmem:[%s3202 + $0xf8] sm:$0xff]
  %s3235 = scalar_lea.vmem %s14, 4
  %v3236 = vld [vmem:[%s3235] sm:$0xf]
  %v3238 = vlaneseq
  %v3239 = vshrl.u32 %v3238, 7
  %v3240 = vsub.s32 0, %v3239
  %v3241 = vrot.slane %v3236, %v3240
  %v3242 = vlaneseq
  %v3243 = vshrl.u32 %v3242, 7
  %v3244 = vsub.s32 1, %v3243
  %v3245 = vrot.slane %v3236, %v3244
  %v3246 = vlaneseq
  %v3247 = vshrl.u32 %v3246, 7
  %v3248 = vsub.s32 2, %v3247
  %v3249 = vrot.slane %v3236, %v3248
  %v3250 = vlaneseq
  %v3251 = vshrl.u32 %v3250, 7
  %v3252 = vsub.s32 3, %v3251
  %v3253 = vrot.slane %v3236, %v3252
  %v3290 = vunpack.c.l.b16 %v3203
  %v3291 = vunpack.c.h.b16 %v3203
  %v3292 = vunpack.c.l.b16 %v3204
  %v3293 = vunpack.c.h.b16 %v3204
  %v3294 = vunpack.c.l.b16 %v3205
  %v3295 = vunpack.c.h.b16 %v3205
  %v3296 = vunpack.c.l.b16 %v3206
  %v3297 = vunpack.c.h.b16 %v3206
  %v3298 = vunpack.c.l.b16 %v3207
  %v3299 = vunpack.c.h.b16 %v3207
  %v3300 = vunpack.c.l.b16 %v3208
  %v3301 = vunpack.c.h.b16 %v3208
  %v3302 = vunpack.c.l.b16 %v3209
  %v3303 = vunpack.c.h.b16 %v3209
  %v3304 = vunpack.c.l.b16 %v3210
  %v3305 = vunpack.c.h.b16 %v3210
  %v3306 = vunpack.c.l.b16 %v3211
  %v3307 = vunpack.c.h.b16 %v3211
  %v3308 = vunpack.c.l.b16 %v3212
  %v3309 = vunpack.c.h.b16 %v3212
  %v3310 = vunpack.c.l.b16 %v3213
  %v3311 = vunpack.c.h.b16 %v3213
  %v3312 = vunpack.c.l.b16 %v3214
  %v3313 = vunpack.c.h.b16 %v3214
  %v3314 = vunpack.c.l.b16 %v3215
  %v3315 = vunpack.c.h.b16 %v3215
  %v3316 = vunpack.c.l.b16 %v3216
  %v3317 = vunpack.c.h.b16 %v3216
  %v3318 = vunpack.c.l.b16 %v3217
  %v3319 = vunpack.c.h.b16 %v3217
  %v3320 = vunpack.c.l.b16 %v3218
  %v3321 = vunpack.c.h.b16 %v3218
  %v3322 = vunpack.c.l.b16 %v3219
  %v3323 = vunpack.c.h.b16 %v3219
  %v3324 = vunpack.c.l.b16 %v3220
  %v3325 = vunpack.c.h.b16 %v3220
  %v3326 = vunpack.c.l.b16 %v3221
  %v3327 = vunpack.c.h.b16 %v3221
  %v3328 = vunpack.c.l.b16 %v3222
  %v3329 = vunpack.c.h.b16 %v3222
  %v3330 = vunpack.c.l.b16 %v3223
  %v3331 = vunpack.c.h.b16 %v3223
  %v3332 = vunpack.c.l.b16 %v3224
  %v3333 = vunpack.c.h.b16 %v3224
  %v3334 = vunpack.c.l.b16 %v3225
  %v3335 = vunpack.c.h.b16 %v3225
  %v3336 = vunpack.c.l.b16 %v3226
  %v3337 = vunpack.c.h.b16 %v3226
  %v3338 = vunpack.c.l.b16 %v3227
  %v3339 = vunpack.c.h.b16 %v3227
  %v3340 = vunpack.c.l.b16 %v3228
  %v3341 = vunpack.c.h.b16 %v3228
  %v3342 = vunpack.c.l.b16 %v3229
  %v3343 = vunpack.c.h.b16 %v3229
  %v3344 = vunpack.c.l.b16 %v3230
  %v3345 = vunpack.c.h.b16 %v3230
  %v3346 = vunpack.c.l.b16 %v3231
  %v3347 = vunpack.c.h.b16 %v3231
  %v3348 = vunpack.c.l.b16 %v3232
  %v3349 = vunpack.c.h.b16 %v3232
  %v3350 = vunpack.c.l.b16 %v3233
  %v3351 = vunpack.c.h.b16 %v3233
  %v3352 = vunpack.c.l.b16 %v3234
  %v3353 = vunpack.c.h.b16 %v3234
  %v3354 = vpack.c.b16 %v3294, %v3290
  %v3355 = vpack.c.b16 %v3295, %v3291
  %v3356 = vpack.c.b16 %v3296, %v3292
  %v3357 = vpack.c.b16 %v3297, %v3293
  %v3358 = vpack.c.b16 %v3302, %v3298
  %v3359 = vpack.c.b16 %v3303, %v3299
  %v3360 = vpack.c.b16 %v3304, %v3300
  %v3361 = vpack.c.b16 %v3305, %v3301
  %v3362 = vpack.c.b16 %v3310, %v3306
  %v3363 = vpack.c.b16 %v3311, %v3307
  %v3364 = vpack.c.b16 %v3312, %v3308
  %v3365 = vpack.c.b16 %v3313, %v3309
  %v3366 = vpack.c.b16 %v3318, %v3314
  %v3367 = vpack.c.b16 %v3319, %v3315
  %v3368 = vpack.c.b16 %v3320, %v3316
  %v3369 = vpack.c.b16 %v3321, %v3317
  %v3370 = vpack.c.b16 %v3326, %v3322
  %v3371 = vpack.c.b16 %v3327, %v3323
  %v3372 = vpack.c.b16 %v3328, %v3324
  %v3373 = vpack.c.b16 %v3329, %v3325
  %v3374 = vpack.c.b16 %v3334, %v3330
  %v3375 = vpack.c.b16 %v3335, %v3331
  %v3376 = vpack.c.b16 %v3336, %v3332
  %v3377 = vpack.c.b16 %v3337, %v3333
  %v3378 = vpack.c.b16 %v3342, %v3338
  %v3379 = vpack.c.b16 %v3343, %v3339
  %v3380 = vpack.c.b16 %v3344, %v3340
  %v3381 = vpack.c.b16 %v3345, %v3341
  %v3382 = vpack.c.b16 %v3350, %v3346
  %v3383 = vpack.c.b16 %v3351, %v3347
  %v3384 = vpack.c.b16 %v3352, %v3348
  %v3385 = vpack.c.b16 %v3353, %v3349
  %3418 = vmatprep.subr.bf16.mxu0 %v3355
  %3419 = vmatpush1.bf16.msra.mxu0 %v3354
  %3420 = vmatprep.subr.bf16.mxu0 %v3359
  %3421 = vmatpush1.bf16.msra.mxu0 %v3358
  %3422 = vmatprep.subr.bf16.mxu0 %v3363
  %3423 = vmatpush1.bf16.msra.mxu0 %v3362
  %3424 = vmatprep.subr.bf16.mxu0 %v3367
  %3425 = vmatpush1.bf16.msra.mxu0 %v3366
  %3426 = vmatprep.subr.bf16.mxu0 %v3371
  %3427 = vmatpush1.bf16.msra.mxu0 %v3370
  %3428 = vmatprep.subr.bf16.mxu0 %v3375
  %3429 = vmatpush1.bf16.msra.mxu0 %v3374
  %3430 = vmatprep.subr.bf16.mxu0 %v3379
  %3431 = vmatpush1.bf16.msra.mxu0 %v3378
  %3432 = vmatprep.subr.bf16.mxu0 %v3383
  %3433 = vmatpush1.bf16.msra.mxu0 %v3382
  %3434 = vmatprep.subr.bf16.mxu0 0
  %3435 = vmatpush1.bf16.msra.mxu0 0
  %3436 = vmatprep.subr.bf16.mxu0 0
  %3437 = vmatpush1.bf16.msra.mxu0 0
  %3438 = vmatprep.subr.bf16.mxu0 0
  %3439 = vmatpush1.bf16.msra.mxu0 0
  %3440 = vmatprep.subr.bf16.mxu0 0
  %3441 = vmatpush1.bf16.msra.mxu0 0
  %3442 = vmatprep.subr.bf16.mxu0 0
  %3443 = vmatpush1.bf16.msra.mxu0 0
  %3444 = vmatprep.subr.bf16.mxu0 0
  %3445 = vmatpush1.bf16.msra.mxu0 0
  %3446 = vmatprep.subr.bf16.mxu0 0
  %3447 = vmatpush1.bf16.msra.mxu0 0
  %3448 = vmatprep.subr.bf16.mxu0 0
  %3449 = vmatpush1.bf16.msra.mxu0 0
  %3450 = vmatprep.mubr.bf16.mxu0 0
  %3451 = vmatmul.mubr.bf16.gmra.mrb[0].mxu0 %v3201
  %v3452 = vpop.f32.mrb[0].mxu0
  %v3453 = vadd.f32 %v3241, %v3452
  %v3454 = vpop.f32.mrb[0].mxu0
  %v3455 = vadd.f32 %v3245, %v3454
  %v3456 = vpop.f32.mrb[0].mxu0
  %v3457 = vadd.f32 %v3241, %v3456
  %v3458 = vpop.f32.mrb[0].mxu0
  %v3459 = vadd.f32 %v3245, %v3458
  %3460 = vdwg.mxu0
  %3461 = vmatprep.subr.bf16.mxu0 %v3357
  %3462 = vmatpush1.bf16.msra.mxu0 %v3356
  %3463 = vmatprep.subr.bf16.mxu0 %v3361
  %3464 = vmatpush1.bf16.msra.mxu0 %v3360
  %3465 = vmatprep.subr.bf16.mxu0 %v3365
  %3466 = vmatpush1.bf16.msra.mxu0 %v3364
  %3467 = vmatprep.subr.bf16.mxu0 %v3369
  %3468 = vmatpush1.bf16.msra.mxu0 %v3368
  %3469 = vmatprep.subr.bf16.mxu0 %v3373
  %3470 = vmatpush1.bf16.msra.mxu0 %v3372
  %3471 = vmatprep.subr.bf16.mxu0 %v3377
  %3472 = vmatpush1.bf16.msra.mxu0 %v3376
  %3473 = vmatprep.subr.bf16.mxu0 %v3381
  %3474 = vmatpush1.bf16.msra.mxu0 %v3380
  %3475 = vmatprep.subr.bf16.mxu0 %v3385
  %3476 = vmatpush1.bf16.msra.mxu0 %v3384
  %3477 = vmatprep.subr.bf16.mxu0 0
  %3478 = vmatpush1.bf16.msra.mxu0 0
  %3479 = vmatprep.subr.bf16.mxu0 0
  %3480 = vmatpush1.bf16.msra.mxu0 0
  %3481 = vmatprep.subr.bf16.mxu0 0
  %3482 = vmatpush1.bf16.msra.mxu0 0
  %3483 = vmatprep.subr.bf16.mxu0 0
  %3484 = vmatpush1.bf16.msra.mxu0 0
  %3485 = vmatprep.subr.bf16.mxu0 0
  %3486 = vmatpush1.bf16.msra.mxu0 0
  %3487 = vmatprep.subr.bf16.mxu0 0
  %3488 = vmatpush1.bf16.msra.mxu0 0
  %3489 = vmatprep.subr.bf16.mxu0 0
  %3490 = vmatpush1.bf16.msra.mxu0 0
  %3491 = vmatprep.subr.bf16.mxu0 0
  %3492 = vmatpush1.bf16.msra.mxu0 0
  %3493 = vmatprep.mubr.bf16.mxu0 0
  %3494 = vmatmul.mubr.bf16.gmra.mrb[0].mxu0 %v3201
  %v3495 = vpop.f32.mrb[0].mxu0
  %v3496 = vadd.f32 %v3249, %v3495
  %v3497 = vpop.f32.mrb[0].mxu0
  %v3498 = vadd.f32 %v3253, %v3497
  %v3499 = vpop.f32.mrb[0].mxu0
  %v3500 = vadd.f32 %v3249, %v3499
  %v3501 = vpop.f32.mrb[0].mxu0
  %v3502 = vadd.f32 %v3253, %v3501
  %3503 = vdwg.mxu0
  %v3504 = vmul.f32 %v3453, 0.5
  %v3505 = vmul.f32 %v3455, 0.5
  %v3506 = vmul.f32 %v3496, 0.5
  %v3507 = vmul.f32 %v3498, 0.5
  %v3508 = vmul.f32 %v3457, 0.5
  %v3509 = vmul.f32 %v3459, 0.5
  %v3510 = vmul.f32 %v3500, 0.5
  %v3511 = vmul.f32 %v3502, 0.5
  %v3512 = vmul.f32 %v3453, 0.044715
  %v3513 = vmul.f32 %v3455, 0.044715
  %v3514 = vmul.f32 %v3496, 0.044715
  %v3515 = vmul.f32 %v3498, 0.044715
  %v3516 = vmul.f32 %v3457, 0.044715
  %v3517 = vmul.f32 %v3459, 0.044715
  %v3518 = vmul.f32 %v3500, 0.044715
  %v3519 = vmul.f32 %v3502, 0.044715
  %v3520 = vmul.f32 %v3512, %v3453
  %v3521 = vmul.f32 %v3513, %v3455
  %v3522 = vmul.f32 %v3514, %v3496
  %v3523 = vmul.f32 %v3515, %v3498
  %v3524 = vmul.f32 %v3516, %v3457
  %v3525 = vmul.f32 %v3517, %v3459
  %v3526 = vmul.f32 %v3518, %v3500
  %v3527 = vmul.f32 %v3519, %v3502
  %v3528 = vmul.f32 %v3520, %v3453
  %v3529 = vmul.f32 %v3521, %v3455
  %v3530 = vmul.f32 %v3522, %v3496
  %v3531 = vmul.f32 %v3523, %v3498
  %v3532 = vmul.f32 %v3524, %v3457
  %v3533 = vmul.f32 %v3525, %v3459
  %v3534 = vmul.f32 %v3526, %v3500
  %v3535 = vmul.f32 %v3527, %v3502
  %v3536 = vadd.f32 %v3453, %v3528
  %v3537 = vadd.f32 %v3455, %v3529
  %v3538 = vadd.f32 %v3496, %v3530
  %v3539 = vadd.f32 %v3498, %v3531
  %v3540 = vadd.f32 %v3457, %v3532
  %v3541 = vadd.f32 %v3459, %v3533
  %v3542 = vadd.f32 %v3500, %v3534
  %v3543 = vadd.f32 %v3502, %v3535
  %v3544 = vmul.f32 %v3536, 0.7978846
  %v3545 = vmul.f32 %v3537, 0.7978846
  %v3546 = vmul.f32 %v3538, 0.7978846
  %v3547 = vmul.f32 %v3539, 0.7978846
  %v3548 = vmul.f32 %v3540, 0.7978846
  %v3549 = vmul.f32 %v3541, 0.7978846
  %v3550 = vmul.f32 %v3542, 0.7978846
  %v3551 = vmul.f32 %v3543, 0.7978846
  %v3552 = vtanh.pop %v3544
  %v3553 = vtanh.pop %v3545
  %v3554 = vtanh.pop %v3546
  %v3555 = vtanh.pop %v3547
  %v3556 = vtanh.pop %v3548
  %v3557 = vtanh.pop %v3549
  %v3558 = vtanh.pop %v3550
  %v3559 = vtanh.pop %v3551
  %v3560 = vadd.f32 %v3552, 1.0
  %v3561 = vadd.f32 %v3553, 1.0
  %v3562 = vadd.f32 %v3554, 1.0
  %v3563 = vadd.f32 %v3555, 1.0
  %v3564 = vadd.f32 %v3556, 1.0
  %v3565 = vadd.f32 %v3557, 1.0
  %v3566 = vadd.f32 %v3558, 1.0
  %v3567 = vadd.f32 %v3559, 1.0
  %v3568 = vmul.f32 %v3504, %v3560
  %v3569 = vmul.f32 %v3505, %v3561
  %v3570 = vmul.f32 %v3506, %v3562
  %v3571 = vmul.f32 %v3507, %v3563
  %v3572 = vmul.f32 %v3508, %v3564
  %v3573 = vmul.f32 %v3509, %v3565
  %v3574 = vmul.f32 %v3510, %v3566
  %v3575 = vmul.f32 %v3511, %v3567
  %v3576 = vpack.c.bf16 %v3572, %v3568
  %v3577 = vpack.c.bf16 %v3573, %v3569
  %v3578 = vpack.c.bf16 %v3574, %v3570
  %v3579 = vpack.c.bf16 %v3575, %v3571
  %s3580 = scalar_lea.vmem %s15, 256
  %v3581 = vld [vmem:[%s3580] sm:$0xf]
  %v3582 = vld [vmem:[%s3580 + $0x4] sm:$0xf]
  %v3583 = vld [vmem:[%s3580 + $0x8] sm:$0xf]
  %v3584 = vld [vmem:[%s3580 + $0xc] sm:$0xf]
  %v3585 = vld [vmem:[%s3580 + $0x10] sm:$0xf]
  %v3586 = vld [vmem:[%s3580 + $0x14] sm:$0xf]
  %v3587 = vld [vmem:[%s3580 + $0x18] sm:$0xf]
  %v3588 = vld [vmem:[%s3580 + $0x1c] sm:$0xf]
  %v3589 = vld [vmem:[%s3580 + $0x20] sm:$0xf]
  %v3590 = vld [vmem:[%s3580 + $0x24] sm:$0xf]
  %v3591 = vld [vmem:[%s3580 + $0x28] sm:$0xf]
  %v3592 = vld [vmem:[%s3580 + $0x2c] sm:$0xf]
  %v3593 = vld [vmem:[%s3580 + $0x30] sm:$0xf]
  %v3594 = vld [vmem:[%s3580 + $0x34] sm:$0xf]
  %v3595 = vld [vmem:[%s3580 + $0x38] sm:$0xf]
  %v3596 = vld [vmem:[%s3580 + $0x3c] sm:$0xf]
  %v3597 = vld [vmem:[%s3580 + $0x40] sm:$0xf]
  %v3598 = vld [vmem:[%s3580 + $0x44] sm:$0xf]
  %v3599 = vld [vmem:[%s3580 + $0x48] sm:$0xf]
  %v3600 = vld [vmem:[%s3580 + $0x4c] sm:$0xf]
  %v3601 = vld [vmem:[%s3580 + $0x50] sm:$0xf]
  %v3602 = vld [vmem:[%s3580 + $0x54] sm:$0xf]
  %v3603 = vld [vmem:[%s3580 + $0x58] sm:$0xf]
  %v3604 = vld [vmem:[%s3580 + $0x5c] sm:$0xf]
  %v3605 = vld [vmem:[%s3580 + $0x60] sm:$0xf]
  %v3606 = vld [vmem:[%s3580 + $0x64] sm:$0xf]
  %v3607 = vld [vmem:[%s3580 + $0x68] sm:$0xf]
  %v3608 = vld [vmem:[%s3580 + $0x6c] sm:$0xf]
  %v3609 = vld [vmem:[%s3580 + $0x70] sm:$0xf]
  %v3610 = vld [vmem:[%s3580 + $0x74] sm:$0xf]
  %v3611 = vld [vmem:[%s3580 + $0x78] sm:$0xf]
  %v3612 = vld [vmem:[%s3580 + $0x7c] sm:$0xf]
  %v3613 = vld [vmem:[%s3580 + $0x80] sm:$0xf]
  %v3614 = vld [vmem:[%s3580 + $0x84] sm:$0xf]
  %v3615 = vld [vmem:[%s3580 + $0x88] sm:$0xf]
  %v3616 = vld [vmem:[%s3580 + $0x8c] sm:$0xf]
  %v3617 = vld [vmem:[%s3580 + $0x90] sm:$0xf]
  %v3618 = vld [vmem:[%s3580 + $0x94] sm:$0xf]
  %v3619 = vld [vmem:[%s3580 + $0x98] sm:$0xf]
  %v3620 = vld [vmem:[%s3580 + $0x9c] sm:$0xf]
  %v3621 = vld [vmem:[%s3580 + $0xa0] sm:$0xf]
  %v3622 = vld [vmem:[%s3580 + $0xa4] sm:$0xf]
  %v3623 = vld [vmem:[%s3580 + $0xa8] sm:$0xf]
  %v3624 = vld [vmem:[%s3580 + $0xac] sm:$0xf]
  %v3625 = vld [vmem:[%s3580 + $0xb0] sm:$0xf]
  %v3626 = vld [vmem:[%s3580 + $0xb4] sm:$0xf]
  %v3627 = vld [vmem:[%s3580 + $0xb8] sm:$0xf]
  %v3628 = vld [vmem:[%s3580 + $0xbc] sm:$0xf]
  %v3629 = vld [vmem:[%s3580 + $0xc0] sm:$0xf]
  %v3630 = vld [vmem:[%s3580 + $0xc4] sm:$0xf]
  %v3631 = vld [vmem:[%s3580 + $0xc8] sm:$0xf]
  %v3632 = vld [vmem:[%s3580 + $0xcc] sm:$0xf]
  %v3633 = vld [vmem:[%s3580 + $0xd0] sm:$0xf]
  %v3634 = vld [vmem:[%s3580 + $0xd4] sm:$0xf]
  %v3635 = vld [vmem:[%s3580 + $0xd8] sm:$0xf]
  %v3636 = vld [vmem:[%s3580 + $0xdc] sm:$0xf]
  %v3637 = vld [vmem:[%s3580 + $0xe0] sm:$0xf]
  %v3638 = vld [vmem:[%s3580 + $0xe4] sm:$0xf]
  %v3639 = vld [vmem:[%s3580 + $0xe8] sm:$0xf]
  %v3640 = vld [vmem:[%s3580 + $0xec] sm:$0xf]
  %v3641 = vld [vmem:[%s3580 + $0xf0] sm:$0xf]
  %v3642 = vld [vmem:[%s3580 + $0xf4] sm:$0xf]
  %v3643 = vld [vmem:[%s3580 + $0xf8] sm:$0xf]
  %v3644 = vld [vmem:[%s3580 + $0xfc] sm:$0xf]
  %v3709 = vunpack.c.l.b16 %v3581
  %v3710 = vunpack.c.l.b16 %v3582
  %v3711 = vunpack.c.l.b16 %v3583
  %v3712 = vunpack.c.l.b16 %v3584
  %v3713 = vunpack.c.l.b16 %v3585
  %v3714 = vunpack.c.l.b16 %v3586
  %v3715 = vunpack.c.l.b16 %v3587
  %v3716 = vunpack.c.l.b16 %v3588
  %v3717 = vunpack.c.l.b16 %v3589
  %v3718 = vunpack.c.l.b16 %v3590
  %v3719 = vunpack.c.l.b16 %v3591
  %v3720 = vunpack.c.l.b16 %v3592
  %v3721 = vunpack.c.l.b16 %v3593
  %v3722 = vunpack.c.l.b16 %v3594
  %v3723 = vunpack.c.l.b16 %v3595
  %v3724 = vunpack.c.l.b16 %v3596
  %v3725 = vunpack.c.l.b16 %v3597
  %v3726 = vunpack.c.l.b16 %v3598
  %v3727 = vunpack.c.l.b16 %v3599
  %v3728 = vunpack.c.l.b16 %v3600
  %v3729 = vunpack.c.l.b16 %v3601
  %v3730 = vunpack.c.l.b16 %v3602
  %v3731 = vunpack.c.l.b16 %v3603
  %v3732 = vunpack.c.l.b16 %v3604
  %v3733 = vunpack.c.l.b16 %v3605
  %v3734 = vunpack.c.l.b16 %v3606
  %v3735 = vunpack.c.l.b16 %v3607
  %v3736 = vunpack.c.l.b16 %v3608
  %v3737 = vunpack.c.l.b16 %v3609
  %v3738 = vunpack.c.l.b16 %v3610
  %v3739 = vunpack.c.l.b16 %v3611
  %v3740 = vunpack.c.l.b16 %v3612
  %v3741 = vunpack.c.l.b16 %v3613
  %v3742 = vunpack.c.l.b16 %v3614
  %v3743 = vunpack.c.l.b16 %v3615
  %v3744 = vunpack.c.l.b16 %v3616
  %v3745 = vunpack.c.l.b16 %v3617
  %v3746 = vunpack.c.l.b16 %v3618
  %v3747 = vunpack.c.l.b16 %v3619
  %v3748 = vunpack.c.l.b16 %v3620
  %v3749 = vunpack.c.l.b16 %v3621
  %v3750 = vunpack.c.l.b16 %v3622
  %v3751 = vunpack.c.l.b16 %v3623
  %v3752 = vunpack.c.l.b16 %v3624
  %v3753 = vunpack.c.l.b16 %v3625
  %v3754 = vunpack.c.l.b16 %v3626
  %v3755 = vunpack.c.l.b16 %v3627
  %v3756 = vunpack.c.l.b16 %v3628
  %v3757 = vunpack.c.l.b16 %v3629
  %v3758 = vunpack.c.l.b16 %v3630
  %v3759 = vunpack.c.l.b16 %v3631
  %v3760 = vunpack.c.l.b16 %v3632
  %v3761 = vunpack.c.l.b16 %v3633
  %v3762 = vunpack.c.l.b16 %v3634
  %v3763 = vunpack.c.l.b16 %v3635
  %v3764 = vunpack.c.l.b16 %v3636
  %v3765 = vunpack.c.l.b16 %v3637
  %v3766 = vunpack.c.l.b16 %v3638
  %v3767 = vunpack.c.l.b16 %v3639
  %v3768 = vunpack.c.l.b16 %v3640
  %v3769 = vunpack.c.l.b16 %v3641
  %v3770 = vunpack.c.l.b16 %v3642
  %v3771 = vunpack.c.l.b16 %v3643
  %v3772 = vunpack.c.l.b16 %v3644
  %v3773 = vpack.c.b16 %v3710, %v3709
  %v3774 = vpack.c.b16 %v3712, %v3711
  %v3775 = vpack.c.b16 %v3714, %v3713
  %v3776 = vpack.c.b16 %v3716, %v3715
  %v3777 = vpack.c.b16 %v3718, %v3717
  %v3778 = vpack.c.b16 %v3720, %v3719
  %v3779 = vpack.c.b16 %v3722, %v3721
  %v3780 = vpack.c.b16 %v3724, %v3723
  %v3781 = vpack.c.b16 %v3726, %v3725
  %v3782 = vpack.c.b16 %v3728, %v3727
  %v3783 = vpack.c.b16 %v3730, %v3729
  %v3784 = vpack.c.b16 %v3732, %v3731
  %v3785 = vpack.c.b16 %v3734, %v3733
  %v3786 = vpack.c.b16 %v3736, %v3735
  %v3787 = vpack.c.b16 %v3738, %v3737
  %v3788 = vpack.c.b16 %v3740, %v3739
  %v3789 = vpack.c.b16 %v3742, %v3741
  %v3790 = vpack.c.b16 %v3744, %v3743
  %v3791 = vpack.c.b16 %v3746, %v3745
  %v3792 = vpack.c.b16 %v3748, %v3747
  %v3793 = vpack.c.b16 %v3750, %v3749
  %v3794 = vpack.c.b16 %v3752, %v3751
  %v3795 = vpack.c.b16 %v3754, %v3753
  %v3796 = vpack.c.b16 %v3756, %v3755
  %v3797 = vpack.c.b16 %v3758, %v3757
  %v3798 = vpack.c.b16 %v3760, %v3759
  %v3799 = vpack.c.b16 %v3762, %v3761
  %v3800 = vpack.c.b16 %v3764, %v3763
  %v3801 = vpack.c.b16 %v3766, %v3765
  %v3802 = vpack.c.b16 %v3768, %v3767
  %v3803 = vpack.c.b16 %v3770, %v3769
  %v3804 = vpack.c.b16 %v3772, %v3771
  %3837 = vmatprep.subr.bf16.mxu0 0
  %3838 = vmatpush1.bf16.msra.mxu0 %v3773
  %3839 = vmatprep.subr.bf16.mxu0 0
  %3840 = vmatpush1.bf16.msra.mxu0 %v3774
  %3841 = vmatprep.subr.bf16.mxu0 0
  %3842 = vmatpush1.bf16.msra.mxu0 %v3775
  %3843 = vmatprep.subr.bf16.mxu0 0
  %3844 = vmatpush1.bf16.msra.mxu0 %v3776
  %3845 = vmatprep.subr.bf16.mxu0 0
  %3846 = vmatpush1.bf16.msra.mxu0 %v3777
  %3847 = vmatprep.subr.bf16.mxu0 0
  %3848 = vmatpush1.bf16.msra.mxu0 %v3778
  %3849 = vmatprep.subr.bf16.mxu0 0
  %3850 = vmatpush1.bf16.msra.mxu0 %v3779
  %3851 = vmatprep.subr.bf16.mxu0 0
  %3852 = vmatpush1.bf16.msra.mxu0 %v3780
  %3853 = vmatprep.subr.bf16.mxu0 0
  %3854 = vmatpush1.bf16.msra.mxu0 %v3781
  %3855 = vmatprep.subr.bf16.mxu0 0
  %3856 = vmatpush1.bf16.msra.mxu0 %v3782
  %3857 = vmatprep.subr.bf16.mxu0 0
  %3858 = vmatpush1.bf16.msra.mxu0 %v3783
  %3859 = vmatprep.subr.bf16.mxu0 0
  %3860 = vmatpush1.bf16.msra.mxu0 %v3784
  %3861 = vmatprep.subr.bf16.mxu0 0
  %3862 = vmatpush1.bf16.msra.mxu0 %v3785
  %3863 = vmatprep.subr.bf16.mxu0 0
  %3864 = vmatpush1.bf16.msra.mxu0 %v3786
  %3865 = vmatprep.subr.bf16.mxu0 0
  %3866 = vmatpush1.bf16.msra.mxu0 %v3787
  %3867 = vmatprep.subr.bf16.mxu0 0
  %3868 = vmatpush1.bf16.msra.mxu0 %v3788
  %3869 = vmatprep.mubr.bf16.mxu0 %v3577
  %3870 = vmatmul.mubr.bf16.gmra.mrb[0].mxu0 %v3576
  %v3871 = vpop.f32.mrb[0].mxu0
  %v3872 = vadd.f32 0.0, %v3871
  %v3873 = vpop.f32.mrb[0].mxu0
  %v3874 = vpop.f32.mrb[0].mxu0
  %v3875 = vadd.f32 0.0, %v3874
  %v3876 = vpop.f32.mrb[0].mxu0
  %3877 = vdwg.mxu0
  %3878 = vmatprep.subr.bf16.mxu0 0
  %3879 = vmatpush1.bf16.msra.mxu0 %v3789
  %3880 = vmatprep.subr.bf16.mxu0 0
  %3881 = vmatpush1.bf16.msra.mxu0 %v3790
  %3882 = vmatprep.subr.bf16.mxu0 0
  %3883 = vmatpush1.bf16.msra.mxu0 %v3791
  %3884 = vmatprep.subr.bf16.mxu0 0
  %3885 = vmatpush1.bf16.msra.mxu0 %v3792
  %3886 = vmatprep.subr.bf16.mxu0 0
  %3887 = vmatpush1.bf16.msra.mxu0 %v3793
  %3888 = vmatprep.subr.bf16.mxu0 0
  %3889 = vmatpush1.bf16.msra.mxu0 %v3794
  %3890 = vmatprep.subr.bf16.mxu0 0
  %3891 = vmatpush1.bf16.msra.mxu0 %v3795
  %3892 = vmatprep.subr.bf16.mxu0 0
  %3893 = vmatpush1.bf16.msra.mxu0 %v3796
  %3894 = vmatprep.subr.bf16.mxu0 0
  %3895 = vmatpush1.bf16.msra.mxu0 %v3797
  %3896 = vmatprep.subr.bf16.mxu0 0
  %3897 = vmatpush1.bf16.msra.mxu0 %v3798
  %3898 = vmatprep.subr.bf16.mxu0 0
  %3899 = vmatpush1.bf16.msra.mxu0 %v3799
  %3900 = vmatprep.subr.bf16.mxu0 0
  %3901 = vmatpush1.bf16.msra.mxu0 %v3800
  %3902 = vmatprep.subr.bf16.mxu0 0
  %3903 = vmatpush1.bf16.msra.mxu0 %v3801
  %3904 = vmatprep.subr.bf16.mxu0 0
  %3905 = vmatpush1.bf16.msra.mxu0 %v3802
  %3906 = vmatprep.subr.bf16.mxu0 0
  %3907 = vmatpush1.bf16.msra.mxu0 %v3803
  %3908 = vmatprep.subr.bf16.mxu0 0
  %3909 = vmatpush1.bf16.msra.mxu0 %v3804
  %3910 = vmatprep.mubr.bf16.mxu0 %v3579
  %3911 = vmatmul.mubr.bf16.gmra.mrb[0].mxu0 %v3578
  %v3912 = vpop.f32.mrb[0].mxu0
  %v3913 = vadd.f32 %v3872, %v3912
  %v3914 = vpop.f32.mrb[0].mxu0
  %v3915 = vpop.f32.mrb[0].mxu0
  %v3916 = vadd.f32 %v3875, %v3915
  %v3917 = vpop.f32.mrb[0].mxu0
  %3918 = vdwg.mxu0
  %v3919 = vadd.f32 %v3155, %v3913
  %v3920 = vadd.f32 %v3156, %v3916
  %s3921 = scalar_lea.vmem %s16, 1
  %v3922 = vld [vmem:[%s3921] sm:$0x1]
  %v3924 = vlaneseq
  %v3925 = vshrl.u32 %v3924, 7
  %v3926 = vsub.s32 0, %v3925
  %v3927 = vrot.slane %v3922, %v3926
  %v3929 = vadd.f32 %v3919, %v3927
  %v3930 = vadd.f32 %v3920, %v3927
  %v3931 = vld [vmem:[%s3] sm:$0x3]
  %v3933 = vsel %vm617, %v3931, 0
  %v3936 = vsel %vm235, %v3930, 0
  %3938 = vmatprep.subr.mxu0 0.0
  %3939 = vmatpush1.msra.mxu0 %v3929
  %3940 = vmatprep.subr.mxu0 0.0
  %3941 = vmatpush1.msra.mxu0 %v3936
  %3942 = vmatprep.subr.mxu0 0.0
  %3943 = vmatpush1.msra.mxu0 0.0
  %3944 = vmatprep.subr.mxu0 0.0
  %3945 = vmatpush1.msra.mxu0 0.0
  %3946 = vmatprep.subr.mxu0 0.0
  %3947 = vmatpush1.msra.mxu0 0.0
  %3948 = vmatprep.subr.mxu0 0.0
  %3949 = vmatpush1.msra.mxu0 0.0
  %3950 = vmatprep.subr.mxu0 0.0
  %3951 = vmatpush1.msra.mxu0 0.0
  %3952 = vmatprep.subr.mxu0 0.0
  %3953 = vmatpush1.msra.mxu0 0.0
  %3954 = vmatprep.subr.mxu0 0.0
  %3955 = vmatpush1.msra.mxu0 0.0
  %3956 = vmatprep.subr.mxu0 0.0
  %3957 = vmatpush1.msra.mxu0 0.0
  %3958 = vmatprep.subr.mxu0 0.0
  %3959 = vmatpush1.msra.mxu0 0.0
  %3960 = vmatprep.subr.mxu0 0.0
  %3961 = vmatpush1.msra.mxu0 0.0
  %3962 = vmatprep.subr.mxu0 0.0
  %3963 = vmatpush1.msra.mxu0 0.0
  %3964 = vmatprep.subr.mxu0 0.0
  %3965 = vmatpush1.msra.mxu0 0.0
  %3966 = vmatprep.subr.mxu0 0.0
  %3967 = vmatpush1.msra.mxu0 0.0
  %3968 = vmatprep.subr.mxu0 0.0
  %3969 = vmatpush1.msra.mxu0 0.0
  %3970 = vmatprep.subr.mxu0 0.0
  %3971 = vmatpush1.msra.mxu0 0.0
  %3972 = vmatprep.subr.mxu0 0.0
  %3973 = vmatpush1.msra.mxu0 0.0
  %3974 = vmatprep.subr.mxu0 0.0
  %3975 = vmatpush1.msra.mxu0 0.0
  %3976 = vmatprep.subr.mxu0 0.0
  %3977 = vmatpush1.msra.mxu0 0.0
  %3978 = vmatprep.subr.mxu0 0.0
  %3979 = vmatpush1.msra.mxu0 0.0
  %3980 = vmatprep.subr.mxu0 0.0
  %3981 = vmatpush1.msra.mxu0 0.0
  %3982 = vmatprep.subr.mxu0 0.0
  %3983 = vmatpush1.msra.mxu0 0.0
  %3984 = vmatprep.subr.mxu0 0.0
  %3985 = vmatpush1.msra.mxu0 0.0
  %3986 = vmatprep.subr.mxu0 0.0
  %3987 = vmatpush1.msra.mxu0 0.0
  %3988 = vmatprep.subr.mxu0 0.0
  %3989 = vmatpush1.msra.mxu0 0.0
  %3990 = vmatprep.subr.mxu0 0.0
  %3991 = vmatpush1.msra.mxu0 0.0
  %3992 = vmatprep.subr.mxu0 0.0
  %3993 = vmatpush1.msra.mxu0 0.0
  %3994 = vmatprep.subr.mxu0 0.0
  %3995 = vmatpush1.msra.mxu0 0.0
  %3996 = vmatprep.subr.mxu0 0.0
  %3997 = vmatpush1.msra.mxu0 0.0
  %3998 = vmatprep.subr.mxu0 0.0
  %3999 = vmatpush1.msra.mxu0 0.0
  %4000 = vmatprep.subr.mxu0 0.0
  %4001 = vmatpush1.msra.mxu0 0.0
  %4002 = vmatprep.mubr.f32.mxu0 0.0
  %4003 = vmatmul.mubr.f32.gmra.mrb[0].mxu0 %v3933
  %v4004 = vpop.f32.mrb[0].mxu0
  %v4005 = vadd.f32 0.0, %v4004
  %v4006 = vpop.f32.mrb[0].mxu0
  %4007 = vdwg.mxu0
  %v4008 = vld [vmem:[%s17] sm:$0x1]
  %v4009 = vld [vmem:[%s18] sm:$0x1]
  %v4010 = vsel %vm235, %v4005, 0.0
  %4011 = vadd.xlane.f32.xlu0 %v4010
  %v4012 = vpop.xlane.xlu0 %4011
  %v4013 = vmul.f32 %v4012, %v239
  %v4014 = vsub.f32 %v4005, %v4013
  %v4015 = vmul.f32 %v4014, %v4014
  %v4016 = vsel %vm235, %v4015, 0.0
  %4017 = vadd.xlane.f32.xlu0 %v4016
  %v4018 = vpop.xlane.xlu0 %4017
  %v4019 = vmul.f32 %v4018, %v239
  %v4020 = vadd.f32 %v4019, 1e-06
  %v4021 = vrsqrt.pop %v4020
  %v4022 = vmul.f32 %v4014, %v4021
  %v4024 = vlaneseq
  %v4025 = vshrl.u32 %v4024, 7
  %v4026 = vsub.s32 0, %v4025
  %v4027 = vrot.slane %v4008, %v4026
  %v4029 = vmul.f32 %v4022, %v4027
  %v4031 = vlaneseq
  %v4032 = vshrl.u32 %v4031, 7
  %v4033 = vsub.s32 0, %v4032
  %v4034 = vrot.slane %v4009, %v4033
  %v4036 = vadd.f32 %v4029, %v4034
  %v4037 = vpack.c.bf16 %v4036, %v4036
  %v4038 = vld [vmem:[%s19] sm:$0xff]
  %v4039 = vld [vmem:[%s19 + $0x8] sm:$0xff]
  %v4040 = vld [vmem:[%s19 + $0x10] sm:$0xff]
  %v4041 = vld [vmem:[%s19 + $0x18] sm:$0xff]
  %v4042 = vld [vmem:[%s19 + $0x20] sm:$0xff]
  %v4043 = vld [vmem:[%s19 + $0x28] sm:$0xff]
  %v4044 = vld [vmem:[%s19 + $0x30] sm:$0xff]
  %v4045 = vld [vmem:[%s19 + $0x38] sm:$0xff]
  %v4046 = vld [vmem:[%s19 + $0x40] sm:$0xff]
  %v4047 = vld [vmem:[%s19 + $0x48] sm:$0xff]
  %v4048 = vld [vmem:[%s19 + $0x50] sm:$0xff]
  %v4049 = vld [vmem:[%s19 + $0x58] sm:$0xff]
  %v4050 = vld [vmem:[%s19 + $0x60] sm:$0xff]
  %v4051 = vld [vmem:[%s19 + $0x68] sm:$0xff]
  %v4052 = vld [vmem:[%s19 + $0x70] sm:$0xff]
  %v4053 = vld [vmem:[%s19 + $0x78] sm:$0xff]
  %v4054 = vld [vmem:[%s19 + $0x80] sm:$0xff]
  %v4055 = vld [vmem:[%s19 + $0x88] sm:$0xff]
  %v4056 = vld [vmem:[%s19 + $0x90] sm:$0xff]
  %v4057 = vld [vmem:[%s19 + $0x98] sm:$0xff]
  %v4058 = vld [vmem:[%s19 + $0xa0] sm:$0xff]
  %v4059 = vld [vmem:[%s19 + $0xa8] sm:$0xff]
  %v4060 = vld [vmem:[%s19 + $0xb0] sm:$0xff]
  %v4061 = vld [vmem:[%s19 + $0xb8] sm:$0xff]
  %v4062 = vld [vmem:[%s19 + $0xc0] sm:$0xff]
  %v4063 = vld [vmem:[%s19 + $0xc8] sm:$0xff]
  %v4064 = vld [vmem:[%s19 + $0xd0] sm:$0xff]
  %v4065 = vld [vmem:[%s19 + $0xd8] sm:$0xff]
  %v4066 = vld [vmem:[%s19 + $0xe0] sm:$0xff]
  %v4067 = vld [vmem:[%s19 + $0xe8] sm:$0xff]
  %v4068 = vld [vmem:[%s19 + $0xf0] sm:$0xff]
  %v4069 = vld [vmem:[%s19 + $0xf8] sm:$0xff]
  %v4070 = vld [vmem:[%s19 + $0x100] sm:$0xff]
  %v4071 = vld [vmem:[%s19 + $0x108] sm:$0xff]
  %v4072 = vld [vmem:[%s19 + $0x110] sm:$0xff]
  %v4073 = vld [vmem:[%s19 + $0x118] sm:$0xff]
  %v4074 = vld [vmem:[%s19 + $0x120] sm:$0xff]
  %v4075 = vld [vmem:[%s19 + $0x128] sm:$0xff]
  %v4076 = vld [vmem:[%s19 + $0x130] sm:$0xff]
  %v4077 = vld [vmem:[%s19 + $0x138] sm:$0xff]
  %v4078 = vld [vmem:[%s19 + $0x140] sm:$0xff]
  %v4079 = vld [vmem:[%s19 + $0x148] sm:$0xff]
  %v4080 = vld [vmem:[%s19 + $0x150] sm:$0xff]
  %v4081 = vld [vmem:[%s19 + $0x158] sm:$0xff]
  %v4082 = vld [vmem:[%s19 + $0x160] sm:$0xff]
  %v4083 = vld [vmem:[%s19 + $0x168] sm:$0xff]
  %v4084 = vld [vmem:[%s19 + $0x170] sm:$0xff]
  %v4085 = vld [vmem:[%s19 + $0x178] sm:$0xff]
  %v4086 = vld [vmem:[%s20] sm:$0x3f]
  %v4088 = vlaneseq
  %v4089 = vshrl.u32 %v4088, 7
  %v4090 = vsub.s32 0, %v4089
  %v4091 = vrot.slane %v4086, %v4090
  %v4092 = vlaneseq
  %v4093 = vshrl.u32 %v4092, 7
  %v4094 = vsub.s32 1, %v4093
  %v4095 = vrot.slane %v4086, %v4094
  %v4096 = vlaneseq
  %v4097 = vshrl.u32 %v4096, 7
  %v4098 = vsub.s32 2, %v4097
  %v4099 = vrot.slane %v4086, %v4098
  %v4100 = vlaneseq
  %v4101 = vshrl.u32 %v4100, 7
  %v4102 = vsub.s32 3, %v4101
  %v4103 = vrot.slane %v4086, %v4102
  %v4104 = vlaneseq
  %v4105 = vshrl.u32 %v4104, 7
  %v4106 = vsub.s32 4, %v4105
  %v4107 = vrot.slane %v4086, %v4106
  %v4108 = vlaneseq
  %v4109 = vshrl.u32 %v4108, 7
  %v4110 = vsub.s32 5, %v4109
  %v4111 = vrot.slane %v4086, %v4110
  %v4166 = vunpack.c.l.b16 %v4038
  %v4167 = vunpack.c.h.b16 %v4038
  %v4168 = vunpack.c.l.b16 %v4039
  %v4169 = vunpack.c.h.b16 %v4039
  %v4170 = vunpack.c.l.b16 %v4040
  %v4171 = vunpack.c.h.b16 %v4040
  %v4172 = vunpack.c.l.b16 %v4041
  %v4173 = vunpack.c.h.b16 %v4041
  %v4174 = vunpack.c.l.b16 %v4042
  %v4175 = vunpack.c.h.b16 %v4042
  %v4176 = vunpack.c.l.b16 %v4043
  %v4177 = vunpack.c.h.b16 %v4043
  %v4178 = vunpack.c.l.b16 %v4044
  %v4179 = vunpack.c.h.b16 %v4044
  %v4180 = vunpack.c.l.b16 %v4045
  %v4181 = vunpack.c.h.b16 %v4045
  %v4182 = vunpack.c.l.b16 %v4046
  %v4183 = vunpack.c.h.b16 %v4046
  %v4184 = vunpack.c.l.b16 %v4047
  %v4185 = vunpack.c.h.b16 %v4047
  %v4186 = vunpack.c.l.b16 %v4048
  %v4187 = vunpack.c.h.b16 %v4048
  %v4188 = vunpack.c.l.b16 %v4049
  %v4189 = vunpack.c.h.b16 %v4049
  %v4190 = vunpack.c.l.b16 %v4050
  %v4191 = vunpack.c.h.b16 %v4050
  %v4192 = vunpack.c.l.b16 %v4051
  %v4193 = vunpack.c.h.b16 %v4051
  %v4194 = vunpack.c.l.b16 %v4052
  %v4195 = vunpack.c.h.b16 %v4052
  %v4196 = vunpack.c.l.b16 %v4053
  %v4197 = vunpack.c.h.b16 %v4053
  %v4198 = vunpack.c.l.b16 %v4054
  %v4199 = vunpack.c.h.b16 %v4054
  %v4200 = vunpack.c.l.b16 %v4055
  %v4201 = vunpack.c.h.b16 %v4055
  %v4202 = vunpack.c.l.b16 %v4056
  %v4203 = vunpack.c.h.b16 %v4056
  %v4204 = vunpack.c.l.b16 %v4057
  %v4205 = vunpack.c.h.b16 %v4057
  %v4206 = vunpack.c.l.b16 %v4058
  %v4207 = vunpack.c.h.b16 %v4058
  %v4208 = vunpack.c.l.b16 %v4059
  %v4209 = vunpack.c.h.b16 %v4059
  %v4210 = vunpack.c.l.b16 %v4060
  %v4211 = vunpack.c.h.b16 %v4060
  %v4212 = vunpack.c.l.b16 %v4061
  %v4213 = vunpack.c.h.b16 %v4061
  %v4214 = vunpack.c.l.b16 %v4062
  %v4215 = vunpack.c.h.b16 %v4062
  %v4216 = vunpack.c.l.b16 %v4063
  %v4217 = vunpack.c.h.b16 %v4063
  %v4218 = vunpack.c.l.b16 %v4064
  %v4219 = vunpack.c.h.b16 %v4064
  %v4220 = vunpack.c.l.b16 %v4065
  %v4221 = vunpack.c.h.b16 %v4065
  %v4222 = vunpack.c.l.b16 %v4066
  %v4223 = vunpack.c.h.b16 %v4066
  %v4224 = vunpack.c.l.b16 %v4067
  %v4225 = vunpack.c.h.b16 %v4067
  %v4226 = vunpack.c.l.b16 %v4068
  %v4227 = vunpack.c.h.b16 %v4068
  %v4228 = vunpack.c.l.b16 %v4069
  %v4229 = vunpack.c.h.b16 %v4069
  %v4230 = vunpack.c.l.b16 %v4070
  %v4231 = vunpack.c.h.b16 %v4070
  %v4232 = vunpack.c.l.b16 %v4071
  %v4233 = vunpack.c.h.b16 %v4071
  %v4234 = vunpack.c.l.b16 %v4072
  %v4235 = vunpack.c.h.b16 %v4072
  %v4236 = vunpack.c.l.b16 %v4073
  %v4237 = vunpack.c.h.b16 %v4073
  %v4238 = vunpack.c.l.b16 %v4074
  %v4239 = vunpack.c.h.b16 %v4074
  %v4240 = vunpack.c.l.b16 %v4075
  %v4241 = vunpack.c.h.b16 %v4075
  %v4242 = vunpack.c.l.b16 %v4076
  %v4243 = vunpack.c.h.b16 %v4076
  %v4244 = vunpack.c.l.b16 %v4077
  %v4245 = vunpack.c.h.b16 %v4077
  %v4246 = vunpack.c.l.b16 %v4078
  %v4247 = vunpack.c.h.b16 %v4078
  %v4248 = vunpack.c.l.b16 %v4079
  %v4249 = vunpack.c.h.b16 %v4079
  %v4250 = vunpack.c.l.b16 %v4080
  %v4251 = vunpack.c.h.b16 %v4080
  %v4252 = vunpack.c.l.b16 %v4081
  %v4253 = vunpack.c.h.b16 %v4081
  %v4254 = vunpack.c.l.b16 %v4082
  %v4255 = vunpack.c.h.b16 %v4082
  %v4256 = vunpack.c.l.b16 %v4083
  %v4257 = vunpack.c.h.b16 %v4083
  %v4258 = vunpack.c.l.b16 %v4084
  %v4259 = vunpack.c.h.b16 %v4084
  %v4260 = vunpack.c.l.b16 %v4085
  %v4261 = vunpack.c.h.b16 %v4085
  %v4262 = vpack.c.b16 %v4172, %v4166
  %v4263 = vpack.c.b16 %v4173, %v4167
  %v4264 = vpack.c.b16 %v4174, %v4168
  %v4265 = vpack.c.b16 %v4175, %v4169
  %v4266 = vpack.c.b16 %v4176, %v4170
  %v4267 = vpack.c.b16 %v4177, %v4171
  %v4268 = vpack.c.b16 %v4184, %v4178
  %v4269 = vpack.c.b16 %v4185, %v4179
  %v4270 = vpack.c.b16 %v4186, %v4180
  %v4271 = vpack.c.b16 %v4187, %v4181
  %v4272 = vpack.c.b16 %v4188, %v4182
  %v4273 = vpack.c.b16 %v4189, %v4183
  %v4274 = vpack.c.b16 %v4196, %v4190
  %v4275 = vpack.c.b16 %v4197, %v4191
  %v4276 = vpack.c.b16 %v4198, %v4192
  %v4277 = vpack.c.b16 %v4199, %v4193
  %v4278 = vpack.c.b16 %v4200, %v4194
  %v4279 = vpack.c.b16 %v4201, %v4195
  %v4280 = vpack.c.b16 %v4208, %v4202
  %v4281 = vpack.c.b16 %v4209, %v4203
  %v4282 = vpack.c.b16 %v4210, %v4204
  %v4283 = vpack.c.b16 %v4211, %v4205
  %v4284 = vpack.c.b16 %v4212, %v4206
  %v4285 = vpack.c.b16 %v4213, %v4207
  %v4286 = vpack.c.b16 %v4220, %v4214
  %v4287 = vpack.c.b16 %v4221, %v4215
  %v4288 = vpack.c.b16 %v4222, %v4216
  %v4289 = vpack.c.b16 %v4223, %v4217
  %v4290 = vpack.c.b16 %v4224, %v4218
  %v4291 = vpack.c.b16 %v4225, %v4219
  %v4292 = vpack.c.b16 %v4232, %v4226
  %v4293 = vpack.c.b16 %v4233, %v4227
  %v4294 = vpack.c.b16 %v4234, %v4228
  %v4295 = vpack.c.b16 %v4235, %v4229
  %v4296 = vpack.c.b16 %v4236, %v4230
  %v4297 = vpack.c.b16 %v4237, %v4231
  %v4298 = vpack.c.b16 %v4244, %v4238
  %v4299 = vpack.c.b16 %v4245, %v4239
  %v4300 = vpack.c.b16 %v4246, %v4240
  %v4301 = vpack.c.b16 %v4247, %v4241
  %v4302 = vpack.c.b16 %v4248, %v4242
  %v4303 = vpack.c.b16 %v4249, %v4243
  %v4304 = vpack.c.b16 %v4256, %v4250
  %v4305 = vpack.c.b16 %v4257, %v4251
  %v4306 = vpack.c.b16 %v4258, %v4252
  %v4307 = vpack.c.b16 %v4259, %v4253
  %v4308 = vpack.c.b16 %v4260, %v4254
  %v4309 = vpack.c.b16 %v4261, %v4255
  %4358 = vmatprep.subr.bf16.mxu0 %v4263
  %4359 = vmatpush1.bf16.msra.mxu0 %v4262
  %4360 = vmatprep.subr.bf16.mxu0 %v4269
  %4361 = vmatpush1.bf16.msra.mxu0 %v4268
  %4362 = vmatprep.subr.bf16.mxu0 %v4275
  %4363 = vmatpush1.bf16.msra.mxu0 %v4274
  %4364 = vmatprep.subr.bf16.mxu0 %v4281
  %4365 = vmatpush1.bf16.msra.mxu0 %v4280
  %4366 = vmatprep.subr.bf16.mxu0 %v4287
  %4367 = vmatpush1.bf16.msra.mxu0 %v4286
  %4368 = vmatprep.subr.bf16.mxu0 %v4293
  %4369 = vmatpush1.bf16.msra.mxu0 %v4292
  %4370 = vmatprep.subr.bf16.mxu0 %v4299
  %4371 = vmatpush1.bf16.msra.mxu0 %v4298
  %4372 = vmatprep.subr.bf16.mxu0 %v4305
  %4373 = vmatpush1.bf16.msra.mxu0 %v4304
  %4374 = vmatprep.subr.bf16.mxu0 0
  %4375 = vmatpush1.bf16.msra.mxu0 0
  %4376 = vmatprep.subr.bf16.mxu0 0
  %4377 = vmatpush1.bf16.msra.mxu0 0
  %4378 = vmatprep.subr.bf16.mxu0 0
  %4379 = vmatpush1.bf16.msra.mxu0 0
  %4380 = vmatprep.subr.bf16.mxu0 0
  %4381 = vmatpush1.bf16.msra.mxu0 0
  %4382 = vmatprep.subr.bf16.mxu0 0
  %4383 = vmatpush1.bf16.msra.mxu0 0
  %4384 = vmatprep.subr.bf16.mxu0 0
  %4385 = vmatpush1.bf16.msra.mxu0 0
  %4386 = vmatprep.subr.bf16.mxu0 0
  %4387 = vmatpush1.bf16.msra.mxu0 0
  %4388 = vmatprep.subr.bf16.mxu0 0
  %4389 = vmatpush1.bf16.msra.mxu0 0
  %4390 = vmatprep.mubr.bf16.mxu0 0
  %4391 = vmatmul.mubr.bf16.gmra.mrb[0].mxu0 %v4037
  %v4392 = vpop.f32.mrb[0].mxu0
  %v4393 = vadd.f32 %v4091, %v4392
  %v4394 = vpop.f32.mrb[0].mxu0
  %v4395 = vadd.f32 %v4095, %v4394
  %v4396 = vpop.f32.mrb[0].mxu0
  %v4397 = vpop.f32.mrb[0].mxu0
  %4398 = vdwg.mxu0
  %4399 = vmatprep.subr.bf16.mxu0 %v4265
  %4400 = vmatpush1.bf16.msra.mxu0 %v4264
  %4401 = vmatprep.subr.bf16.mxu0 %v4271
  %4402 = vmatpush1.bf16.msra.mxu0 %v4270
  %4403 = vmatprep.subr.bf16.mxu0 %v4277
  %4404 = vmatpush1.bf16.msra.mxu0 %v4276
  %4405 = vmatprep.subr.bf16.mxu0 %v4283
  %4406 = vmatpush1.bf16.msra.mxu0 %v4282
  %4407 = vmatprep.subr.bf16.mxu0 %v4289
  %4408 = vmatpush1.bf16.msra.mxu0 %v4288
  %4409 = vmatprep.subr.bf16.mxu0 %v4295
  %4410 = vmatpush1.bf16.msra.mxu0 %v4294
  %4411 = vmatprep.subr.bf16.mxu0 %v4301
  %4412 = vmatpush1.bf16.msra.mxu0 %v4300
  %4413 = vmatprep.subr.bf16.mxu0 %v4307
  %4414 = vmatpush1.bf16.msra.mxu0 %v4306
  %4415 = vmatprep.subr.bf16.mxu0 0
  %4416 = vmatpush1.bf16.msra.mxu0 0
  %4417 = vmatprep.subr.bf16.mxu0 0
  %4418 = vmatpush1.bf16.msra.mxu0 0
  %4419 = vmatprep.subr.bf16.mxu0 0
  %4420 = vmatpush1.bf16.msra.mxu0 0
  %4421 = vmatprep.subr.bf16.mxu0 0
  %4422 = vmatpush1.bf16.msra.mxu0 0
  %4423 = vmatprep.subr.bf16.mxu0 0
  %4424 = vmatpush1.bf16.msra.mxu0 0
  %4425 = vmatprep.subr.bf16.mxu0 0
  %4426 = vmatpush1.bf16.msra.mxu0 0
  %4427 = vmatprep.subr.bf16.mxu0 0
  %4428 = vmatpush1.bf16.msra.mxu0 0
  %4429 = vmatprep.subr.bf16.mxu0 0
  %4430 = vmatpush1.bf16.msra.mxu0 0
  %4431 = vmatprep.mubr.bf16.mxu0 0
  %4432 = vmatmul.mubr.bf16.gmra.mrb[0].mxu0 %v4037
  %v4433 = vpop.f32.mrb[0].mxu0
  %v4434 = vadd.f32 %v4099, %v4433
  %v4435 = vpop.f32.mrb[0].mxu0
  %v4436 = vadd.f32 %v4103, %v4435
  %v4437 = vpop.f32.mrb[0].mxu0
  %v4438 = vpop.f32.mrb[0].mxu0
  %4439 = vdwg.mxu0
  %4440 = vmatprep.subr.bf16.mxu0 %v4267
  %4441 = vmatpush1.bf16.msra.mxu0 %v4266
  %4442 = vmatprep.subr.bf16.mxu0 %v4273
  %4443 = vmatpush1.bf16.msra.mxu0 %v4272
  %4444 = vmatprep.subr.bf16.mxu0 %v4279
  %4445 = vmatpush1.bf16.msra.mxu0 %v4278
  %4446 = vmatprep.subr.bf16.mxu0 %v4285
  %4447 = vmatpush1.bf16.msra.mxu0 %v4284
  %4448 = vmatprep.subr.bf16.mxu0 %v4291
  %4449 = vmatpush1.bf16.msra.mxu0 %v4290
  %4450 = vmatprep.subr.bf16.mxu0 %v4297
  %4451 = vmatpush1.bf16.msra.mxu0 %v4296
  %4452 = vmatprep.subr.bf16.mxu0 %v4303
  %4453 = vmatpush1.bf16.msra.mxu0 %v4302
  %4454 = vmatprep.subr.bf16.mxu0 %v4309
  %4455 = vmatpush1.bf16.msra.mxu0 %v4308
  %4456 = vmatprep.subr.bf16.mxu0 0
  %4457 = vmatpush1.bf16.msra.mxu0 0
  %4458 = vmatprep.subr.bf16.mxu0 0
  %4459 = vmatpush1.bf16.msra.mxu0 0
  %4460 = vmatprep.subr.bf16.mxu0 0
  %4461 = vmatpush1.bf16.msra.mxu0 0
  %4462 = vmatprep.subr.bf16.mxu0 0
  %4463 = vmatpush1.bf16.msra.mxu0 0
  %4464 = vmatprep.subr.bf16.mxu0 0
  %4465 = vmatpush1.bf16.msra.mxu0 0
  %4466 = vmatprep.subr.bf16.mxu0 0
  %4467 = vmatpush1.bf16.msra.mxu0 0
  %4468 = vmatprep.subr.bf16.mxu0 0
  %4469 = vmatpush1.bf16.msra.mxu0 0
  %4470 = vmatprep.subr.bf16.mxu0 0
  %4471 = vmatpush1.bf16.msra.mxu0 0
  %4472 = vmatprep.mubr.bf16.mxu0 0
  %4473 = vmatmul.mubr.bf16.gmra.mrb[0].mxu0 %v4037
  %v4474 = vpop.f32.mrb[0].mxu0
  %v4475 = vadd.f32 %v4107, %v4474
  %v4476 = vpop.f32.mrb[0].mxu0
  %v4477 = vadd.f32 %v4111, %v4476
  %v4478 = vpop.f32.mrb[0].mxu0
  %v4479 = vpop.f32.mrb[0].mxu0
  %4480 = vdwg.mxu0
  %v4481 = vmax.f32 %v4393, 0.0
  %v4482 = vmax.f32 %v4395, 0.0
  %v4483 = vmax.f32 %v4434, 0.0
  %v4484 = vmax.f32 %v4436, 0.0
  %v4485 = vmax.f32 %v4475, 0.0
  %v4486 = vmax.f32 %v4477, 0.0
  %v4487 = vpack.c.bf16 %v4481, %v4481
  %v4488 = vpack.c.bf16 %v4482, %v4482
  %v4489 = vpack.c.bf16 %v4483, %v4483
  %v4490 = vpack.c.bf16 %v4484, %v4484
  %v4491 = vpack.c.bf16 %v4485, %v4485
  %v4492 = vpack.c.bf16 %v4486, %v4486
  %v4493 = vld [vmem:[%s21] sm:$0xf]
  %v4494 = vld [vmem:[%s21 + $0x4] sm:$0xf]
  %v4495 = vld [vmem:[%s21 + $0x8] sm:$0xf]
  %v4496 = vld [vmem:[%s21 + $0xc] sm:$0xf]
  %v4497 = vld [vmem:[%s21 + $0x10] sm:$0xf]
  %v4498 = vld [vmem:[%s21 + $0x14] sm:$0xf]
  %v4499 = vld [vmem:[%s21 + $0x18] sm:$0xf]
  %v4500 = vld [vmem:[%s21 + $0x1c] sm:$0xf]
  %v4501 = vld [vmem:[%s21 + $0x20] sm:$0xf]
  %v4502 = vld [vmem:[%s21 + $0x24] sm:$0xf]
  %v4503 = vld [vmem:[%s21 + $0x28] sm:$0xf]
  %v4504 = vld [vmem:[%s21 + $0x2c] sm:$0xf]
  %v4505 = vld [vmem:[%s21 + $0x30] sm:$0xf]
  %v4506 = vld [vmem:[%s21 + $0x34] sm:$0xf]
  %v4507 = vld [vmem:[%s21 + $0x38] sm:$0xf]
  %v4508 = vld [vmem:[%s21 + $0x3c] sm:$0xf]
  %v4509 = vld [vmem:[%s21 + $0x40] sm:$0xf]
  %v4510 = vld [vmem:[%s21 + $0x44] sm:$0xf]
  %v4511 = vld [vmem:[%s21 + $0x48] sm:$0xf]
  %v4512 = vld [vmem:[%s21 + $0x4c] sm:$0xf]
  %v4513 = vld [vmem:[%s21 + $0x50] sm:$0xf]
  %v4514 = vld [vmem:[%s21 + $0x54] sm:$0xf]
  %v4515 = vld [vmem:[%s21 + $0x58] sm:$0xf]
  %v4516 = vld [vmem:[%s21 + $0x5c] sm:$0xf]
  %v4517 = vld [vmem:[%s21 + $0x60] sm:$0xf]
  %v4518 = vld [vmem:[%s21 + $0x64] sm:$0xf]
  %v4519 = vld [vmem:[%s21 + $0x68] sm:$0xf]
  %v4520 = vld [vmem:[%s21 + $0x6c] sm:$0xf]
  %v4521 = vld [vmem:[%s21 + $0x70] sm:$0xf]
  %v4522 = vld [vmem:[%s21 + $0x74] sm:$0xf]
  %v4523 = vld [vmem:[%s21 + $0x78] sm:$0xf]
  %v4524 = vld [vmem:[%s21 + $0x7c] sm:$0xf]
  %v4525 = vld [vmem:[%s21 + $0x80] sm:$0xf]
  %v4526 = vld [vmem:[%s21 + $0x84] sm:$0xf]
  %v4527 = vld [vmem:[%s21 + $0x88] sm:$0xf]
  %v4528 = vld [vmem:[%s21 + $0x8c] sm:$0xf]
  %v4529 = vld [vmem:[%s21 + $0x90] sm:$0xf]
  %v4530 = vld [vmem:[%s21 + $0x94] sm:$0xf]
  %v4531 = vld [vmem:[%s21 + $0x98] sm:$0xf]
  %v4532 = vld [vmem:[%s21 + $0x9c] sm:$0xf]
  %v4533 = vld [vmem:[%s21 + $0xa0] sm:$0xf]
  %v4534 = vld [vmem:[%s21 + $0xa4] sm:$0xf]
  %v4535 = vld [vmem:[%s21 + $0xa8] sm:$0xf]
  %v4536 = vld [vmem:[%s21 + $0xac] sm:$0xf]
  %v4537 = vld [vmem:[%s21 + $0xb0] sm:$0xf]
  %v4538 = vld [vmem:[%s21 + $0xb4] sm:$0xf]
  %v4539 = vld [vmem:[%s21 + $0xb8] sm:$0xf]
  %v4540 = vld [vmem:[%s21 + $0xbc] sm:$0xf]
  %v4541 = vld [vmem:[%s21 + $0xc0] sm:$0xf]
  %v4542 = vld [vmem:[%s21 + $0xc4] sm:$0xf]
  %v4543 = vld [vmem:[%s21 + $0xc8] sm:$0xf]
  %v4544 = vld [vmem:[%s21 + $0xcc] sm:$0xf]
  %v4545 = vld [vmem:[%s21 + $0xd0] sm:$0xf]
  %v4546 = vld [vmem:[%s21 + $0xd4] sm:$0xf]
  %v4547 = vld [vmem:[%s21 + $0xd8] sm:$0xf]
  %v4548 = vld [vmem:[%s21 + $0xdc] sm:$0xf]
  %v4549 = vld [vmem:[%s21 + $0xe0] sm:$0xf]
  %v4550 = vld [vmem:[%s21 + $0xe4] sm:$0xf]
  %v4551 = vld [vmem:[%s21 + $0xe8] sm:$0xf]
  %v4552 = vld [vmem:[%s21 + $0xec] sm:$0xf]
  %v4553 = vld [vmem:[%s21 + $0xf0] sm:$0xf]
  %v4554 = vld [vmem:[%s21 + $0xf4] sm:$0xf]
  %v4555 = vld [vmem:[%s21 + $0xf8] sm:$0xf]
  %v4556 = vld [vmem:[%s21 + $0xfc] sm:$0xf]
  %v4557 = vld [vmem:[%s21 + $0x100] sm:$0xf]
  %v4558 = vld [vmem:[%s21 + $0x104] sm:$0xf]
  %v4559 = vld [vmem:[%s21 + $0x108] sm:$0xf]
  %v4560 = vld [vmem:[%s21 + $0x10c] sm:$0xf]
  %v4561 = vld [vmem:[%s21 + $0x110] sm:$0xf]
  %v4562 = vld [vmem:[%s21 + $0x114] sm:$0xf]
  %v4563 = vld [vmem:[%s21 + $0x118] sm:$0xf]
  %v4564 = vld [vmem:[%s21 + $0x11c] sm:$0xf]
  %v4565 = vld [vmem:[%s21 + $0x120] sm:$0xf]
  %v4566 = vld [vmem:[%s21 + $0x124] sm:$0xf]
  %v4567 = vld [vmem:[%s21 + $0x128] sm:$0xf]
  %v4568 = vld [vmem:[%s21 + $0x12c] sm:$0xf]
  %v4569 = vld [vmem:[%s21 + $0x130] sm:$0xf]
  %v4570 = vld [vmem:[%s21 + $0x134] sm:$0xf]
  %v4571 = vld [vmem:[%s21 + $0x138] sm:$0xf]
  %v4572 = vld [vmem:[%s21 + $0x13c] sm:$0xf]
  %v4573 = vld [vmem:[%s21 + $0x140] sm:$0xf]
  %v4574 = vld [vmem:[%s21 + $0x144] sm:$0xf]
  %v4575 = vld [vmem:[%s21 + $0x148] sm:$0xf]
  %v4576 = vld [vmem:[%s21 + $0x14c] sm:$0xf]
  %v4577 = vld [vmem:[%s21 + $0x150] sm:$0xf]
  %v4578 = vld [vmem:[%s21 + $0x154] sm:$0xf]
  %v4579 = vld [vmem:[%s21 + $0x158] sm:$0xf]
  %v4580 = vld [vmem:[%s21 + $0x15c] sm:$0xf]
  %v4581 = vld [vmem:[%s21 + $0x160] sm:$0xf]
  %v4582 = vld [vmem:[%s21 + $0x164] sm:$0xf]
  %v4583 = vld [vmem:[%s21 + $0x168] sm:$0xf]
  %v4584 = vld [vmem:[%s21 + $0x16c] sm:$0xf]
  %v4585 = vld [vmem:[%s21 + $0x170] sm:$0xf]
  %v4586 = vld [vmem:[%s21 + $0x174] sm:$0xf]
  %v4587 = vld [vmem:[%s21 + $0x178] sm:$0xf]
  %v4588 = vld [vmem:[%s21 + $0x17c] sm:$0xf]
  %v4589 = vld [vmem:[%s22] sm:$0x1]
  %v4591 = vlaneseq
  %v4592 = vshrl.u32 %v4591, 7
  %v4593 = vsub.s32 0, %v4592
  %v4594 = vrot.slane %v4589, %v4593
  %v4692 = vunpack.c.l.b16 %v4493
  %v4693 = vunpack.c.l.b16 %v4494
  %v4694 = vunpack.c.l.b16 %v4495
  %v4695 = vunpack.c.l.b16 %v4496
  %v4696 = vunpack.c.l.b16 %v4497
  %v4697 = vunpack.c.l.b16 %v4498
  %v4698 = vunpack.c.l.b16 %v4499
  %v4699 = vunpack.c.l.b16 %v4500
  %v4700 = vunpack.c.l.b16 %v4501
  %v4701 = vunpack.c.l.b16 %v4502
  %v4702 = vunpack.c.l.b16 %v4503
  %v4703 = vunpack.c.l.b16 %v4504
  %v4704 = vunpack.c.l.b16 %v4505
  %v4705 = vunpack.c.l.b16 %v4506
  %v4706 = vunpack.c.l.b16 %v4507
  %v4707 = vunpack.c.l.b16 %v4508
  %v4708 = vunpack.c.l.b16 %v4509
  %v4709 = vunpack.c.l.b16 %v4510
  %v4710 = vunpack.c.l.b16 %v4511
  %v4711 = vunpack.c.l.b16 %v4512
  %v4712 = vunpack.c.l.b16 %v4513
  %v4713 = vunpack.c.l.b16 %v4514
  %v4714 = vunpack.c.l.b16 %v4515
  %v4715 = vunpack.c.l.b16 %v4516
  %v4716 = vunpack.c.l.b16 %v4517
  %v4717 = vunpack.c.l.b16 %v4518
  %v4718 = vunpack.c.l.b16 %v4519
  %v4719 = vunpack.c.l.b16 %v4520
  %v4720 = vunpack.c.l.b16 %v4521
  %v4721 = vunpack.c.l.b16 %v4522
  %v4722 = vunpack.c.l.b16 %v4523
  %v4723 = vunpack.c.l.b16 %v4524
  %v4724 = vunpack.c.l.b16 %v4525
  %v4725 = vunpack.c.l.b16 %v4526
  %v4726 = vunpack.c.l.b16 %v4527
  %v4727 = vunpack.c.l.b16 %v4528
  %v4728 = vunpack.c.l.b16 %v4529
  %v4729 = vunpack.c.l.b16 %v4530
  %v4730 = vunpack.c.l.b16 %v4531
  %v4731 = vunpack.c.l.b16 %v4532
  %v4732 = vunpack.c.l.b16 %v4533
  %v4733 = vunpack.c.l.b16 %v4534
  %v4734 = vunpack.c.l.b16 %v4535
  %v4735 = vunpack.c.l.b16 %v4536
  %v4736 = vunpack.c.l.b16 %v4537
  %v4737 = vunpack.c.l.b16 %v4538
  %v4738 = vunpack.c.l.b16 %v4539
  %v4739 = vunpack.c.l.b16 %v4540
  %v4740 = vunpack.c.l.b16 %v4541
  %v4741 = vunpack.c.l.b16 %v4542
  %v4742 = vunpack.c.l.b16 %v4543
  %v4743 = vunpack.c.l.b16 %v4544
  %v4744 = vunpack.c.l.b16 %v4545
  %v4745 = vunpack.c.l.b16 %v4546
  %v4746 = vunpack.c.l.b16 %v4547
  %v4747 = vunpack.c.l.b16 %v4548
  %v4748 = vunpack.c.l.b16 %v4549
  %v4749 = vunpack.c.l.b16 %v4550
  %v4750 = vunpack.c.l.b16 %v4551
  %v4751 = vunpack.c.l.b16 %v4552
  %v4752 = vunpack.c.l.b16 %v4553
  %v4753 = vunpack.c.l.b16 %v4554
  %v4754 = vunpack.c.l.b16 %v4555
  %v4755 = vunpack.c.l.b16 %v4556
  %v4756 = vunpack.c.l.b16 %v4557
  %v4757 = vunpack.c.l.b16 %v4558
  %v4758 = vunpack.c.l.b16 %v4559
  %v4759 = vunpack.c.l.b16 %v4560
  %v4760 = vunpack.c.l.b16 %v4561
  %v4761 = vunpack.c.l.b16 %v4562
  %v4762 = vunpack.c.l.b16 %v4563
  %v4763 = vunpack.c.l.b16 %v4564
  %v4764 = vunpack.c.l.b16 %v4565
  %v4765 = vunpack.c.l.b16 %v4566
  %v4766 = vunpack.c.l.b16 %v4567
  %v4767 = vunpack.c.l.b16 %v4568
  %v4768 = vunpack.c.l.b16 %v4569
  %v4769 = vunpack.c.l.b16 %v4570
  %v4770 = vunpack.c.l.b16 %v4571
  %v4771 = vunpack.c.l.b16 %v4572
  %v4772 = vunpack.c.l.b16 %v4573
  %v4773 = vunpack.c.l.b16 %v4574
  %v4774 = vunpack.c.l.b16 %v4575
  %v4775 = vunpack.c.l.b16 %v4576
  %v4776 = vunpack.c.l.b16 %v4577
  %v4777 = vunpack.c.l.b16 %v4578
  %v4778 = vunpack.c.l.b16 %v4579
  %v4779 = vunpack.c.l.b16 %v4580
  %v4780 = vunpack.c.l.b16 %v4581
  %v4781 = vunpack.c.l.b16 %v4582
  %v4782 = vunpack.c.l.b16 %v4583
  %v4783 = vunpack.c.l.b16 %v4584
  %v4784 = vunpack.c.l.b16 %v4585
  %v4785 = vunpack.c.l.b16 %v4586
  %v4786 = vunpack.c.l.b16 %v4587
  %v4787 = vunpack.c.l.b16 %v4588
  %v4788 = vpack.c.b16 %v4693, %v4692
  %v4789 = vpack.c.b16 %v4695, %v4694
  %v4790 = vpack.c.b16 %v4697, %v4696
  %v4791 = vpack.c.b16 %v4699, %v4698
  %v4792 = vpack.c.b16 %v4701, %v4700
  %v4793 = vpack.c.b16 %v4703, %v4702
  %v4794 = vpack.c.b16 %v4705, %v4704
  %v4795 = vpack.c.b16 %v4707, %v4706
  %v4796 = vpack.c.b16 %v4709, %v4708
  %v4797 = vpack.c.b16 %v4711, %v4710
  %v4798 = vpack.c.b16 %v4713, %v4712
  %v4799 = vpack.c.b16 %v4715, %v4714
  %v4800 = vpack.c.b16 %v4717, %v4716
  %v4801 = vpack.c.b16 %v4719, %v4718
  %v4802 = vpack.c.b16 %v4721, %v4720
  %v4803 = vpack.c.b16 %v4723, %v4722
  %v4804 = vpack.c.b16 %v4725, %v4724
  %v4805 = vpack.c.b16 %v4727, %v4726
  %v4806 = vpack.c.b16 %v4729, %v4728
  %v4807 = vpack.c.b16 %v4731, %v4730
  %v4808 = vpack.c.b16 %v4733, %v4732
  %v4809 = vpack.c.b16 %v4735, %v4734
  %v4810 = vpack.c.b16 %v4737, %v4736
  %v4811 = vpack.c.b16 %v4739, %v4738
  %v4812 = vpack.c.b16 %v4741, %v4740
  %v4813 = vpack.c.b16 %v4743, %v4742
  %v4814 = vpack.c.b16 %v4745, %v4744
  %v4815 = vpack.c.b16 %v4747, %v4746
  %v4816 = vpack.c.b16 %v4749, %v4748
  %v4817 = vpack.c.b16 %v4751, %v4750
  %v4818 = vpack.c.b16 %v4753, %v4752
  %v4819 = vpack.c.b16 %v4755, %v4754
  %v4820 = vpack.c.b16 %v4757, %v4756
  %v4821 = vpack.c.b16 %v4759, %v4758
  %v4822 = vpack.c.b16 %v4761, %v4760
  %v4823 = vpack.c.b16 %v4763, %v4762
  %v4824 = vpack.c.b16 %v4765, %v4764
  %v4825 = vpack.c.b16 %v4767, %v4766
  %v4826 = vpack.c.b16 %v4769, %v4768
  %v4827 = vpack.c.b16 %v4771, %v4770
  %v4828 = vpack.c.b16 %v4773, %v4772
  %v4829 = vpack.c.b16 %v4775, %v4774
  %v4830 = vpack.c.b16 %v4777, %v4776
  %v4831 = vpack.c.b16 %v4779, %v4778
  %v4832 = vpack.c.b16 %v4781, %v4780
  %v4833 = vpack.c.b16 %v4783, %v4782
  %v4834 = vpack.c.b16 %v4785, %v4784
  %v4835 = vpack.c.b16 %v4787, %v4786
  %4884 = vmatprep.subr.bf16.mxu0 0
  %4885 = vmatpush1.bf16.msra.mxu0 %v4788
  %4886 = vmatprep.subr.bf16.mxu0 0
  %4887 = vmatpush1.bf16.msra.mxu0 %v4789
  %4888 = vmatprep.subr.bf16.mxu0 0
  %4889 = vmatpush1.bf16.msra.mxu0 %v4790
  %4890 = vmatprep.subr.bf16.mxu0 0
  %4891 = vmatpush1.bf16.msra.mxu0 %v4791
  %4892 = vmatprep.subr.bf16.mxu0 0
  %4893 = vmatpush1.bf16.msra.mxu0 %v4792
  %4894 = vmatprep.subr.bf16.mxu0 0
  %4895 = vmatpush1.bf16.msra.mxu0 %v4793
  %4896 = vmatprep.subr.bf16.mxu0 0
  %4897 = vmatpush1.bf16.msra.mxu0 %v4794
  %4898 = vmatprep.subr.bf16.mxu0 0
  %4899 = vmatpush1.bf16.msra.mxu0 %v4795
  %4900 = vmatprep.subr.bf16.mxu0 0
  %4901 = vmatpush1.bf16.msra.mxu0 %v4796
  %4902 = vmatprep.subr.bf16.mxu0 0
  %4903 = vmatpush1.bf16.msra.mxu0 %v4797
  %4904 = vmatprep.subr.bf16.mxu0 0
  %4905 = vmatpush1.bf16.msra.mxu0 %v4798
  %4906 = vmatprep.subr.bf16.mxu0 0
  %4907 = vmatpush1.bf16.msra.mxu0 %v4799
  %4908 = vmatprep.subr.bf16.mxu0 0
  %4909 = vmatpush1.bf16.msra.mxu0 %v4800
  %4910 = vmatprep.subr.bf16.mxu0 0
  %4911 = vmatpush1.bf16.msra.mxu0 %v4801
  %4912 = vmatprep.subr.bf16.mxu0 0
  %4913 = vmatpush1.bf16.msra.mxu0 %v4802
  %4914 = vmatprep.subr.bf16.mxu0 0
  %4915 = vmatpush1.bf16.msra.mxu0 %v4803
  %4916 = vmatprep.mubr.bf16.mxu0 %v4488
  %4917 = vmatmul.mubr.bf16.gmra.mrb[0].mxu0 %v4487
  %v4918 = vpop.f32.mrb[0].mxu0
  %v4919 = vadd.f32 %v4594, %v4918
  %v4920 = vpop.f32.mrb[0].mxu0
  %v4921 = vpop.f32.mrb[0].mxu0
  %v4922 = vpop.f32.mrb[0].mxu0
  %4923 = vdwg.mxu0
  %4924 = vmatprep.subr.bf16.mxu0 0
  %4925 = vmatpush1.bf16.msra.mxu0 %v4804
  %4926 = vmatprep.subr.bf16.mxu0 0
  %4927 = vmatpush1.bf16.msra.mxu0 %v4805
  %4928 = vmatprep.subr.bf16.mxu0 0
  %4929 = vmatpush1.bf16.msra.mxu0 %v4806
  %4930 = vmatprep.subr.bf16.mxu0 0
  %4931 = vmatpush1.bf16.msra.mxu0 %v4807
  %4932 = vmatprep.subr.bf16.mxu0 0
  %4933 = vmatpush1.bf16.msra.mxu0 %v4808
  %4934 = vmatprep.subr.bf16.mxu0 0
  %4935 = vmatpush1.bf16.msra.mxu0 %v4809
  %4936 = vmatprep.subr.bf16.mxu0 0
  %4937 = vmatpush1.bf16.msra.mxu0 %v4810
  %4938 = vmatprep.subr.bf16.mxu0 0
  %4939 = vmatpush1.bf16.msra.mxu0 %v4811
  %4940 = vmatprep.subr.bf16.mxu0 0
  %4941 = vmatpush1.bf16.msra.mxu0 %v4812
  %4942 = vmatprep.subr.bf16.mxu0 0
  %4943 = vmatpush1.bf16.msra.mxu0 %v4813
  %4944 = vmatprep.subr.bf16.mxu0 0
  %4945 = vmatpush1.bf16.msra.mxu0 %v4814
  %4946 = vmatprep.subr.bf16.mxu0 0
  %4947 = vmatpush1.bf16.msra.mxu0 %v4815
  %4948 = vmatprep.subr.bf16.mxu0 0
  %4949 = vmatpush1.bf16.msra.mxu0 %v4816
  %4950 = vmatprep.subr.bf16.mxu0 0
  %4951 = vmatpush1.bf16.msra.mxu0 %v4817
  %4952 = vmatprep.subr.bf16.mxu0 0
  %4953 = vmatpush1.bf16.msra.mxu0 %v4818
  %4954 = vmatprep.subr.bf16.mxu0 0
  %4955 = vmatpush1.bf16.msra.mxu0 %v4819
  %4956 = vmatprep.mubr.bf16.mxu0 %v4490
  %4957 = vmatmul.mubr.bf16.gmra.mrb[0].mxu0 %v4489
  %v4958 = vpop.f32.mrb[0].mxu0
  %v4959 = vadd.f32 %v4919, %v4958
  %v4960 = vpop.f32.mrb[0].mxu0
  %v4961 = vpop.f32.mrb[0].mxu0
  %v4962 = vpop.f32.mrb[0].mxu0
  %4963 = vdwg.mxu0
  %4964 = vmatprep.subr.bf16.mxu0 0
  %4965 = vmatpush1.bf16.msra.mxu0 %v4820
  %4966 = vmatprep.subr.bf16.mxu0 0
  %4967 = vmatpush1.bf16.msra.mxu0 %v4821
  %4968 = vmatprep.subr.bf16.mxu0 0
  %4969 = vmatpush1.bf16.msra.mxu0 %v4822
  %4970 = vmatprep.subr.bf16.mxu0 0
  %4971 = vmatpush1.bf16.msra.mxu0 %v4823
  %4972 = vmatprep.subr.bf16.mxu0 0
  %4973 = vmatpush1.bf16.msra.mxu0 %v4824
  %4974 = vmatprep.subr.bf16.mxu0 0
  %4975 = vmatpush1.bf16.msra.mxu0 %v4825
  %4976 = vmatprep.subr.bf16.mxu0 0
  %4977 = vmatpush1.bf16.msra.mxu0 %v4826
  %4978 = vmatprep.subr.bf16.mxu0 0
  %4979 = vmatpush1.bf16.msra.mxu0 %v4827
  %4980 = vmatprep.subr.bf16.mxu0 0
  %4981 = vmatpush1.bf16.msra.mxu0 %v4828
  %4982 = vmatprep.subr.bf16.mxu0 0
  %4983 = vmatpush1.bf16.msra.mxu0 %v4829
  %4984 = vmatprep.subr.bf16.mxu0 0
  %4985 = vmatpush1.bf16.msra.mxu0 %v4830
  %4986 = vmatprep.subr.bf16.mxu0 0
  %4987 = vmatpush1.bf16.msra.mxu0 %v4831
  %4988 = vmatprep.subr.bf16.mxu0 0
  %4989 = vmatpush1.bf16.msra.mxu0 %v4832
  %4990 = vmatprep.subr.bf16.mxu0 0
  %4991 = vmatpush1.bf16.msra.mxu0 %v4833
  %4992 = vmatprep.subr.bf16.mxu0 0
  %4993 = vmatpush1.bf16.msra.mxu0 %v4834
  %4994 = vmatprep.subr.bf16.mxu0 0
  %4995 = vmatpush1.bf16.msra.mxu0 %v4835
  %4996 = vmatprep.mubr.bf16.mxu0 %v4492
  %4997 = vmatmul.mubr.bf16.gmra.mrb[0].mxu0 %v4491
  %v4998 = vpop.f32.mrb[0].mxu0
  %v4999 = vadd.f32 %v4959, %v4998
  %v5000 = vpop.f32.mrb[0].mxu0
  %v5001 = vpop.f32.mrb[0].mxu0
  %v5002 = vpop.f32.mrb[0].mxu0
  %5003 = vdwg.mxu0
  %5004 = vst [vmem:[%s23] sm:$0x3] %v4999
  // Predicated region
  $region94: #{_lambda_.1} parent=0 // pred_check
    _
  $region95: #{_lambda_.1} parent=0 // pred_check_branch
    %5006 = sbr.rel (0) target = $region97
  $region96: #{_lambda_.1} parent=0 // pred_region
    _
  $region97: #{_lambda_.1} parent=0 // pred_fallthru
    _
  // Predicated region
  $region98: #{_lambda_.1} parent=0 // pred_check
    _
  $region99: #{_lambda_.1} parent=0 // pred_check_branch
    %5008 = sbr.rel (0) target = $region101
  $region100: #{_lambda_.1} parent=0 // pred_region
    _
  $region101: #{_lambda_.1} parent=0 // pred_fallthru
    _

</llo_original>
